<compile_context>
chip_gen: v7x
topology: tpu7x:2x2x1
jax: 0.10.0
libtpu: 0.0.40
codegen_flags: <defaults>
</compile_context>

<pallas_src>
import math
import numpy as np

import jax
import jax.numpy as jnp
from jax import lax
from jax.experimental import pallas as pl
from jax.experimental.pallas import tpu as pltpu

# ----------------------- synthetic "Namespace params" -----------------------
HIDDEN = 32              # hidden_irreps scalar count ("32x0e")
NUM_EDGE_BASIS = 8       # params.num_edge_bases
LMAX = 2                 # params.lmax
SH_DIM = (LMAX + 1) ** 2                 # 9
EDGE_FEAT_DIM = 2 * NUM_EDGE_BASIS       # 16
MESSAGE_PASSES = 2       # params.message_passes
MAX_EDGE_RADIUS = 0.3    # params.max_edge_radius
AGG_NORM = 10.0          # params.agg_norm_const
INTER_MLP_DIM = 32       # params.inter_MLP_dim
READOUT_DIM = 32         # width of readout_irreps (simplified to scalars)
POST_DIM = 21            # 2x0e + 2x2e + 1x4e  -> 2 + 10 + 9 = 21 components

EDGE_TILE = 512          # edges per grid step; tune 1024-4096 on real graphs
                         # (per-step overhead ~0.35us, per-edge VMEM cost is small)

MM_DTYPE = jnp.bfloat16  # MXU operand dtype (f32 accumulate); jnp.float32 to disable


def _mm(a, b):
    """MXU matmul with bf16 operands and f32 accumulation."""
    return jnp.dot(a.astype(MM_DTYPE), b.astype(MM_DTYPE),
                   preferred_element_type=jnp.float32)


# --------------------------- in-kernel edge math -----------------------------
def _gauss_rows(val_row, start, end, num):
    """e3nn soft_one_hot_linspace(..., basis='gaussian', cutoff=False).
    val_row: [1, TE] (edges lane-dense)  ->  [num, TE].
    Centers are built from an in-kernel iota (no captured array constants)."""
    step = (end - start) / (num - 1)
    idx = lax.broadcasted_iota(jnp.int32, (num, 1), 0).astype(jnp.float32)
    centers = start + step * idx                             # [num, 1]
    d = (val_row - centers) * (1.0 / step)                   # [num, TE]
    return jnp.exp(-d * d) * (1.0 / 1.12)


def _edge_prep(vec, radii):
    """vec: [3, TE], radii: [1, TE] (edges on the 128-lane axis).
    Returns gaussian features [2B, TE] and real SH (lmax=2, e3nn 'component'
    normalization, normalize=True) [9, TE]."""
    x, y, z = vec[0:1, :], vec[1:2, :], vec[2:3, :]
    r2 = x * x + y * y + z * z
    inv_len = lax.rsqrt(r2 + 1e-12)          # EUP rsqrt; eps guards 0-length edges
    length = r2 * inv_len
    ux, uy, uz = x * inv_len, y * inv_len, z * inv_len

    feats = jnp.concatenate(
        [_gauss_rows(length, 0.0, 0.6, NUM_EDGE_BASIS),
         _gauss_rows(radii, 0.0, MAX_EDGE_RADIUS, NUM_EDGE_BASIS)],
        axis=0)                                                     # [2B, TE]

    s3 = math.sqrt(3.0)
    s5 = math.sqrt(5.0)
    sh = jnp.concatenate(
        [jnp.ones_like(ux),
         s3 * ux, s3 * uy, s3 * uz,
         s5 * s3 * ux * uz,
         s5 * s3 * ux * uy,
         s5 * (uy * uy - 0.5 * (ux * ux + uz * uz)),
         s5 * s3 * uy * uz,
         s5 * 0.5 * s3 * (uz * uz - ux * ux)],
        axis=0)                                                     # [9, TE]
    return feats, sh


# ----------------------- fused MACE message-pass kernel ----------------------
def _make_mace_kernel(edge_tile, num_edges, n_nodes, n_feat):
    def kernel(node_ref, resid_ref, vec_ref, rad_ref,
               send_ref, recv_ref,
               w1t_ref, w2t_ref, wmixt_ref, wselft_ref, shexpt_ref, wexpt_ref,
               out_ref, acc_ref):
        t = pl.program_id(0)

        @pl.when(t == 0)
        def _init():
            acc_ref[...] = jnp.zeros_like(acc_ref)

        # fused edge prep (no HBM intermediates), lane-dense over the edge tile
        feats, sh = _edge_prep(vec_ref[...], rad_ref[...])      # [2B,TE], [9,TE]

        # gather sender node features: ONE MXU matmul against a one-hot built
        # in-kernel (iota == sender ids); OOB ids give an all-zero column.
        onehot_send = (lax.broadcasted_iota(jnp.int32, (n_nodes, edge_tile), 0)
                       == send_ref[...]).astype(MM_DTYPE)       # [N, TE]
        sendft = _mm(node_ref[...], onehot_send)                # [F, TE]

        # radial MLP (edges on lanes)
        h = jax.nn.silu(_mm(w1t_ref[...], feats))               # [MLP, TE]
        edge_w = _mm(w2t_ref[...], h)                           # [F, TE]

        # mask padded edges BEFORE message construction / scatter
        eid = (t * edge_tile
               + lax.broadcasted_iota(jnp.int32, (1, edge_tile), 1))
        valid = (eid < num_edges).astype(jnp.float32)           # [1, TE]
        weighted = edge_w * sendft * valid                      # [F, TE]

        # msg[s*F+f, e] = sh[s, e] * weighted[f, e] via two expand matmuls
        # (replaces the old 9-way lane concatenation)
        msg = _mm(shexpt_ref[...], sh) * _mm(wexpt_ref[...], weighted)  # [S*F, TE]

        # segment-sum scatter as ONE MXU matmul: acc += msg @ onehot(receiver)
        onehot_recv = (lax.broadcasted_iota(jnp.int32, (edge_tile, n_nodes), 1)
                       == recv_ref[...]).astype(MM_DTYPE)       # [TE, N]
        acc_ref[...] += _mm(msg, onehot_recv)                   # [S*F, N]

        # node update (linear mix + self connection + gate + residual)
        @pl.when(t == pl.num_programs(0) - 1)
        def _final():
            agg = acc_ref[...] * (1.0 / AGG_NORM)               # [S*F, N]
            upd = _mm(wmixt_ref[...], agg) + _mm(wselft_ref[...], node_ref[...])
            out_ref[...] = resid_ref[...] + jax.nn.silu(upd)    # [F, N]

    return kernel


def mace_pass(node_t, resid_t, vec_t, radii_t, send_row, recv_col,
              layer_w, shexpt, wexpt, *, num_edges, edge_tile=EDGE_TILE):
    """One MACE-like interaction layer (scalar-channel simplification), fully
    fused and lane-dense ([features, nodes/edges] layout): edge prep + one-hot
    matmul gather + radial MLP + expand-matmul messages + one-hot matmul
    segment-sum + node update + residual in a single edge-tiled pallas_call."""
    n_feat, n_nodes = node_t.shape
    e_pad = vec_t.shape[1]
    n_tiles = e_pad // edge_tile
    msg_width = SH_DIM * n_feat
    w1t, w2t, wmixt, wselft = layer_w

    kernel = _make_mace_kernel(edge_tile, num_edges, n_nodes, n_feat)

    flops = (2 * e_pad * (n_nodes * n_feat                      # gather
                          + EDGE_FEAT_DIM * INTER_MLP_DIM       # radial MLP
                          + INTER_MLP_DIM * n_feat
                          + (SH_DIM + n_feat) * msg_width       # expand matmuls
                          + n_nodes * msg_width)                # scatter
             + 2 * n_nodes * (msg_width + n_feat) * n_feat)     # node update
    cost = pl.CostEstimate(
        flops=int(flops),
        transcendentals=int(e_pad * (2 * NUM_EDGE_BASIS + INTER_MLP_DIM + 1)
                            + n_nodes * n_feat),
        bytes_accessed=int(4 * (e_pad * 6 + 3 * n_nodes * n_feat)
                           + 2 * (w1t.size + w2t.size + wmixt.size + wselft.size
                                  + shexpt.size + wexpt.size)))

    grid_spec = pltpu.PrefetchScalarGridSpec(
        num_scalar_prefetch=0,
        grid=(n_tiles,),
        in_specs=[
            pl.BlockSpec((n_feat, n_nodes), lambda t: (0, 0)),     # node table [F,N]
            pl.BlockSpec((n_feat, n_nodes), lambda t: (0, 0)),     # residual  [F,N]
            pl.BlockSpec((3, edge_tile), lambda t: (0, t)),        # edge vectors
            pl.BlockSpec((1, edge_tile), lambda t: (0, t)),        # edge radii
            pl.BlockSpec((1, edge_tile), lambda t: (0, t)),        # sender ids
            pl.BlockSpec((edge_tile, 1), lambda t: (t, 0)),        # receiver ids
            pl.BlockSpec(w1t.shape, lambda t: (0, 0)),
            pl.BlockSpec(w2t.shape, lambda t: (0, 0)),
            pl.BlockSpec(wmixt.shape, lambda t: (0, 0)),
            pl.BlockSpec(wselft.shape, lambda t: (0, 0)),
            pl.BlockSpec(shexpt.shape, lambda t: (0, 0)),
            pl.BlockSpec(wexpt.shape, lambda t: (0, 0)),
        ],
        out_specs=pl.BlockSpec((n_feat, n_nodes), lambda t: (0, 0)),
        scratch_shapes=[
            pltpu.VMEM((msg_width, n_nodes), jnp.float32),   # resident accumulator
        ],
    )
    # TODO(synk): single-buffer (pl.Buffered(1)) the constant-index inputs once
    # VMEM becomes the limiter for large N / bigger edge tiles.

    return pl.pallas_call(
        kernel,
        grid_spec=grid_spec,
        out_shape=jax.ShapeDtypeStruct((n_feat, n_nodes), jnp.float32),
        compiler_params=pltpu.CompilerParams(
            dimension_semantics=("arbitrary",),   # acc/out persist across edge tiles
            # 48 MiB leaves headroom on v7x (64 MiB physical VMEM); raise toward
            # ~100 MiB on v5e/v6e for larger graphs / edge tiles.
            vmem_limit_bytes=48 * 1024 * 1024),
        cost_estimate=cost,
    )(node_t, resid_t, vec_t, radii_t, send_row, recv_col,
      w1t, w2t, wmixt, wselft, shexpt, wexpt)


# ------------------------------ readout / head -------------------------------
def head_kernel(node_ref, pool_ref, wr1_ref, wr2_ref, wlin_ref, blin_ref,
                mandel_ref, c_ref):
    """Gated non-linear readout, mean graph pooling, 21-component stiffness
    features and the fixed 21 -> 6x6 packing, all as 2D MXU matmuls."""
    r = jax.nn.silu(jnp.dot(node_ref[...], wr1_ref[...],
                            preferred_element_type=jnp.float32))
    readout = jnp.dot(r, wr2_ref[...], preferred_element_type=jnp.float32)   # [N, R]
    # scatter(reduce='mean') via the pre-normalized [G, N] pooling matrix
    graph_ft = jnp.dot(pool_ref[...], readout,
                       preferred_element_type=jnp.float32)                   # [G, R]
    # o3.Linear(readout -> '2x0e+2x2e+1x4e') simplified to a dense affine map
    stiff_ft = jnp.dot(graph_ft, wlin_ref[...],
                       preferred_element_type=jnp.float32) + blin_ref[...]   # [G, 21]
    # TODO(synk): exact e3nn Spherical_to_Cartesian + Cart_4_to_Mandel change-of-
    # basis replaced by a fixed 21 -> symmetric-6x6 packing matrix.
    c_ref[...] = jnp.dot(stiff_ft, mandel_ref[...],
                         preferred_element_type=jnp.float32)                 # [G, 36]


def stiffness_head(node_ft, pool, head_params):
    g = pool.shape[0]
    wr1, wr2, wlin, blin, mandel = head_params
    vmem = pl.BlockSpec(memory_space=pltpu.MemorySpace.VMEM)
    c_flat = pl.pallas_call(
        head_kernel,
        out_shape=jax.ShapeDtypeStruct((g, 36), jnp.float32),
        in_specs=[vmem] * 7,
        out_specs=vmem,
        compiler_params=pltpu.CompilerParams(vmem_limit_bytes=32 * 1024 * 1024),
    )(node_ft, pool, wr1, wr2, wlin, blin, mandel)
    c = c_flat.reshape(g, 6, 6)
    # torch.linalg.matrix_power(C, 2): negligible 6x6 batched square, plain XLA.
    return jnp.einsum("gij,gjk->gik", c, c)


# ------------------------------- full forward --------------------------------
def positive_lite_gnn_forward(params, positions, edge_index, shifts, node_attrs,
                              edge_radii, batch_idx, num_graphs,
                              *, edge_tile=EDGE_TILE):
    sender, receiver = edge_index[0], edge_index[1]
    num_edges = int(sender.shape[0])

    # node_ft_embedding: Linear(1 -> HIDDEN); transposed to the lane-dense
    # [features, nodes] layout used by the message-pass kernels.
    node_t = (node_attrs @ params["w_emb"] + params["b_emb"]).T        # [F, N]

    # edge vectors (tiny [E,3] gather in XLA), then lane-dense [3, E] / [1, E]
    vec_t = (positions[receiver] - positions[sender] + shifts).T       # [3, E]
    radii_t = edge_radii.reshape(1, -1)                                # [1, E]

    # pad the edge axis ONCE to a multiple of the tile (masked in-kernel)
    n_tiles = max(1, pl.cdiv(num_edges, edge_tile))
    e_pad = n_tiles * edge_tile
    pad = e_pad - num_edges
    vec_t = jnp.pad(vec_t, ((0, 0), (0, pad)))
    radii_t = jnp.pad(radii_t, ((0, 0), (0, pad)))
    send_row = jnp.pad(sender.astype(jnp.int32), (0, pad)).reshape(1, e_pad)
    recv_col = jnp.pad(receiver.astype(jnp.int32), (0, pad)).reshape(e_pad, 1)

    # mean-pooling matrix over graphs (O(G*N), tiny)
    pool = jax.nn.one_hot(batch_idx, num_graphs, dtype=jnp.float32).T
    pool = pool / jnp.maximum(pool.sum(axis=1, keepdims=True), 1.0)

    shexpt, wexpt = params["shexpt"], params["wexpt"]
    zeros = jnp.zeros_like(node_t)
    # layer 0 (no residual), then residual layers; the residual add is fused
    h = mace_pass(node_t, zeros, vec_t, radii_t, send_row, recv_col,
                  params["layers"][0], shexpt, wexpt,
                  num_edges=num_edges, edge_tile=edge_tile)
    for i in range(1, MESSAGE_PASSES):
        h = mace_pass(h, h, vec_t, radii_t, send_row, recv_col,
                      params["layers"][i], shexpt, wexpt,
                      num_edges=num_edges, edge_tile=edge_tile)

    node_nf = h.T                                   # [N, F] for the readout head
    return {"stiffness": stiffness_head(node_nf, pool, params["head"])}


# --------------------------- deterministic params ----------------------------
def init_params(key):
    def dense(k, fan_in, shape):
        return jax.random.normal(k, shape, jnp.float32) / math.sqrt(fan_in)

    keys = jax.random.split(key, 16)
    layers = []
    for li in range(MESSAGE_PASSES):
        k1, k2, k3, k4 = jax.random.split(keys[li], 4)
        w1 = dense(k1, EDGE_FEAT_DIM, (EDGE_FEAT_DIM, INTER_MLP_DIM))
        w2 = dense(k2, INTER_MLP_DIM, (INTER_MLP_DIM, HIDDEN))
        wmix = dense(k3, SH_DIM * HIDDEN, (SH_DIM * HIDDEN, HIDDEN))
        wself = dense(k4, HIDDEN, (HIDDEN, HIDDEN))
        # stored pre-transposed (lane-dense layout) and in the MXU operand dtype
        layers.append((w1.T.astype(MM_DTYPE), w2.T.astype(MM_DTYPE),
                       wmix.T.astype(MM_DTYPE), wself.T.astype(MM_DTYPE)))

    # constant SH expand: shexpt[s*F + f, s] = 1  (msg row s*F+f picks sh row s)
    shexpt_np = np.zeros((SH_DIM * HIDDEN, SH_DIM), dtype=np.float32)
    for s in range(SH_DIM):
        shexpt_np[s * HIDDEN:(s + 1) * HIDDEN, s] = 1.0
    # constant feature expand: wexpt[s*F + f, f] = 1  (replaces the 9-way concat)
    wexpt_np = np.tile(np.eye(HIDDEN, dtype=np.float32), (SH_DIM, 1))

    # fixed 21 -> symmetric 6x6 packing (upper triangle), built in numpy
    # TODO(synk): exact e3nn Spherical_to_Cartesian + Cart_4_to_Mandel change-of-
    # basis (incl. sqrt(2) off-diagonal Mandel scaling) replaced by fixed packing.
    mandel_np = np.zeros((POST_DIM, 36), dtype=np.float32)
    p = 0
    for i in range(6):
        for j in range(i, 6):
            mandel_np[p, i * 6 + j] = 1.0
            mandel_np[p, j * 6 + i] = 1.0
            p += 1
    assert p == POST_DIM

    head = (
        dense(keys[10], HIDDEN, (HIDDEN, HIDDEN)),          # readout hidden
        dense(keys[11], HIDDEN, (HIDDEN, READOUT_DIM)),     # readout out
        dense(keys[12], READOUT_DIM, (READOUT_DIM, POST_DIM)),
        0.01 * jax.random.normal(keys[13], (1, POST_DIM), jnp.float32),
        jnp.asarray(mandel_np),
    )

    return {
        "w_emb": dense(keys[14], 1, (1, HIDDEN)),
        "b_emb": 0.01 * jax.random.normal(keys[15], (HIDDEN,), jnp.float32),
        "layers": layers,
        "head": head,
        "shexpt": jnp.asarray(shexpt_np).astype(MM_DTYPE),
        "wexpt": jnp.asarray(wexpt_np).astype(MM_DTYPE),
    }


# ----------------------------------- main ------------------------------------
if __name__ == "__main__":
    key = jax.random.PRNGKey(0)
    k_pos, k_attr, k_rad, k_param = jax.random.split(key, 4)

    num_graphs = 2
    nodes_per_graph = 8
    N = num_graphs * nodes_per_graph          # 16 nodes
    # 2 graphs x 16 edges = 32 edges, no self loops
    senders, receivers = [], []
    for g in range(num_graphs):
        base = g * nodes_per_graph
        for i in range(nodes_per_graph):
            senders += [base + i, base + i]
            receivers += [base + (i + 1) % nodes_per_graph,
                          base + (i + 3) % nodes_per_graph]
    edge_index = jnp.asarray([senders, receivers], dtype=jnp.int32)   # [2, 32]
    E = edge_index.shape[1]

    positions = jax.random.uniform(k_pos, (N, 3), jnp.float32)        # [16, 3]
    shifts = jnp.zeros((E, 3), jnp.float32)                           # [32, 3]
    node_attrs = jax.random.uniform(k_attr, (N, 1), jnp.float32)      # [16, 1]
    edge_radii = MAX_EDGE_RADIUS * jax.random.uniform(k_rad, (E, 1), jnp.float32)
    batch_idx = jnp.repeat(jnp.arange(num_graphs, dtype=jnp.int32), nodes_per_graph)

    params = init_params(k_param)

    out = positive_lite_gnn_forward(params, positions, edge_index, shifts,
                                    node_attrs, edge_radii, batch_idx, num_graphs)
    C_pos = jax.block_until_ready(out["stiffness"])
    assert C_pos.shape == (num_graphs, 6, 6)
    assert bool(jnp.all(jnp.isfinite(C_pos)))
    print("KERNEL_OK")
</pallas_src>

<mosaic_0001>
module attributes {stable_mosaic.version = 11 : i64} {
  func.func @kernel(%arg0: i32, %arg1: memref<32x16xf32, #tpu.memory_space<vmem>>, %arg2: memref<32x16xf32, #tpu.memory_space<vmem>>, %arg3: memref<3x512xf32, #tpu.memory_space<vmem>>, %arg4: memref<1x512xf32, #tpu.memory_space<vmem>>, %arg5: memref<1x512xi32, #tpu.memory_space<vmem>>, %arg6: memref<512x1xi32, #tpu.memory_space<vmem>>, %arg7: memref<32x16xbf16, #tpu.memory_space<vmem>>, %arg8: memref<32x32xbf16, #tpu.memory_space<vmem>>, %arg9: memref<32x288xbf16, #tpu.memory_space<vmem>>, %arg10: memref<32x32xbf16, #tpu.memory_space<vmem>>, %arg11: memref<288x9xbf16, #tpu.memory_space<vmem>>, %arg12: memref<288x32xbf16, #tpu.memory_space<vmem>>, %arg13: memref<32x16xf32, #tpu.memory_space<vmem>>, %arg14: memref<288x16xf32, #tpu.memory_space<vmem>>) attributes {dimension_semantics = [#tpu.dimension_semantics<arbitrary>], iteration_bounds = array<i64: 1>, scalar_prefetch = 0 : i64, scratch_operands = 1 : i64, tpu.core_type = #tpu.core_type<tc>, window_params = [{pipeline_mode = #tpu.pipeline_mode<synchronous>, transform_indices = @transform_0, window_bounds = array<i64: 32, 16>}, {pipeline_mode = #tpu.pipeline_mode<synchronous>, transform_indices = @transform_1, window_bounds = array<i64: 32, 16>}, {transform_indices = @transform_2, window_bounds = array<i64: 3, 512>}, {transform_indices = @transform_3, window_bounds = array<i64: 1, 512>}, {transform_indices = @transform_4, window_bounds = array<i64: 1, 512>}, {transform_indices = @transform_5, window_bounds = array<i64: 512, 1>}, {pipeline_mode = #tpu.pipeline_mode<synchronous>, transform_indices = @transform_6, window_bounds = array<i64: 32, 16>}, {pipeline_mode = #tpu.pipeline_mode<synchronous>, transform_indices = @transform_7, window_bounds = array<i64: 32, 32>}, {pipeline_mode = #tpu.pipeline_mode<synchronous>, transform_indices = @transform_8, window_bounds = array<i64: 32, 288>}, {pipeline_mode = #tpu.pipeline_mode<synchronous>, transform_indices = @transform_9, window_bounds = array<i64: 32, 32>}, {pipeline_mode = #tpu.pipeline_mode<synchronous>, transform_indices = @transform_10, window_bounds = array<i64: 288, 9>}, {pipeline_mode = #tpu.pipeline_mode<synchronous>, transform_indices = @transform_11, window_bounds = array<i64: 288, 32>}, {pipeline_mode = #tpu.pipeline_mode<synchronous>, transform_indices = @transform_12, window_bounds = array<i64: 32, 16>}]} {
    %c0_i32 = arith.constant 0 : i32
    %0 = arith.cmpi eq, %arg0, %c0_i32 : i32
    %1 = arith.extui %0 : i1 to i32
    %c0_i32_0 = arith.constant 0 : i32
    %2 = arith.cmpi ne, %1, %c0_i32_0 : i32
    scf.if %2 {
      %cst_51 = arith.constant 0.000000e+00 : f32
      %141 = vector.broadcast %cst_51 : f32 to vector<288x16xf32>
      %c0_52 = arith.constant 0 : index
      %c0_53 = arith.constant 0 : index
      %142 = vector.load %arg14[%c0_52, %c0_53] : memref<288x16xf32, #tpu.memory_space<vmem>>, vector<288x16xf32>
      tpu.vector_store %arg14[%c0_52, %c0_53], %141 {strides = array<i32>} : memref<288x16xf32, #tpu.memory_space<vmem>>, vector<288x16xf32>,
    } else {
    }
    %c0 = arith.constant 0 : index
    %c0_1 = arith.constant 0 : index
    %3 = vector.load %arg3[%c0, %c0_1] : memref<3x512xf32, #tpu.memory_space<vmem>>, vector<3x512xf32>
    %c0_2 = arith.constant 0 : index
    %c0_3 = arith.constant 0 : index
    %4 = vector.load %arg4[%c0_2, %c0_3] : memref<1x512xf32, #tpu.memory_space<vmem>>, vector<1x512xf32>
    %5 = vector.extract_strided_slice %3 {offsets = [0, 0], sizes = [1, 512], strides = [1, 1]} : vector<3x512xf32> to vector<1x512xf32>
    %6 = vector.extract_strided_slice %3 {offsets = [1, 0], sizes = [1, 512], strides = [1, 1]} : vector<3x512xf32> to vector<1x512xf32>
    %7 = vector.extract_strided_slice %3 {offsets = [2, 0], sizes = [1, 512], strides = [1, 1]} : vector<3x512xf32> to vector<1x512xf32>
    %8 = arith.mulf %5, %5 : vector<1x512xf32>
    %9 = arith.mulf %6, %6 : vector<1x512xf32>
    %10 = arith.addf %8, %9 : vector<1x512xf32>
    %11 = arith.mulf %7, %7 : vector<1x512xf32>
    %12 = arith.addf %10, %11 : vector<1x512xf32>
    %cst = arith.constant 9.99999996E-13 : f32
    %13 = vector.broadcast %cst : f32 to vector<1x512xf32>
    %14 = arith.addf %12, %13 : vector<1x512xf32>
    %15 = math.rsqrt %14 : vector<1x512xf32>
    %16 = arith.mulf %12, %15 : vector<1x512xf32>
    %17 = arith.mulf %5, %15 : vector<1x512xf32>
    %18 = arith.mulf %6, %15 : vector<1x512xf32>
    %19 = arith.mulf %7, %15 : vector<1x512xf32>
    %20 = tpu.iota {dimensions = array<i32: 0>} : vector<8x1xi32>
    %21 = arith.sitofp %20 : vector<8x1xi32> to vector<8x1xf32>
    %cst_4 = arith.constant 0.085714288 : f32
    %22 = vector.broadcast %cst_4 : f32 to vector<8x1xf32>
    %23 = arith.mulf %22, %21 : vector<8x1xf32>
    %cst_5 = arith.constant 0.000000e+00 : f32
    %24 = vector.broadcast %cst_5 : f32 to vector<8x1xf32>
    %25 = arith.addf %24, %23 : vector<8x1xf32>
    %26 = vector.broadcast %16 : vector<1x512xf32> to vector<8x512xf32>
    %27 = vector.broadcast %25 : vector<8x1xf32> to vector<8x512xf32>
    %28 = arith.subf %26, %27 : vector<8x512xf32>
    %cst_6 = arith.constant 11.666667 : f32
    %29 = vector.broadcast %cst_6 : f32 to vector<8x512xf32>
    %30 = arith.mulf %28, %29 : vector<8x512xf32>
    %cst_7 = arith.constant 0.000000e+00 : f32
    %31 = vector.broadcast %cst_7 : f32 to vector<8x512xf32>
    %32 = arith.subf %31, %30 : vector<8x512xf32>
    %33 = arith.mulf %32, %30 : vector<8x512xf32>
    %34 = math.exp %33 : vector<8x512xf32>
    %cst_8 = arith.constant 0.892857134 : f32
    %35 = vector.broadcast %cst_8 : f32 to vector<8x512xf32>
    %36 = arith.mulf %34, %35 : vector<8x512xf32>
    %37 = tpu.iota {dimensions = array<i32: 0>} : vector<8x1xi32>
    %38 = arith.sitofp %37 : vector<8x1xi32> to vector<8x1xf32>
    %cst_9 = arith.constant 0.042857144 : f32
    %39 = vector.broadcast %cst_9 : f32 to vector<8x1xf32>
    %40 = arith.mulf %39, %38 : vector<8x1xf32>
    %cst_10 = arith.constant 0.000000e+00 : f32
    %41 = vector.broadcast %cst_10 : f32 to vector<8x1xf32>
    %42 = arith.addf %41, %40 : vector<8x1xf32>
    %43 = vector.broadcast %4 : vector<1x512xf32> to vector<8x512xf32>
    %44 = vector.broadcast %42 : vector<8x1xf32> to vector<8x512xf32>
    %45 = arith.subf %43, %44 : vector<8x512xf32>
    %cst_11 = arith.constant 23.333334 : f32
    %46 = vector.broadcast %cst_11 : f32 to vector<8x512xf32>
    %47 = arith.mulf %45, %46 : vector<8x512xf32>
    %cst_12 = arith.constant 0.000000e+00 : f32
    %48 = vector.broadcast %cst_12 : f32 to vector<8x512xf32>
    %49 = arith.subf %48, %47 : vector<8x512xf32>
    %50 = arith.mulf %49, %47 : vector<8x512xf32>
    %51 = math.exp %50 : vector<8x512xf32>
    %cst_13 = arith.constant 0.892857134 : f32
    %52 = vector.broadcast %cst_13 : f32 to vector<8x512xf32>
    %53 = arith.mulf %51, %52 : vector<8x512xf32>
    %54 = tpu.concatenate %36, %53 in 0 : vector<8x512xf32>, vector<8x512xf32> -> vector<16x512xf32>
    %cst_14 = arith.constant 1.000000e+00 : f32
    %55 = vector.broadcast %cst_14 : f32 to vector<1x512xf32>
    %cst_15 = arith.constant 1.73205078 : f32
    %56 = vector.broadcast %cst_15 : f32 to vector<1x512xf32>
    %57 = arith.mulf %56, %17 : vector<1x512xf32>
    %cst_16 = arith.constant 1.73205078 : f32
    %58 = vector.broadcast %cst_16 : f32 to vector<1x512xf32>
    %59 = arith.mulf %58, %18 : vector<1x512xf32>
    %cst_17 = arith.constant 1.73205078 : f32
    %60 = vector.broadcast %cst_17 : f32 to vector<1x512xf32>
    %61 = arith.mulf %60, %19 : vector<1x512xf32>
    %cst_18 = arith.constant 3.87298346 : f32
    %62 = vector.broadcast %cst_18 : f32 to vector<1x512xf32>
    %63 = arith.mulf %62, %17 : vector<1x512xf32>
    %64 = arith.mulf %63, %19 : vector<1x512xf32>
    %cst_19 = arith.constant 3.87298346 : f32
    %65 = vector.broadcast %cst_19 : f32 to vector<1x512xf32>
    %66 = arith.mulf %65, %17 : vector<1x512xf32>
    %67 = arith.mulf %66, %18 : vector<1x512xf32>
    %68 = arith.mulf %18, %18 : vector<1x512xf32>
    %69 = arith.mulf %17, %17 : vector<1x512xf32>
    %70 = arith.mulf %19, %19 : vector<1x512xf32>
    %71 = arith.addf %69, %70 : vector<1x512xf32>
    %cst_20 = arith.constant 5.000000e-01 : f32
    %72 = vector.broadcast %cst_20 : f32 to vector<1x512xf32>
    %73 = arith.mulf %72, %71 : vector<1x512xf32>
    %74 = arith.subf %68, %73 : vector<1x512xf32>
    %cst_21 = arith.constant 2.23606801 : f32
    %75 = vector.broadcast %cst_21 : f32 to vector<1x512xf32>
    %76 = arith.mulf %75, %74 : vector<1x512xf32>
    %cst_22 = arith.constant 3.87298346 : f32
    %77 = vector.broadcast %cst_22 : f32 to vector<1x512xf32>
    %78 = arith.mulf %77, %18 : vector<1x512xf32>
    %79 = arith.mulf %78, %19 : vector<1x512xf32>
    %80 = arith.mulf %19, %19 : vector<1x512xf32>
    %81 = arith.mulf %17, %17 : vector<1x512xf32>
    %82 = arith.subf %80, %81 : vector<1x512xf32>
    %cst_23 = arith.constant 1.93649173 : f32
    %83 = vector.broadcast %cst_23 : f32 to vector<1x512xf32>
    %84 = arith.mulf %83, %82 : vector<1x512xf32>
    %85 = tpu.concatenate %55, %57, %59, %61, %64, %67, %76, %79, %84 in 0 : vector<1x512xf32>, vector<1x512xf32>, vector<1x512xf32>, vector<1x512xf32>, vector<1x512xf32>, vector<1x512xf32>, vector<1x512xf32>, vector<1x512xf32>, vector<1x512xf32> -> vector<9x512xf32>
    %86 = tpu.iota {dimensions = array<i32: 0>} : vector<16x512xi32>
    %c0_24 = arith.constant 0 : index
    %c0_25 = arith.constant 0 : index
    %87 = vector.load %arg5[%c0_24, %c0_25] : memref<1x512xi32, #tpu.memory_space<vmem>>, vector<1x512xi32>
    %88 = vector.broadcast %87 : vector<1x512xi32> to vector<16x512xi32>
    %89 = arith.cmpi eq, %86, %88 : vector<16x512xi32>
    %90 = arith.extui %89 : vector<16x512xi1> to vector<16x512xi32>
    %91 = arith.sitofp %90 : vector<16x512xi32> to vector<16x512xf32>
    %92 = arith.truncf %91 : vector<16x512xf32> to vector<16x512xbf16>
    %c0_26 = arith.constant 0 : index
    %c0_27 = arith.constant 0 : index
    %93 = vector.load %arg1[%c0_26, %c0_27] : memref<32x16xf32, #tpu.memory_space<vmem>>, vector<32x16xf32>
    %94 = arith.truncf %93 : vector<32x16xf32> to vector<32x16xbf16>
    %cst_28 = arith.constant dense<0.000000e+00> : vector<32x512xf32>
    %95 = tpu.matmul %94, %92, %cst_28 {dimension_numbers = #tpu.dot_dimension_numbers<[1], [0], [0], [1], [0, 0, 1, 1], [], []>} : vector<32x16xbf16>, vector<16x512xbf16>, vector<32x512xf32> -> vector<32x512xf32>
    %c0_29 = arith.constant 0 : index
    %c0_30 = arith.constant 0 : index
    %96 = vector.load %arg7[%c0_29, %c0_30] : memref<32x16xbf16, #tpu.memory_space<vmem>>, vector<32x16xbf16>
    %97 = arith.truncf %54 : vector<16x512xf32> to vector<16x512xbf16>
    %cst_31 = arith.constant dense<0.000000e+00> : vector<32x512xf32>
    %98 = tpu.matmul %96, %97, %cst_31 {dimension_numbers = #tpu.dot_dimension_numbers<[1], [0], [0], [1], [0, 0, 1, 1], [], []>} : vector<32x16xbf16>, vector<16x512xbf16>, vector<32x512xf32> -> vector<32x512xf32>
    %99 = arith.negf %98 : vector<32x512xf32>
    %100 = math.exp %99 : vector<32x512xf32>
    %cst_32 = arith.constant 1.000000e+00 : f32
    %101 = vector.broadcast %cst_32 : f32 to vector<32x512xf32>
    %102 = arith.addf %101, %100 : vector<32x512xf32>
    %103 = arith.divf %101, %102 : vector<32x512xf32>
    %104 = arith.mulf %98, %103 : vector<32x512xf32>
    %c0_33 = arith.constant 0 : index
    %c0_34 = arith.constant 0 : index
    %105 = vector.load %arg8[%c0_33, %c0_34] : memref<32x32xbf16, #tpu.memory_space<vmem>>, vector<32x32xbf16>
    %106 = arith.truncf %104 : vector<32x512xf32> to vector<32x512xbf16>
    %cst_35 = arith.constant dense<0.000000e+00> : vector<32x512xf32>
    %107 = tpu.matmul %105, %106, %cst_35 {dimension_numbers = #tpu.dot_dimension_numbers<[1], [0], [0], [1], [0, 0, 1, 1], [], []>} : vector<32x32xbf16>, vector<32x512xbf16>, vector<32x512xf32> -> vector<32x512xf32>
    %c512_i32 = arith.constant 512 : i32
    %108 = arith.muli %arg0, %c512_i32 : i32
    %109 = tpu.iota {dimensions = array<i32: 1>} : vector<1x512xi32>
    %110 = vector.broadcast %108 : i32 to vector<1x512xi32>
    %111 = arith.addi %110, %109 : vector<1x512xi32>
    %c32_i32 = arith.constant 32 : i32
    %112 = vector.broadcast %c32_i32 : i32 to vector<1x512xi32>
    %113 = arith.cmpi slt, %111, %112 : vector<1x512xi32>
    %114 = arith.extui %113 : vector<1x512xi1> to vector<1x512xi32>
    %115 = arith.sitofp %114 : vector<1x512xi32> to vector<1x512xf32>
    %116 = arith.mulf %107, %95 : vector<32x512xf32>
    %117 = vector.broadcast %115 : vector<1x512xf32> to vector<32x512xf32>
    %118 = arith.mulf %116, %117 : vector<32x512xf32>
    %c0_36 = arith.constant 0 : index
    %c0_37 = arith.constant 0 : index
    %119 = vector.load %arg11[%c0_36, %c0_37] : memref<288x9xbf16, #tpu.memory_space<vmem>>, vector<288x9xbf16>
    %120 = arith.truncf %85 : vector<9x512xf32> to vector<9x512xbf16>
    %cst_38 = arith.constant dense<0.000000e+00> : vector<288x512xf32>
    %121 = tpu.matmul %119, %120, %cst_38 {dimension_numbers = #tpu.dot_dimension_numbers<[1], [0], [0], [1], [0, 0, 1, 1], [], []>} : vector<288x9xbf16>, vector<9x512xbf16>, vector<288x512xf32> -> vector<288x512xf32>
    %c0_39 = arith.constant 0 : index
    %c0_40 = arith.constant 0 : index
    %122 = vector.load %arg12[%c0_39, %c0_40] : memref<288x32xbf16, #tpu.memory_space<vmem>>, vector<288x32xbf16>
    %123 = arith.truncf %118 : vector<32x512xf32> to vector<32x512xbf16>
    %cst_41 = arith.constant dense<0.000000e+00> : vector<288x512xf32>
    %124 = tpu.matmul %122, %123, %cst_41 {dimension_numbers = #tpu.dot_dimension_numbers<[1], [0], [0], [1], [0, 0, 1, 1], [], []>} : vector<288x32xbf16>, vector<32x512xbf16>, vector<288x512xf32> -> vector<288x512xf32>
    %125 = arith.mulf %121, %124 : vector<288x512xf32>
    %126 = tpu.iota {dimensions = array<i32: 1>} : vector<512x16xi32>
    %c0_42 = arith.constant 0 : index
    %c0_43 = arith.constant 0 : index
    %127 = vector.load %arg6[%c0_42, %c0_43] : memref<512x1xi32, #tpu.memory_space<vmem>>, vector<512x1xi32>
    %128 = vector.broadcast %127 : vector<512x1xi32> to vector<512x16xi32>
    %129 = arith.cmpi eq, %126, %128 : vector<512x16xi32>
    %130 = arith.extui %129 : vector<512x16xi1> to vector<512x16xi32>
    %131 = arith.sitofp %130 : vector<512x16xi32> to vector<512x16xf32>
    %132 = arith.truncf %131 : vector<512x16xf32> to vector<512x16xbf16>
    %c0_44 = arith.constant 0 : index
    %c0_45 = arith.constant 0 : index
    %133 = vector.load %arg14[%c0_44, %c0_45] : memref<288x16xf32, #tpu.memory_space<vmem>>, vector<288x16xf32>
    %134 = arith.truncf %125 : vector<288x512xf32> to vector<288x512xbf16>
    %cst_46 = arith.constant dense<0.000000e+00> : vector<288x16xf32>
    %135 = tpu.matmul %134, %132, %cst_46 {dimension_numbers = #tpu.dot_dimension_numbers<[1], [0], [0], [1], [0, 0, 1, 1], [], []>} : vector<288x512xbf16>, vector<512x16xbf16>, vector<288x16xf32> -> vector<288x16xf32>
    %136 = arith.addf %133, %135 : vector<288x16xf32>
    %c0_47 = arith.constant 0 : index
    %c0_48 = arith.constant 0 : index
    %137 = vector.load %arg14[%c0_47, %c0_48] : memref<288x16xf32, #tpu.memory_space<vmem>>, vector<288x16xf32>
    tpu.vector_store %arg14[%c0_47, %c0_48], %136 {strides = array<i32>} : memref<288x16xf32, #tpu.memory_space<vmem>>, vector<288x16xf32>,
    %c0_i32_49 = arith.constant 0 : i32
    %138 = arith.cmpi eq, %arg0, %c0_i32_49 : i32
    %139 = arith.extui %138 : i1 to i32
    %c0_i32_50 = arith.constant 0 : i32
    %140 = arith.cmpi ne, %139, %c0_i32_50 : i32
    scf.if %140 {
      %c0_51 = arith.constant 0 : index
      %c0_52 = arith.constant 0 : index
      %141 = vector.load %arg14[%c0_51, %c0_52] : memref<288x16xf32, #tpu.memory_space<vmem>>, vector<288x16xf32>
      %cst_53 = arith.constant 1.000000e-01 : f32
      %142 = vector.broadcast %cst_53 : f32 to vector<288x16xf32>
      %143 = arith.mulf %141, %142 : vector<288x16xf32>
      %c0_54 = arith.constant 0 : index
      %c0_55 = arith.constant 0 : index
      %144 = vector.load %arg9[%c0_54, %c0_55] : memref<32x288xbf16, #tpu.memory_space<vmem>>, vector<32x288xbf16>
      %145 = arith.truncf %143 : vector<288x16xf32> to vector<288x16xbf16>
      %cst_56 = arith.constant dense<0.000000e+00> : vector<32x16xf32>
      %146 = tpu.matmul %144, %145, %cst_56 {dimension_numbers = #tpu.dot_dimension_numbers<[1], [0], [0], [1], [0, 0, 1, 1], [], []>} : vector<32x288xbf16>, vector<288x16xbf16>, vector<32x16xf32> -> vector<32x16xf32>
      %c0_57 = arith.constant 0 : index
      %c0_58 = arith.constant 0 : index
      %147 = vector.load %arg10[%c0_57, %c0_58] : memref<32x32xbf16, #tpu.memory_space<vmem>>, vector<32x32xbf16>
      %c0_59 = arith.constant 0 : index
      %c0_60 = arith.constant 0 : index
      %148 = vector.load %arg1[%c0_59, %c0_60] : memref<32x16xf32, #tpu.memory_space<vmem>>, vector<32x16xf32>
      %149 = arith.truncf %148 : vector<32x16xf32> to vector<32x16xbf16>
      %cst_61 = arith.constant dense<0.000000e+00> : vector<32x16xf32>
      %150 = tpu.matmul %147, %149, %cst_61 {dimension_numbers = #tpu.dot_dimension_numbers<[1], [0], [0], [1], [0, 0, 1, 1], [], []>} : vector<32x32xbf16>, vector<32x16xbf16>, vector<32x16xf32> -> vector<32x16xf32>
      %151 = arith.addf %146, %150 : vector<32x16xf32>
      %c0_62 = arith.constant 0 : index
      %c0_63 = arith.constant 0 : index
      %152 = vector.load %arg2[%c0_62, %c0_63] : memref<32x16xf32, #tpu.memory_space<vmem>>, vector<32x16xf32>
      %153 = arith.negf %151 : vector<32x16xf32>
      %154 = math.exp %153 : vector<32x16xf32>
      %cst_64 = arith.constant 1.000000e+00 : f32
      %155 = vector.broadcast %cst_64 : f32 to vector<32x16xf32>
      %156 = arith.addf %155, %154 : vector<32x16xf32>
      %157 = arith.divf %155, %156 : vector<32x16xf32>
      %158 = arith.mulf %151, %157 : vector<32x16xf32>
      %159 = arith.addf %152, %158 : vector<32x16xf32>
      %c0_65 = arith.constant 0 : index
      %c0_66 = arith.constant 0 : index
      %160 = vector.load %arg13[%c0_65, %c0_66] : memref<32x16xf32, #tpu.memory_space<vmem>>, vector<32x16xf32>
      tpu.vector_store %arg13[%c0_65, %c0_66], %159 {strides = array<i32>} : memref<32x16xf32, #tpu.memory_space<vmem>>, vector<32x16xf32>,
    } else {
    }
    return
  }
  func.func @transform_0(%arg0: i32) -> (i32, i32) {
    %c0_i32 = arith.constant 0 : i32
    %c0_i32_0 = arith.constant 0 : i32
    %c0_i32_1 = arith.constant 0 : i32
    return %c0_i32, %c0_i32_0 : i32, i32
  }
  func.func @transform_1(%arg0: i32) -> (i32, i32) {
    %c0_i32 = arith.constant 0 : i32
    %c0_i32_0 = arith.constant 0 : i32
    %c0_i32_1 = arith.constant 0 : i32
    return %c0_i32, %c0_i32_0 : i32, i32
  }
  func.func @transform_2(%arg0: i32) -> (i32, i32) {
    %c0_i32 = arith.constant 0 : i32
    %c0_i32_0 = arith.constant 0 : i32
    return %c0_i32, %arg0 : i32, i32
  }
  func.func @transform_3(%arg0: i32) -> (i32, i32) {
    %c0_i32 = arith.constant 0 : i32
    %c0_i32_0 = arith.constant 0 : i32
    return %c0_i32, %arg0 : i32, i32
  }
  func.func @transform_4(%arg0: i32) -> (i32, i32) {
    %c0_i32 = arith.constant 0 : i32
    %c0_i32_0 = arith.constant 0 : i32
    return %c0_i32, %arg0 : i32, i32
  }
  func.func @transform_5(%arg0: i32) -> (i32, i32) {
    %c0_i32 = arith.constant 0 : i32
    %c0_i32_0 = arith.constant 0 : i32
    return %arg0, %c0_i32 : i32, i32
  }
  func.func @transform_6(%arg0: i32) -> (i32, i32) {
    %c0_i32 = arith.constant 0 : i32
    %c0_i32_0 = arith.constant 0 : i32
    %c0_i32_1 = arith.constant 0 : i32
    return %c0_i32, %c0_i32_0 : i32, i32
  }
  func.func @transform_7(%arg0: i32) -> (i32, i32) {
    %c0_i32 = arith.constant 0 : i32
    %c0_i32_0 = arith.constant 0 : i32
    %c0_i32_1 = arith.constant 0 : i32
    return %c0_i32, %c0_i32_0 : i32, i32
  }
  func.func @transform_8(%arg0: i32) -> (i32, i32) {
    %c0_i32 = arith.constant 0 : i32
    %c0_i32_0 = arith.constant 0 : i32
    %c0_i32_1 = arith.constant 0 : i32
    return %c0_i32, %c0_i32_0 : i32, i32
  }
  func.func @transform_9(%arg0: i32) -> (i32, i32) {
    %c0_i32 = arith.constant 0 : i32
    %c0_i32_0 = arith.constant 0 : i32
    %c0_i32_1 = arith.constant 0 : i32
    return %c0_i32, %c0_i32_0 : i32, i32
  }
  func.func @transform_10(%arg0: i32) -> (i32, i32) {
    %c0_i32 = arith.constant 0 : i32
    %c0_i32_0 = arith.constant 0 : i32
    %c0_i32_1 = arith.constant 0 : i32
    return %c0_i32, %c0_i32_0 : i32, i32
  }
  func.func @transform_11(%arg0: i32) -> (i32, i32) {
    %c0_i32 = arith.constant 0 : i32
    %c0_i32_0 = arith.constant 0 : i32
    %c0_i32_1 = arith.constant 0 : i32
    return %c0_i32, %c0_i32_0 : i32, i32
  }
  func.func @transform_12(%arg0: i32) -> (i32, i32) {
    %c0_i32 = arith.constant 0 : i32
    %c0_i32_0 = arith.constant 0 : i32
    %c0_i32_1 = arith.constant 0 : i32
    return %c0_i32, %c0_i32_0 : i32, i32
  }
}

</mosaic_0001>

<llo_original>
// kernel: tpu_custom_call.1
$region0: #{tpu_custom_call.1}
  #allocation0 [shape = 'u32[]', space=smem, size = 0x4, offset = 0x4, fixed_abs, tag = 'smem constant byte address 0x4 - core index']
  #allocation1 [shape = 'u32[144,128]{1,0:T(1,128)}', space=vmem, size = 0x12000, scoped, tag = 'internal scratch']
  #allocation2 [shape = 'f32[288,16]{1,0:T(8,128)}', space=vmem, size = 0x24000, scoped, tag = 'scratch operand']
  %s0 = inlined_call_operand.vmem [shape: f32[32,16], index: 0, kind: input, shape index: {}]
  %s1 = inlined_call_operand.vmem [shape: f32[32,16], index: 1, kind: input, shape index: {}]
  %s2 = inlined_call_operand.vmem [shape: f32[3,512], index: 2, kind: input, shape index: {}]
  %s3 = inlined_call_operand.vmem [shape: f32[1,512], index: 3, kind: input, shape index: {}]
  %s4 = inlined_call_operand.vmem [shape: s32[1,512], index: 4, kind: input, shape index: {}]
  %s5 = inlined_call_operand.vmem [shape: s32[512,1], index: 5, kind: input, shape index: {}]
  %s6 = inlined_call_operand.vmem [shape: bf16[32,16], index: 6, kind: input, shape index: {}]
  %s7 = inlined_call_operand.vmem [shape: bf16[32,32], index: 7, kind: input, shape index: {}]
  %s8 = inlined_call_operand.vmem [shape: bf16[32,288], index: 8, kind: input, shape index: {}]
  %s9 = inlined_call_operand.vmem [shape: bf16[32,32], index: 9, kind: input, shape index: {}]
  %s10 = inlined_call_operand.vmem [shape: bf16[288,9], index: 10, kind: input, shape index: {}]
  %s11 = inlined_call_operand.vmem [shape: bf16[288,32], index: 11, kind: input, shape index: {}]
  %s12 = inlined_call_operand.vmem [shape: f32[32,16], index: 12, kind: output, shape index: {}]
  %s13 = sld [smem:[#allocation0]]
  $region66: #{tpu_custom_call.1} parent=0
    _
  %s15 = ssub.s32 1, %s13
  %s16 = scalar_select 0, %s15, %s13
  // Predicated region
  $region2: #{tpu_custom_call.1} parent=0 // pred_check
    _
  $region3: #{tpu_custom_call.1} parent=0 // pred_check_branch
    %18 = sbr.rel (0) target = $region5
  $region4: #{tpu_custom_call.1} parent=0 // pred_region
    _
  $region5: #{tpu_custom_call.1} parent=0 // pred_fallthru
    _
  // Predicated region
  $region6: #{tpu_custom_call.1} parent=0 // pred_check
    _
  $region7: #{tpu_custom_call.1} parent=0 // pred_check_branch
    %20 = sbr.rel (0) target = $region9
  $region8: #{tpu_custom_call.1} parent=0 // pred_region
    _
  $region9: #{tpu_custom_call.1} parent=0 // pred_fallthru
    _
  // Predicated region
  $region10: #{tpu_custom_call.1} parent=0 // pred_check
    _
  $region11: #{tpu_custom_call.1} parent=0 // pred_check_branch
    %22 = sbr.rel (0) target = $region13
  $region12: #{tpu_custom_call.1} parent=0 // pred_region
    _
  $region13: #{tpu_custom_call.1} parent=0 // pred_fallthru
    _
  // Predicated region
  $region14: #{tpu_custom_call.1} parent=0 // pred_check
    _
  $region15: #{tpu_custom_call.1} parent=0 // pred_check_branch
    %24 = sbr.rel (0) target = $region17
  $region16: #{tpu_custom_call.1} parent=0 // pred_region
    _
  $region17: #{tpu_custom_call.1} parent=0 // pred_fallthru
    _
  // Predicated region
  $region18: #{tpu_custom_call.1} parent=0 // pred_check
    _
  $region19: #{tpu_custom_call.1} parent=0 // pred_check_branch
    %26 = sbr.rel (0) target = $region21
  $region20: #{tpu_custom_call.1} parent=0 // pred_region
    _
  $region21: #{tpu_custom_call.1} parent=0 // pred_fallthru
    _
  // Predicated region
  $region22: #{tpu_custom_call.1} parent=0 // pred_check
    _
  $region23: #{tpu_custom_call.1} parent=0 // pred_check_branch
    %28 = sbr.rel (0) target = $region25
  $region24: #{tpu_custom_call.1} parent=0 // pred_region
    _
  $region25: #{tpu_custom_call.1} parent=0 // pred_fallthru
    _
  // Predicated region
  $region26: #{tpu_custom_call.1} parent=0 // pred_check
    _
  $region27: #{tpu_custom_call.1} parent=0 // pred_check_branch
    %30 = sbr.rel (0) target = $region29
  $region28: #{tpu_custom_call.1} parent=0 // pred_region
    _
  $region29: #{tpu_custom_call.1} parent=0 // pred_fallthru
    _
  // Predicated region
  $region30: #{tpu_custom_call.1} parent=0 // pred_check
    _
  $region31: #{tpu_custom_call.1} parent=0 // pred_check_branch
    %32 = sbr.rel (0) target = $region33
  $region32: #{tpu_custom_call.1} parent=0 // pred_region
    _
  $region33: #{tpu_custom_call.1} parent=0 // pred_fallthru
    _
  // Predicated region
  $region34: #{tpu_custom_call.1} parent=0 // pred_check
    _
  $region35: #{tpu_custom_call.1} parent=0 // pred_check_branch
    %34 = sbr.rel (0) target = $region37
  $region36: #{tpu_custom_call.1} parent=0 // pred_region
    _
  $region37: #{tpu_custom_call.1} parent=0 // pred_fallthru
    _
  // Predicated region
  $region38: #{tpu_custom_call.1} parent=0 // pred_check
    _
  $region39: #{tpu_custom_call.1} parent=0 // pred_check_branch
    %36 = sbr.rel (0) target = $region41
  $region40: #{tpu_custom_call.1} parent=0 // pred_region
    _
  $region41: #{tpu_custom_call.1} parent=0 // pred_fallthru
    _
  // Predicated region
  $region42: #{tpu_custom_call.1} parent=0 // pred_check
    _
  $region43: #{tpu_custom_call.1} parent=0 // pred_check_branch
    %38 = sbr.rel (0) target = $region45
  $region44: #{tpu_custom_call.1} parent=0 // pred_region
    _
  $region45: #{tpu_custom_call.1} parent=0 // pred_fallthru
    _
  // Predicated region
  $region46: #{tpu_custom_call.1} parent=0 // pred_check
    _
  $region47: #{tpu_custom_call.1} parent=0 // pred_check_branch
    %40 = sbr.rel (0) target = $region49
  $region48: #{tpu_custom_call.1} parent=0 // pred_region
    _
  $region49: #{tpu_custom_call.1} parent=0 // pred_fallthru
    _
  %p42 = scmp.eq.s32.totalorder 0, 0
  // Predicated region
  $region50: #{tpu_custom_call.1} parent=0 // pred_check
    %p43 = pneg %p42
  $region51: #{tpu_custom_call.1} parent=0 // pred_check_branch
    %45 = sbr.rel (%p43) target = $region53
  $region52: #{tpu_custom_call.1} parent=0 // pred_region
    %vm46 = vcmask 130048
    %47 = vst.msk [vmem:[#allocation2] sm:$0xff] %vm46, 0.0
    %48 = vst.msk [vmem:[#allocation2 + $0x8] sm:$0xff] %vm46, 0.0
    %49 = vst.msk [vmem:[#allocation2 + $0x10] sm:$0xff] %vm46, 0.0
    %50 = vst.msk [vmem:[#allocation2 + $0x18] sm:$0xff] %vm46, 0.0
    %51 = vst.msk [vmem:[#allocation2 + $0x20] sm:$0xff] %vm46, 0.0
    %52 = vst.msk [vmem:[#allocation2 + $0x28] sm:$0xff] %vm46, 0.0
    %53 = vst.msk [vmem:[#allocation2 + $0x30] sm:$0xff] %vm46, 0.0
    %54 = vst.msk [vmem:[#allocation2 + $0x38] sm:$0xff] %vm46, 0.0
    %55 = vst.msk [vmem:[#allocation2 + $0x40] sm:$0xff] %vm46, 0.0
    %56 = vst.msk [vmem:[#allocation2 + $0x48] sm:$0xff] %vm46, 0.0
    %57 = vst.msk [vmem:[#allocation2 + $0x50] sm:$0xff] %vm46, 0.0
    %58 = vst.msk [vmem:[#allocation2 + $0x58] sm:$0xff] %vm46, 0.0
    %59 = vst.msk [vmem:[#allocation2 + $0x60] sm:$0xff] %vm46, 0.0
    %60 = vst.msk [vmem:[#allocation2 + $0x68] sm:$0xff] %vm46, 0.0
    %61 = vst.msk [vmem:[#allocation2 + $0x70] sm:$0xff] %vm46, 0.0
    %62 = vst.msk [vmem:[#allocation2 + $0x78] sm:$0xff] %vm46, 0.0
    %63 = vst.msk [vmem:[#allocation2 + $0x80] sm:$0xff] %vm46, 0.0
    %64 = vst.msk [vmem:[#allocation2 + $0x88] sm:$0xff] %vm46, 0.0
    %65 = vst.msk [vmem:[#allocation2 + $0x90] sm:$0xff] %vm46, 0.0
    %66 = vst.msk [vmem:[#allocation2 + $0x98] sm:$0xff] %vm46, 0.0
    %67 = vst.msk [vmem:[#allocation2 + $0xa0] sm:$0xff] %vm46, 0.0
    %68 = vst.msk [vmem:[#allocation2 + $0xa8] sm:$0xff] %vm46, 0.0
    %69 = vst.msk [vmem:[#allocation2 + $0xb0] sm:$0xff] %vm46, 0.0
    %70 = vst.msk [vmem:[#allocation2 + $0xb8] sm:$0xff] %vm46, 0.0
    %71 = vst.msk [vmem:[#allocation2 + $0xc0] sm:$0xff] %vm46, 0.0
    %72 = vst.msk [vmem:[#allocation2 + $0xc8] sm:$0xff] %vm46, 0.0
    %73 = vst.msk [vmem:[#allocation2 + $0xd0] sm:$0xff] %vm46, 0.0
    %74 = vst.msk [vmem:[#allocation2 + $0xd8] sm:$0xff] %vm46, 0.0
    %75 = vst.msk [vmem:[#allocation2 + $0xe0] sm:$0xff] %vm46, 0.0
    %76 = vst.msk [vmem:[#allocation2 + $0xe8] sm:$0xff] %vm46, 0.0
    %77 = vst.msk [vmem:[#allocation2 + $0xf0] sm:$0xff] %vm46, 0.0
    %78 = vst.msk [vmem:[#allocation2 + $0xf8] sm:$0xff] %vm46, 0.0
    %79 = vst.msk [vmem:[#allocation2 + $0x100] sm:$0xff] %vm46, 0.0
    %80 = vst.msk [vmem:[#allocation2 + $0x108] sm:$0xff] %vm46, 0.0
    %81 = vst.msk [vmem:[#allocation2 + $0x110] sm:$0xff] %vm46, 0.0
    %82 = vst.msk [vmem:[#allocation2 + $0x118] sm:$0xff] %vm46, 0.0
  $region53: #{tpu_custom_call.1} parent=0 // pred_fallthru
    _
  %v83 = vld [vmem:[%s2] sm:$0x77]
  %v84 = vld [vmem:[%s2 + $0x8] sm:$0x77]
  %v85 = vld [vmem:[%s3] sm:$0xf]
  %v86 = vmul.f32 %v83, %v83
  %v87 = vmul.f32 %v84, %v84
  %v90 = vrot.slane %v86, 5
  %v91 = vrot.slane %v90, 4
  %v92 = vrot.slane %v87, 5
  %v93 = vrot.slane %v92, 4
  %v96 = vadd.f32 %v86, %v91
  %v97 = vadd.f32 %v87, %v93
  %v98 = vrot.slane %v86, 6
  %v99 = vrot.slane %v98, 4
  %v100 = vrot.slane %v87, 6
  %v101 = vrot.slane %v100, 4
  %v104 = vadd.f32 %v96, %v99
  %v105 = vadd.f32 %v97, %v101
  %v106 = vadd.f32 %v104, 1e-12
  %v107 = vadd.f32 %v105, 1e-12
  %v108 = vrsqrt.pop %v106
  %v109 = vrsqrt.pop %v107
  %v110 = vmul.f32 %v104, %v108
  %v111 = vmul.f32 %v105, %v109
  %v112 = vmul.f32 %v83, %v108
  %v113 = vmul.f32 %v84, %v109
  %v116 = vrot.slane %v108, 7
  %v117 = vrot.slane %v109, 7
  %v120 = vmul.f32 %v83, %v116
  %v121 = vmul.f32 %v84, %v117
  %v122 = vrot.slane %v108, 6
  %v123 = vrot.slane %v109, 6
  %v126 = vmul.f32 %v83, %v122
  %v127 = vmul.f32 %v84, %v123
  %v128 = vlaneseq
  %v129 = vshrl.u32 %v128, 7
  %v130 = vcvt.s32.f32 %v129
  %v131 = vmul.f32 %v130, 0.08571429
  %v132 = vadd.f32 %v131, 0.0
  %v135 = vlaneseq
  %v136 = vshrl.u32 %v135, 7
  %v137 = vsub.s32 0, %v136
  %v138 = vrot.slane %v110, %v137
  %v139 = vlaneseq
  %v140 = vshrl.u32 %v139, 7
  %v141 = vsub.s32 4, %v140
  %v142 = vrot.slane %v110, %v141
  %v143 = vlaneseq
  %v144 = vshrl.u32 %v143, 7
  %v145 = vsub.s32 0, %v144
  %v146 = vrot.slane %v111, %v145
  %v147 = vlaneseq
  %v148 = vshrl.u32 %v147, 7
  %v149 = vsub.s32 4, %v148
  %v150 = vrot.slane %v111, %v149
  %v155 = vlaneseq
  %v156 = vshrl.u32 %v155, 7
  %v157 = vsub.s32 0, %v156
  %v158 = vrot.slane %v138, %v157
  %v159 = vlaneseq
  %v160 = vshrl.u32 %v159, 7
  %v161 = vsub.s32 0, %v160
  %v162 = vrot.slane %v142, %v161
  %v163 = vlaneseq
  %v164 = vshrl.u32 %v163, 7
  %v165 = vsub.s32 0, %v164
  %v166 = vrot.slane %v146, %v165
  %v167 = vlaneseq
  %v168 = vshrl.u32 %v167, 7
  %v169 = vsub.s32 0, %v168
  %v170 = vrot.slane %v150, %v169
  %v171 = vsub.f32 %v158, %v132
  %v172 = vsub.f32 %v162, %v132
  %v173 = vsub.f32 %v166, %v132
  %v174 = vsub.f32 %v170, %v132
  %v175 = vmul.f32 %v171, 11.666667
  %v176 = vmul.f32 %v172, 11.666667
  %v177 = vmul.f32 %v173, 11.666667
  %v178 = vmul.f32 %v174, 11.666667
  %v179 = vsub.f32 0.0, %v175
  %v180 = vsub.f32 0.0, %v176
  %v181 = vsub.f32 0.0, %v177
  %v182 = vsub.f32 0.0, %v178
  %v183 = vmul.f32 %v179, %v175
  %v184 = vmul.f32 %v180, %v176
  %v185 = vmul.f32 %v181, %v177
  %v186 = vmul.f32 %v182, %v178
  %v187 = vmul.f32 %v183, 1.442695
  %v188 = vpow.pop %v187
  %v189 = vmul.f32 %v184, 1.442695
  %v190 = vpow.pop %v189
  %v191 = vmul.f32 %v185, 1.442695
  %v192 = vpow.pop %v191
  %v193 = vmul.f32 %v186, 1.442695
  %v194 = vpow.pop %v193
  %v195 = vmul.f32 %v188, 0.89285713
  %v196 = vmul.f32 %v190, 0.89285713
  %v197 = vmul.f32 %v192, 0.89285713
  %v198 = vmul.f32 %v194, 0.89285713
  %v199 = vmul.f32 %v130, 0.042857144
  %v200 = vadd.f32 %v199, 0.0
  %v202 = vlaneseq
  %v203 = vshrl.u32 %v202, 7
  %v204 = vsub.s32 0, %v203
  %v205 = vrot.slane %v85, %v204
  %v206 = vlaneseq
  %v207 = vshrl.u32 %v206, 7
  %v208 = vsub.s32 1, %v207
  %v209 = vrot.slane %v85, %v208
  %v210 = vlaneseq
  %v211 = vshrl.u32 %v210, 7
  %v212 = vsub.s32 2, %v211
  %v213 = vrot.slane %v85, %v212
  %v214 = vlaneseq
  %v215 = vshrl.u32 %v214, 7
  %v216 = vsub.s32 3, %v215
  %v217 = vrot.slane %v85, %v216
  %v222 = vsub.f32 %v205, %v200
  %v223 = vsub.f32 %v209, %v200
  %v224 = vsub.f32 %v213, %v200
  %v225 = vsub.f32 %v217, %v200
  %v226 = vmul.f32 %v222, 23.333334
  %v227 = vmul.f32 %v223, 23.333334
  %v228 = vmul.f32 %v224, 23.333334
  %v229 = vmul.f32 %v225, 23.333334
  %v230 = vsub.f32 0.0, %v226
  %v231 = vsub.f32 0.0, %v227
  %v232 = vsub.f32 0.0, %v228
  %v233 = vsub.f32 0.0, %v229
  %v234 = vmul.f32 %v230, %v226
  %v235 = vmul.f32 %v231, %v227
  %v236 = vmul.f32 %v232, %v228
  %v237 = vmul.f32 %v233, %v229
  %v238 = vmul.f32 %v234, 1.442695
  %v239 = vpow.pop %v238
  %v240 = vmul.f32 %v235, 1.442695
  %v241 = vpow.pop %v240
  %v242 = vmul.f32 %v236, 1.442695
  %v243 = vpow.pop %v242
  %v244 = vmul.f32 %v237, 1.442695
  %v245 = vpow.pop %v244
  %v246 = vmul.f32 %v239, 0.89285713
  %v247 = vmul.f32 %v241, 0.89285713
  %v248 = vmul.f32 %v243, 0.89285713
  %v249 = vmul.f32 %v245, 0.89285713
  %v250 = vmul.f32 %v112, 1.7320508
  %v251 = vmul.f32 %v113, 1.7320508
  %v252 = vmul.f32 %v120, 1.7320508
  %v253 = vmul.f32 %v121, 1.7320508
  %v254 = vmul.f32 %v126, 1.7320508
  %v255 = vmul.f32 %v127, 1.7320508
  %v256 = vmul.f32 %v112, 3.8729835
  %v257 = vmul.f32 %v113, 3.8729835
  %v260 = vrot.slane %v126, 6
  %v261 = vrot.slane %v260, 4
  %v262 = vrot.slane %v127, 6
  %v263 = vrot.slane %v262, 4
  %v266 = vmul.f32 %v256, %v261
  %v267 = vmul.f32 %v257, %v263
  %v270 = vrot.slane %v120, 5
  %v271 = vrot.slane %v270, 4
  %v272 = vrot.slane %v121, 5
  %v273 = vrot.slane %v272, 4
  %v276 = vmul.f32 %v256, %v271
  %v277 = vmul.f32 %v257, %v273
  %v278 = vmul.f32 %v120, %v120
  %v279 = vmul.f32 %v121, %v121
  %v280 = vmul.f32 %v112, %v112
  %v281 = vmul.f32 %v113, %v113
  %v282 = vmul.f32 %v126, %v126
  %v283 = vmul.f32 %v127, %v127
  %v286 = vrot.slane %v282, 6
  %v287 = vrot.slane %v286, 4
  %v288 = vrot.slane %v283, 6
  %v289 = vrot.slane %v288, 4
  %v292 = vadd.f32 %v280, %v287
  %v293 = vadd.f32 %v281, %v289
  %v294 = vmul.f32 %v292, 0.5
  %v295 = vmul.f32 %v293, 0.5
  %v298 = vrot.slane %v294, 7
  %v299 = vrot.slane %v295, 7
  %v302 = vsub.f32 %v278, %v298
  %v303 = vsub.f32 %v279, %v299
  %v304 = vmul.f32 %v302, 2.236068
  %v305 = vmul.f32 %v303, 2.236068
  %v306 = vmul.f32 %v120, 3.8729835
  %v307 = vmul.f32 %v121, 3.8729835
  %v308 = vrot.slane %v126, 5
  %v309 = vrot.slane %v308, 4
  %v310 = vrot.slane %v127, 5
  %v311 = vrot.slane %v310, 4
  %v314 = vmul.f32 %v306, %v309
  %v315 = vmul.f32 %v307, %v311
  %v318 = vrot.slane %v280, 6
  %v319 = vrot.slane %v281, 6
  %v322 = vsub.f32 %v282, %v318
  %v323 = vsub.f32 %v283, %v319
  %v324 = vmul.f32 %v322, 1.9364917
  %v325 = vmul.f32 %v323, 1.9364917
  %v328 = vlaneseq
  %v329 = vshrl.u32 %v328, 7
  %v330 = vsub.s32 0, %v329
  %v331 = vrot.slane %v250, %v330
  %v332 = vlaneseq
  %v333 = vshrl.u32 %v332, 7
  %v334 = vsub.s32 4, %v333
  %v335 = vrot.slane %v250, %v334
  %v336 = vlaneseq
  %v337 = vshrl.u32 %v336, 7
  %v338 = vsub.s32 0, %v337
  %v339 = vrot.slane %v251, %v338
  %v340 = vlaneseq
  %v341 = vshrl.u32 %v340, 7
  %v342 = vsub.s32 4, %v341
  %v343 = vrot.slane %v251, %v342
  %v350 = vlaneseq
  %v351 = vshrl.u32 %v350, 7
  %v352 = vsub.s32 1, %v351
  %v353 = vrot.slane %v252, %v352
  %v354 = vlaneseq
  %v355 = vshrl.u32 %v354, 7
  %v356 = vsub.s32 5, %v355
  %v357 = vrot.slane %v252, %v356
  %v358 = vlaneseq
  %v359 = vshrl.u32 %v358, 7
  %v360 = vsub.s32 1, %v359
  %v361 = vrot.slane %v253, %v360
  %v362 = vlaneseq
  %v363 = vshrl.u32 %v362, 7
  %v364 = vsub.s32 5, %v363
  %v365 = vrot.slane %v253, %v364
  %v372 = vlaneseq
  %v373 = vshrl.u32 %v372, 7
  %v374 = vsub.s32 2, %v373
  %v375 = vrot.slane %v254, %v374
  %v376 = vlaneseq
  %v377 = vshrl.u32 %v376, 7
  %v378 = vsub.s32 6, %v377
  %v379 = vrot.slane %v254, %v378
  %v380 = vlaneseq
  %v381 = vshrl.u32 %v380, 7
  %v382 = vsub.s32 2, %v381
  %v383 = vrot.slane %v255, %v382
  %v384 = vlaneseq
  %v385 = vshrl.u32 %v384, 7
  %v386 = vsub.s32 6, %v385
  %v387 = vrot.slane %v255, %v386
  %v394 = vlaneseq
  %v395 = vshrl.u32 %v394, 7
  %v396 = vsub.s32 0, %v395
  %v397 = vrot.slane %v266, %v396
  %v398 = vlaneseq
  %v399 = vshrl.u32 %v398, 7
  %v400 = vsub.s32 4, %v399
  %v401 = vrot.slane %v266, %v400
  %v402 = vlaneseq
  %v403 = vshrl.u32 %v402, 7
  %v404 = vsub.s32 0, %v403
  %v405 = vrot.slane %v267, %v404
  %v406 = vlaneseq
  %v407 = vshrl.u32 %v406, 7
  %v408 = vsub.s32 4, %v407
  %v409 = vrot.slane %v267, %v408
  %v416 = vlaneseq
  %v417 = vshrl.u32 %v416, 7
  %v418 = vsub.s32 0, %v417
  %v419 = vrot.slane %v276, %v418
  %v420 = vlaneseq
  %v421 = vshrl.u32 %v420, 7
  %v422 = vsub.s32 4, %v421
  %v423 = vrot.slane %v276, %v422
  %v424 = vlaneseq
  %v425 = vshrl.u32 %v424, 7
  %v426 = vsub.s32 0, %v425
  %v427 = vrot.slane %v277, %v426
  %v428 = vlaneseq
  %v429 = vshrl.u32 %v428, 7
  %v430 = vsub.s32 4, %v429
  %v431 = vrot.slane %v277, %v430
  %v438 = vlaneseq
  %v439 = vshrl.u32 %v438, 7
  %v440 = vsub.s32 1, %v439
  %v441 = vrot.slane %v304, %v440
  %v442 = vlaneseq
  %v443 = vshrl.u32 %v442, 7
  %v444 = vsub.s32 5, %v443
  %v445 = vrot.slane %v304, %v444
  %v446 = vlaneseq
  %v447 = vshrl.u32 %v446, 7
  %v448 = vsub.s32 1, %v447
  %v449 = vrot.slane %v305, %v448
  %v450 = vlaneseq
  %v451 = vshrl.u32 %v450, 7
  %v452 = vsub.s32 5, %v451
  %v453 = vrot.slane %v305, %v452
  %v460 = vlaneseq
  %v461 = vshrl.u32 %v460, 7
  %v462 = vsub.s32 1, %v461
  %v463 = vrot.slane %v314, %v462
  %v464 = vlaneseq
  %v465 = vshrl.u32 %v464, 7
  %v466 = vsub.s32 5, %v465
  %v467 = vrot.slane %v314, %v466
  %v468 = vlaneseq
  %v469 = vshrl.u32 %v468, 7
  %v470 = vsub.s32 1, %v469
  %v471 = vrot.slane %v315, %v470
  %v472 = vlaneseq
  %v473 = vshrl.u32 %v472, 7
  %v474 = vsub.s32 5, %v473
  %v475 = vrot.slane %v315, %v474
  %v482 = vlaneseq
  %v483 = vshrl.u32 %v482, 7
  %v484 = vsub.s32 2, %v483
  %v485 = vrot.slane %v324, %v484
  %v486 = vlaneseq
  %v487 = vshrl.u32 %v486, 7
  %v488 = vsub.s32 6, %v487
  %v489 = vrot.slane %v324, %v488
  %v490 = vlaneseq
  %v491 = vshrl.u32 %v490, 7
  %v492 = vsub.s32 2, %v491
  %v493 = vrot.slane %v325, %v492
  %v494 = vlaneseq
  %v495 = vshrl.u32 %v494, 7
  %v496 = vsub.s32 6, %v495
  %v497 = vrot.slane %v325, %v496
  %vm502 = vcmask 1040384
  %v503 = vsel %vm502, 1.0, %v331
  %v504 = vsel %vm502, 1.0, %v335
  %v505 = vsel %vm502, 1.0, %v339
  %v506 = vsel %vm502, 1.0, %v343
  %vm507 = vcmask 1041408
  %v508 = vsel %vm507, %v503, %v353
  %v509 = vsel %vm507, %v504, %v357
  %v510 = vsel %vm507, %v505, %v361
  %v511 = vsel %vm507, %v506, %v365
  %vm512 = vcmask 1042432
  %v513 = vsel %vm512, %v508, %v375
  %v514 = vsel %vm512, %v509, %v379
  %v515 = vsel %vm512, %v510, %v383
  %v516 = vsel %vm512, %v511, %v387
  %vm517 = vcmask 1043456
  %v518 = vsel %vm517, %v513, %v397
  %v519 = vsel %vm517, %v514, %v401
  %v520 = vsel %vm517, %v515, %v405
  %v521 = vsel %vm517, %v516, %v409
  %vm522 = vcmask 1044480
  %v523 = vsel %vm522, %v518, %v419
  %v524 = vsel %vm522, %v519, %v423
  %v525 = vsel %vm522, %v520, %v427
  %v526 = vsel %vm522, %v521, %v431
  %vm527 = vcmask 1045504
  %v528 = vsel %vm527, %v523, %v441
  %v529 = vsel %vm527, %v524, %v445
  %v530 = vsel %vm527, %v525, %v449
  %v531 = vsel %vm527, %v526, %v453
  %vm532 = vcmask 1046528
  %v533 = vsel %vm532, %v528, %v463
  %v534 = vsel %vm532, %v529, %v467
  %v535 = vsel %vm532, %v530, %v471
  %v536 = vsel %vm532, %v531, %v475
  %v537 = vadd.s32 %v129, 8
  %v538 = vld [vmem:[%s4] sm:$0xf]
  %v539 = vlaneseq
  %v540 = vshrl.u32 %v539, 7
  %v541 = vsub.s32 0, %v540
  %v542 = vrot.slane %v538, %v541
  %v543 = vlaneseq
  %v544 = vshrl.u32 %v543, 7
  %v545 = vsub.s32 1, %v544
  %v546 = vrot.slane %v538, %v545
  %v547 = vlaneseq
  %v548 = vshrl.u32 %v547, 7
  %v549 = vsub.s32 2, %v548
  %v550 = vrot.slane %v538, %v549
  %v551 = vlaneseq
  %v552 = vshrl.u32 %v551, 7
  %v553 = vsub.s32 3, %v552
  %v554 = vrot.slane %v538, %v553
  %vm555 = vcmp.eq.s32.totalorder %v129, %v542
  %vm556 = vcmp.eq.s32.totalorder %v129, %v546
  %vm557 = vcmp.eq.s32.totalorder %v129, %v550
  %vm558 = vcmp.eq.s32.totalorder %v129, %v554
  %vm559 = vcmp.eq.s32.totalorder %v537, %v542
  %vm560 = vcmp.eq.s32.totalorder %v537, %v546
  %vm561 = vcmp.eq.s32.totalorder %v537, %v550
  %vm562 = vcmp.eq.s32.totalorder %v537, %v554
  %v563 = vsel %vm555, 1, 0
  %v564 = vsel %vm556, 1, 0
  %v565 = vsel %vm557, 1, 0
  %v566 = vsel %vm558, 1, 0
  %v567 = vsel %vm559, 1, 0
  %v568 = vsel %vm560, 1, 0
  %v569 = vsel %vm561, 1, 0
  %v570 = vsel %vm562, 1, 0
  %v571 = vcvt.s32.f32 %v563
  %v572 = vcvt.s32.f32 %v564
  %v573 = vcvt.s32.f32 %v565
  %v574 = vcvt.s32.f32 %v566
  %v575 = vcvt.s32.f32 %v567
  %v576 = vcvt.s32.f32 %v568
  %v577 = vcvt.s32.f32 %v569
  %v578 = vcvt.s32.f32 %v570
  %v579 = vpack.c.bf16 %v575, %v571
  %v580 = vpack.c.bf16 %v576, %v572
  %v581 = vpack.c.bf16 %v577, %v573
  %v582 = vpack.c.bf16 %v578, %v574
  %v583 = vld [vmem:[%s0] sm:$0xff]
  %v584 = vld [vmem:[%s0 + $0x8] sm:$0xff]
  %v585 = vld [vmem:[%s0 + $0x10] sm:$0xff]
  %v586 = vld [vmem:[%s0 + $0x18] sm:$0xff]
  %v587 = vpack.c.bf16 %v584, %v583
  %v588 = vpack.c.bf16 %v586, %v585
  %vm589 = vcmask 130048
  %v591 = vsel %vm589, %v587, 0
  %v594 = vsel %vm589, %v588, 0
  %596 = vmatprep.subr.bf16.mxu0 %v580
  %597 = vmatpush1.bf16.msra.mxu0 %v579
  %598 = vmatprep.subr.bf16.mxu0 0
  %599 = vmatpush1.bf16.msra.mxu0 0
  %600 = vmatprep.subr.bf16.mxu0 0
  %601 = vmatpush1.bf16.msra.mxu0 0
  %602 = vmatprep.subr.bf16.mxu0 0
  %603 = vmatpush1.bf16.msra.mxu0 0
  %604 = vmatprep.subr.bf16.mxu0 0
  %605 = vmatpush1.bf16.msra.mxu0 0
  %606 = vmatprep.subr.bf16.mxu0 0
  %607 = vmatpush1.bf16.msra.mxu0 0
  %608 = vmatprep.subr.bf16.mxu0 0
  %609 = vmatpush1.bf16.msra.mxu0 0
  %610 = vmatprep.subr.bf16.mxu0 0
  %611 = vmatpush1.bf16.msra.mxu0 0
  %612 = vmatprep.subr.bf16.mxu0 0
  %613 = vmatpush1.bf16.msra.mxu0 0
  %614 = vmatprep.subr.bf16.mxu0 0
  %615 = vmatpush1.bf16.msra.mxu0 0
  %616 = vmatprep.subr.bf16.mxu0 0
  %617 = vmatpush1.bf16.msra.mxu0 0
  %618 = vmatprep.subr.bf16.mxu0 0
  %619 = vmatpush1.bf16.msra.mxu0 0
  %620 = vmatprep.subr.bf16.mxu0 0
  %621 = vmatpush1.bf16.msra.mxu0 0
  %622 = vmatprep.subr.bf16.mxu0 0
  %623 = vmatpush1.bf16.msra.mxu0 0
  %624 = vmatprep.subr.bf16.mxu0 0
  %625 = vmatpush1.bf16.msra.mxu0 0
  %626 = vmatprep.subr.bf16.mxu0 0
  %627 = vmatpush1.bf16.msra.mxu0 0
  %628 = vmatprep.mubr.bf16.mxu0 0
  %629 = vmatmul.mubr.bf16.gmra.mrb[0].mxu0 %v591
  %v630 = vpop.f32.mrb[0].mxu0
  %v631 = vadd.f32 0.0, %v630
  %v632 = vpop.f32.mrb[0].mxu0
  %v633 = vadd.f32 0.0, %v632
  %v634 = vpop.f32.mrb[0].mxu0
  %v635 = vadd.f32 0.0, %v634
  %v636 = vpop.f32.mrb[0].mxu0
  %v637 = vadd.f32 0.0, %v636
  %638 = vmatprep.mubr.bf16.mxu0 0
  %639 = vmatmul.mubr.bf16.gmra.mrb[0].mxu0 %v594
  %v640 = vpop.f32.mrb[0].mxu0
  %v641 = vadd.f32 0.0, %v640
  %v642 = vpop.f32.mrb[0].mxu0
  %v643 = vadd.f32 0.0, %v642
  %v644 = vpop.f32.mrb[0].mxu0
  %v645 = vadd.f32 0.0, %v644
  %v646 = vpop.f32.mrb[0].mxu0
  %v647 = vadd.f32 0.0, %v646
  %648 = vdwg.mxu0
  %649 = vmatprep.subr.bf16.mxu0 %v582
  %650 = vmatpush1.bf16.msra.mxu0 %v581
  %651 = vmatprep.subr.bf16.mxu0 0
  %652 = vmatpush1.bf16.msra.mxu0 0
  %653 = vmatprep.subr.bf16.mxu0 0
  %654 = vmatpush1.bf16.msra.mxu0 0
  %655 = vmatprep.subr.bf16.mxu0 0
  %656 = vmatpush1.bf16.msra.mxu0 0
  %657 = vmatprep.subr.bf16.mxu0 0
  %658 = vmatpush1.bf16.msra.mxu0 0
  %659 = vmatprep.subr.bf16.mxu0 0
  %660 = vmatpush1.bf16.msra.mxu0 0
  %661 = vmatprep.subr.bf16.mxu0 0
  %662 = vmatpush1.bf16.msra.mxu0 0
  %663 = vmatprep.subr.bf16.mxu0 0
  %664 = vmatpush1.bf16.msra.mxu0 0
  %665 = vmatprep.subr.bf16.mxu0 0
  %666 = vmatpush1.bf16.msra.mxu0 0
  %667 = vmatprep.subr.bf16.mxu0 0
  %668 = vmatpush1.bf16.msra.mxu0 0
  %669 = vmatprep.subr.bf16.mxu0 0
  %670 = vmatpush1.bf16.msra.mxu0 0
  %671 = vmatprep.subr.bf16.mxu0 0
  %672 = vmatpush1.bf16.msra.mxu0 0
  %673 = vmatprep.subr.bf16.mxu0 0
  %674 = vmatpush1.bf16.msra.mxu0 0
  %675 = vmatprep.subr.bf16.mxu0 0
  %676 = vmatpush1.bf16.msra.mxu0 0
  %677 = vmatprep.subr.bf16.mxu0 0
  %678 = vmatpush1.bf16.msra.mxu0 0
  %679 = vmatprep.subr.bf16.mxu0 0
  %680 = vmatpush1.bf16.msra.mxu0 0
  %681 = vmatprep.mubr.bf16.mxu0 0
  %682 = vmatmul.mubr.bf16.gmra.mrb[0].mxu0 %v591
  %v683 = vpop.f32.mrb[0].mxu0
  %v684 = vadd.f32 0.0, %v683
  %v685 = vpop.f32.mrb[0].mxu0
  %v686 = vadd.f32 0.0, %v685
  %v687 = vpop.f32.mrb[0].mxu0
  %v688 = vadd.f32 0.0, %v687
  %v689 = vpop.f32.mrb[0].mxu0
  %v690 = vadd.f32 0.0, %v689
  %691 = vmatprep.mubr.bf16.mxu0 0
  %692 = vmatmul.mubr.bf16.gmra.mrb[0].mxu0 %v594
  %v693 = vpop.f32.mrb[0].mxu0
  %v694 = vadd.f32 0.0, %v693
  %v695 = vpop.f32.mrb[0].mxu0
  %v696 = vadd.f32 0.0, %v695
  %v697 = vpop.f32.mrb[0].mxu0
  %v698 = vadd.f32 0.0, %v697
  %v699 = vpop.f32.mrb[0].mxu0
  %v700 = vadd.f32 0.0, %v699
  %701 = vdwg.mxu0
  %v702 = vld [vmem:[%s6] sm:$0xf]
  %v703 = vld [vmem:[%s6 + $0x4] sm:$0xf]
  %v704 = vld [vmem:[%s6 + $0x8] sm:$0xf]
  %v705 = vld [vmem:[%s6 + $0xc] sm:$0xf]
  %v706 = vpack.c.bf16 %v246, %v195
  %v707 = vpack.c.bf16 %v247, %v196
  %v708 = vpack.c.bf16 %v248, %v197
  %v709 = vpack.c.bf16 %v249, %v198
  %v714 = vunpack.c.l.b16 %v702
  %v715 = vunpack.c.l.b16 %v703
  %v716 = vunpack.c.l.b16 %v704
  %v717 = vunpack.c.l.b16 %v705
  %v718 = vpack.c.b16 %v715, %v714
  %v719 = vpack.c.b16 %v717, %v716
  %v721 = vsel %vm589, %v718, 0
  %v724 = vsel %vm589, %v719, 0
  %726 = vmatprep.subr.bf16.mxu0 %v707
  %727 = vmatpush1.bf16.msra.mxu0 %v706
  %728 = vmatprep.subr.bf16.mxu0 0
  %729 = vmatpush1.bf16.msra.mxu0 0
  %730 = vmatprep.subr.bf16.mxu0 0
  %731 = vmatpush1.bf16.msra.mxu0 0
  %732 = vmatprep.subr.bf16.mxu0 0
  %733 = vmatpush1.bf16.msra.mxu0 0
  %734 = vmatprep.subr.bf16.mxu0 0
  %735 = vmatpush1.bf16.msra.mxu0 0
  %736 = vmatprep.subr.bf16.mxu0 0
  %737 = vmatpush1.bf16.msra.mxu0 0
  %738 = vmatprep.subr.bf16.mxu0 0
  %739 = vmatpush1.bf16.msra.mxu0 0
  %740 = vmatprep.subr.bf16.mxu0 0
  %741 = vmatpush1.bf16.msra.mxu0 0
  %742 = vmatprep.subr.bf16.mxu0 0
  %743 = vmatpush1.bf16.msra.mxu0 0
  %744 = vmatprep.subr.bf16.mxu0 0
  %745 = vmatpush1.bf16.msra.mxu0 0
  %746 = vmatprep.subr.bf16.mxu0 0
  %747 = vmatpush1.bf16.msra.mxu0 0
  %748 = vmatprep.subr.bf16.mxu0 0
  %749 = vmatpush1.bf16.msra.mxu0 0
  %750 = vmatprep.subr.bf16.mxu0 0
  %751 = vmatpush1.bf16.msra.mxu0 0
  %752 = vmatprep.subr.bf16.mxu0 0
  %753 = vmatpush1.bf16.msra.mxu0 0
  %754 = vmatprep.subr.bf16.mxu0 0
  %755 = vmatpush1.bf16.msra.mxu0 0
  %756 = vmatprep.subr.bf16.mxu0 0
  %757 = vmatpush1.bf16.msra.mxu0 0
  %758 = vmatprep.mubr.bf16.mxu0 0
  %759 = vmatmul.mubr.bf16.gmra.mrb[0].mxu0 %v721
  %v760 = vpop.f32.mrb[0].mxu0
  %v761 = vadd.f32 0.0, %v760
  %v762 = vpop.f32.mrb[0].mxu0
  %v763 = vadd.f32 0.0, %v762
  %v764 = vpop.f32.mrb[0].mxu0
  %v765 = vadd.f32 0.0, %v764
  %v766 = vpop.f32.mrb[0].mxu0
  %v767 = vadd.f32 0.0, %v766
  %768 = vmatprep.mubr.bf16.mxu0 0
  %769 = vmatmul.mubr.bf16.gmra.mrb[0].mxu0 %v724
  %v770 = vpop.f32.mrb[0].mxu0
  %v771 = vadd.f32 0.0, %v770
  %v772 = vpop.f32.mrb[0].mxu0
  %v773 = vadd.f32 0.0, %v772
  %v774 = vpop.f32.mrb[0].mxu0
  %v775 = vadd.f32 0.0, %v774
  %v776 = vpop.f32.mrb[0].mxu0
  %v777 = vadd.f32 0.0, %v776
  %778 = vdwg.mxu0
  %779 = vmatprep.subr.bf16.mxu0 %v709
  %780 = vmatpush1.bf16.msra.mxu0 %v708
  %781 = vmatprep.subr.bf16.mxu0 0
  %782 = vmatpush1.bf16.msra.mxu0 0
  %783 = vmatprep.subr.bf16.mxu0 0
  %784 = vmatpush1.bf16.msra.mxu0 0
  %785 = vmatprep.subr.bf16.mxu0 0
  %786 = vmatpush1.bf16.msra.mxu0 0
  %787 = vmatprep.subr.bf16.mxu0 0
  %788 = vmatpush1.bf16.msra.mxu0 0
  %789 = vmatprep.subr.bf16.mxu0 0
  %790 = vmatpush1.bf16.msra.mxu0 0
  %791 = vmatprep.subr.bf16.mxu0 0
  %792 = vmatpush1.bf16.msra.mxu0 0
  %793 = vmatprep.subr.bf16.mxu0 0
  %794 = vmatpush1.bf16.msra.mxu0 0
  %795 = vmatprep.subr.bf16.mxu0 0
  %796 = vmatpush1.bf16.msra.mxu0 0
  %797 = vmatprep.subr.bf16.mxu0 0
  %798 = vmatpush1.bf16.msra.mxu0 0
  %799 = vmatprep.subr.bf16.mxu0 0
  %800 = vmatpush1.bf16.msra.mxu0 0
  %801 = vmatprep.subr.bf16.mxu0 0
  %802 = vmatpush1.bf16.msra.mxu0 0
  %803 = vmatprep.subr.bf16.mxu0 0
  %804 = vmatpush1.bf16.msra.mxu0 0
  %805 = vmatprep.subr.bf16.mxu0 0
  %806 = vmatpush1.bf16.msra.mxu0 0
  %807 = vmatprep.subr.bf16.mxu0 0
  %808 = vmatpush1.bf16.msra.mxu0 0
  %809 = vmatprep.subr.bf16.mxu0 0
  %810 = vmatpush1.bf16.msra.mxu0 0
  %811 = vmatprep.mubr.bf16.mxu0 0
  %812 = vmatmul.mubr.bf16.gmra.mrb[0].mxu0 %v721
  %v813 = vpop.f32.mrb[0].mxu0
  %v814 = vadd.f32 0.0, %v813
  %v815 = vpop.f32.mrb[0].mxu0
  %v816 = vadd.f32 0.0, %v815
  %v817 = vpop.f32.mrb[0].mxu0
  %v818 = vadd.f32 0.0, %v817
  %v819 = vpop.f32.mrb[0].mxu0
  %v820 = vadd.f32 0.0, %v819
  %821 = vmatprep.mubr.bf16.mxu0 0
  %822 = vmatmul.mubr.bf16.gmra.mrb[0].mxu0 %v724
  %v823 = vpop.f32.mrb[0].mxu0
  %v824 = vadd.f32 0.0, %v823
  %v825 = vpop.f32.mrb[0].mxu0
  %v826 = vadd.f32 0.0, %v825
  %v827 = vpop.f32.mrb[0].mxu0
  %v828 = vadd.f32 0.0, %v827
  %v829 = vpop.f32.mrb[0].mxu0
  %v830 = vadd.f32 0.0, %v829
  %831 = vdwg.mxu0
  %v832 = vxor.u32 %v761, 2147483648
  %v833 = vxor.u32 %v763, 2147483648
  %v834 = vxor.u32 %v814, 2147483648
  %v835 = vxor.u32 %v816, 2147483648
  %v836 = vxor.u32 %v765, 2147483648
  %v837 = vxor.u32 %v767, 2147483648
  %v838 = vxor.u32 %v818, 2147483648
  %v839 = vxor.u32 %v820, 2147483648
  %v840 = vxor.u32 %v771, 2147483648
  %v841 = vxor.u32 %v773, 2147483648
  %v842 = vxor.u32 %v824, 2147483648
  %v843 = vxor.u32 %v826, 2147483648
  %v844 = vxor.u32 %v775, 2147483648
  %v845 = vxor.u32 %v777, 2147483648
  %v846 = vxor.u32 %v828, 2147483648
  %v847 = vxor.u32 %v830, 2147483648
  %v848 = vmul.f32 %v832, 1.442695
  %v849 = vpow.pop %v848
  %v850 = vmul.f32 %v833, 1.442695
  %v851 = vpow.pop %v850
  %v852 = vmul.f32 %v834, 1.442695
  %v853 = vpow.pop %v852
  %v854 = vmul.f32 %v835, 1.442695
  %v855 = vpow.pop %v854
  %v856 = vmul.f32 %v836, 1.442695
  %v857 = vpow.pop %v856
  %v858 = vmul.f32 %v837, 1.442695
  %v859 = vpow.pop %v858
  %v860 = vmul.f32 %v838, 1.442695
  %v861 = vpow.pop %v860
  %v862 = vmul.f32 %v839, 1.442695
  %v863 = vpow.pop %v862
  %v864 = vmul.f32 %v840, 1.442695
  %v865 = vpow.pop %v864
  %v866 = vmul.f32 %v841, 1.442695
  %v867 = vpow.pop %v866
  %v868 = vmul.f32 %v842, 1.442695
  %v869 = vpow.pop %v868
  %v870 = vmul.f32 %v843, 1.442695
  %v871 = vpow.pop %v870
  %v872 = vmul.f32 %v844, 1.442695
  %v873 = vpow.pop %v872
  %v874 = vmul.f32 %v845, 1.442695
  %v875 = vpow.pop %v874
  %v876 = vmul.f32 %v846, 1.442695
  %v877 = vpow.pop %v876
  %v878 = vmul.f32 %v847, 1.442695
  %v879 = vpow.pop %v878
  %v880 = vadd.f32 %v849, 1.0
  %v881 = vadd.f32 %v851, 1.0
  %v882 = vadd.f32 %v853, 1.0
  %v883 = vadd.f32 %v855, 1.0
  %v884 = vadd.f32 %v857, 1.0
  %v885 = vadd.f32 %v859, 1.0
  %v886 = vadd.f32 %v861, 1.0
  %v887 = vadd.f32 %v863, 1.0
  %v888 = vadd.f32 %v865, 1.0
  %v889 = vadd.f32 %v867, 1.0
  %v890 = vadd.f32 %v869, 1.0
  %v891 = vadd.f32 %v871, 1.0
  %v892 = vadd.f32 %v873, 1.0
  %v893 = vadd.f32 %v875, 1.0
  %v894 = vadd.f32 %v877, 1.0
  %v895 = vadd.f32 %v879, 1.0
  %v896 = vrcp.pop %v880
  %v897 = vmul.f32 1.0, %v896
  %v898 = vrcp.pop %v881
  %v899 = vmul.f32 1.0, %v898
  %v900 = vrcp.pop %v882
  %v901 = vmul.f32 1.0, %v900
  %v902 = vrcp.pop %v883
  %v903 = vmul.f32 1.0, %v902
  %v904 = vrcp.pop %v884
  %v905 = vmul.f32 1.0, %v904
  %v906 = vrcp.pop %v885
  %v907 = vmul.f32 1.0, %v906
  %v908 = vrcp.pop %v886
  %v909 = vmul.f32 1.0, %v908
  %v910 = vrcp.pop %v887
  %v911 = vmul.f32 1.0, %v910
  %v912 = vrcp.pop %v888
  %v913 = vmul.f32 1.0, %v912
  %v914 = vrcp.pop %v889
  %v915 = vmul.f32 1.0, %v914
  %v916 = vrcp.pop %v890
  %v917 = vmul.f32 1.0, %v916
  %v918 = vrcp.pop %v891
  %v919 = vmul.f32 1.0, %v918
  %v920 = vrcp.pop %v892
  %v921 = vmul.f32 1.0, %v920
  %v922 = vrcp.pop %v893
  %v923 = vmul.f32 1.0, %v922
  %v924 = vrcp.pop %v894
  %v925 = vmul.f32 1.0, %v924
  %v926 = vrcp.pop %v895
  %v927 = vmul.f32 1.0, %v926
  %v928 = vmul.f32 %v761, %v897
  %v929 = vmul.f32 %v763, %v899
  %v930 = vmul.f32 %v814, %v901
  %v931 = vmul.f32 %v816, %v903
  %v932 = vmul.f32 %v765, %v905
  %v933 = vmul.f32 %v767, %v907
  %v934 = vmul.f32 %v818, %v909
  %v935 = vmul.f32 %v820, %v911
  %v936 = vmul.f32 %v771, %v913
  %v937 = vmul.f32 %v773, %v915
  %v938 = vmul.f32 %v824, %v917
  %v939 = vmul.f32 %v826, %v919
  %v940 = vmul.f32 %v775, %v921
  %v941 = vmul.f32 %v777, %v923
  %v942 = vmul.f32 %v828, %v925
  %v943 = vmul.f32 %v830, %v927
  %v944 = vld [vmem:[%s7] sm:$0xf]
  %v945 = vld [vmem:[%s7 + $0x4] sm:$0xf]
  %v946 = vld [vmem:[%s7 + $0x8] sm:$0xf]
  %v947 = vld [vmem:[%s7 + $0xc] sm:$0xf]
  %v948 = vpack.c.bf16 %v932, %v928
  %v949 = vpack.c.bf16 %v933, %v929
  %v950 = vpack.c.bf16 %v934, %v930
  %v951 = vpack.c.bf16 %v935, %v931
  %v952 = vpack.c.bf16 %v940, %v936
  %v953 = vpack.c.bf16 %v941, %v937
  %v954 = vpack.c.bf16 %v942, %v938
  %v955 = vpack.c.bf16 %v943, %v939
  %v960 = vunpack.c.l.b16 %v944
  %v961 = vunpack.c.l.b16 %v945
  %v962 = vunpack.c.l.b16 %v946
  %v963 = vunpack.c.l.b16 %v947
  %v964 = vpack.c.b16 %v961, %v960
  %v965 = vpack.c.b16 %v963, %v962
  %vm966 = vcmask 261120
  %v968 = vsel %vm966, %v964, 0
  %v971 = vsel %vm966, %v965, 0
  %973 = vmatprep.subr.bf16.mxu0 %v949
  %974 = vmatpush1.bf16.msra.mxu0 %v948
  %975 = vmatprep.subr.bf16.mxu0 %v953
  %976 = vmatpush1.bf16.msra.mxu0 %v952
  %977 = vmatprep.subr.bf16.mxu0 0
  %978 = vmatpush1.bf16.msra.mxu0 0
  %979 = vmatprep.subr.bf16.mxu0 0
  %980 = vmatpush1.bf16.msra.mxu0 0
  %981 = vmatprep.subr.bf16.mxu0 0
  %982 = vmatpush1.bf16.msra.mxu0 0
  %983 = vmatprep.subr.bf16.mxu0 0
  %984 = vmatpush1.bf16.msra.mxu0 0
  %985 = vmatprep.subr.bf16.mxu0 0
  %986 = vmatpush1.bf16.msra.mxu0 0
  %987 = vmatprep.subr.bf16.mxu0 0
  %988 = vmatpush1.bf16.msra.mxu0 0
  %989 = vmatprep.subr.bf16.mxu0 0
  %990 = vmatpush1.bf16.msra.mxu0 0
  %991 = vmatprep.subr.bf16.mxu0 0
  %992 = vmatpush1.bf16.msra.mxu0 0
  %993 = vmatprep.subr.bf16.mxu0 0
  %994 = vmatpush1.bf16.msra.mxu0 0
  %995 = vmatprep.subr.bf16.mxu0 0
  %996 = vmatpush1.bf16.msra.mxu0 0
  %997 = vmatprep.subr.bf16.mxu0 0
  %998 = vmatpush1.bf16.msra.mxu0 0
  %999 = vmatprep.subr.bf16.mxu0 0
  %1000 = vmatpush1.bf16.msra.mxu0 0
  %1001 = vmatprep.subr.bf16.mxu0 0
  %1002 = vmatpush1.bf16.msra.mxu0 0
  %1003 = vmatprep.subr.bf16.mxu0 0
  %1004 = vmatpush1.bf16.msra.mxu0 0
  %1005 = vmatprep.mubr.bf16.mxu0 0
  %1006 = vmatmul.mubr.bf16.gmra.mrb[0].mxu0 %v968
  %v1007 = vpop.f32.mrb[0].mxu0
  %v1008 = vadd.f32 0.0, %v1007
  %v1009 = vpop.f32.mrb[0].mxu0
  %v1010 = vadd.f32 0.0, %v1009
  %v1011 = vpop.f32.mrb[0].mxu0
  %v1012 = vadd.f32 0.0, %v1011
  %v1013 = vpop.f32.mrb[0].mxu0
  %v1014 = vadd.f32 0.0, %v1013
  %1015 = vmatprep.mubr.bf16.mxu0 0
  %1016 = vmatmul.mubr.bf16.gmra.mrb[0].mxu0 %v971
  %v1017 = vpop.f32.mrb[0].mxu0
  %v1018 = vadd.f32 0.0, %v1017
  %v1019 = vpop.f32.mrb[0].mxu0
  %v1020 = vadd.f32 0.0, %v1019
  %v1021 = vpop.f32.mrb[0].mxu0
  %v1022 = vadd.f32 0.0, %v1021
  %v1023 = vpop.f32.mrb[0].mxu0
  %v1024 = vadd.f32 0.0, %v1023
  %1025 = vdwg.mxu0
  %1026 = vmatprep.subr.bf16.mxu0 %v951
  %1027 = vmatpush1.bf16.msra.mxu0 %v950
  %1028 = vmatprep.subr.bf16.mxu0 %v955
  %1029 = vmatpush1.bf16.msra.mxu0 %v954
  %1030 = vmatprep.subr.bf16.mxu0 0
  %1031 = vmatpush1.bf16.msra.mxu0 0
  %1032 = vmatprep.subr.bf16.mxu0 0
  %1033 = vmatpush1.bf16.msra.mxu0 0
  %1034 = vmatprep.subr.bf16.mxu0 0
  %1035 = vmatpush1.bf16.msra.mxu0 0
  %1036 = vmatprep.subr.bf16.mxu0 0
  %1037 = vmatpush1.bf16.msra.mxu0 0
  %1038 = vmatprep.subr.bf16.mxu0 0
  %1039 = vmatpush1.bf16.msra.mxu0 0
  %1040 = vmatprep.subr.bf16.mxu0 0
  %1041 = vmatpush1.bf16.msra.mxu0 0
  %1042 = vmatprep.subr.bf16.mxu0 0
  %1043 = vmatpush1.bf16.msra.mxu0 0
  %1044 = vmatprep.subr.bf16.mxu0 0
  %1045 = vmatpush1.bf16.msra.mxu0 0
  %1046 = vmatprep.subr.bf16.mxu0 0
  %1047 = vmatpush1.bf16.msra.mxu0 0
  %1048 = vmatprep.subr.bf16.mxu0 0
  %1049 = vmatpush1.bf16.msra.mxu0 0
  %1050 = vmatprep.subr.bf16.mxu0 0
  %1051 = vmatpush1.bf16.msra.mxu0 0
  %1052 = vmatprep.subr.bf16.mxu0 0
  %1053 = vmatpush1.bf16.msra.mxu0 0
  %1054 = vmatprep.subr.bf16.mxu0 0
  %1055 = vmatpush1.bf16.msra.mxu0 0
  %1056 = vmatprep.subr.bf16.mxu0 0
  %1057 = vmatpush1.bf16.msra.mxu0 0
  %1058 = vmatprep.mubr.bf16.mxu0 0
  %1059 = vmatmul.mubr.bf16.gmra.mrb[0].mxu0 %v968
  %v1060 = vpop.f32.mrb[0].mxu0
  %v1061 = vadd.f32 0.0, %v1060
  %v1062 = vpop.f32.mrb[0].mxu0
  %v1063 = vadd.f32 0.0, %v1062
  %v1064 = vpop.f32.mrb[0].mxu0
  %v1065 = vadd.f32 0.0, %v1064
  %v1066 = vpop.f32.mrb[0].mxu0
  %v1067 = vadd.f32 0.0, %v1066
  %1068 = vmatprep.mubr.bf16.mxu0 0
  %1069 = vmatmul.mubr.bf16.gmra.mrb[0].mxu0 %v971
  %v1070 = vpop.f32.mrb[0].mxu0
  %v1071 = vadd.f32 0.0, %v1070
  %v1072 = vpop.f32.mrb[0].mxu0
  %v1073 = vadd.f32 0.0, %v1072
  %v1074 = vpop.f32.mrb[0].mxu0
  %v1075 = vadd.f32 0.0, %v1074
  %v1076 = vpop.f32.mrb[0].mxu0
  %v1077 = vadd.f32 0.0, %v1076
  %1078 = vdwg.mxu0
  %s1079 = smul.u32 0, 512
  %v1080 = vlaneseq
  %v1081 = vand.u32 %v1080, 127
  %v1082 = vadd.s32 %v1081, 128
  %v1083 = vadd.s32 %v1081, 256
  %v1084 = vadd.s32 %v1081, 384
  %v1085 = vstv %s1079
  %v1086 = vadd.s32 %v1085, %v1081
  %v1087 = vadd.s32 %v1085, %v1082
  %v1088 = vadd.s32 %v1085, %v1083
  %v1089 = vadd.s32 %v1085, %v1084
  %vm1090 = vcmp.lt.s32.totalorder %v1086, 32
  %vm1091 = vcmp.lt.s32.totalorder %v1087, 32
  %vm1092 = vcmp.lt.s32.totalorder %v1088, 32
  %vm1093 = vcmp.lt.s32.totalorder %v1089, 32
  %v1094 = vsel %vm1090, 1, 0
  %v1095 = vsel %vm1091, 1, 0
  %v1096 = vsel %vm1092, 1, 0
  %v1097 = vsel %vm1093, 1, 0
  %v1098 = vcvt.s32.f32 %v1094
  %v1099 = vcvt.s32.f32 %v1095
  %v1100 = vcvt.s32.f32 %v1096
  %v1101 = vcvt.s32.f32 %v1097
  %v1102 = vmul.f32 %v1008, %v631
  %v1103 = vmul.f32 %v1010, %v633
  %v1104 = vmul.f32 %v1061, %v684
  %v1105 = vmul.f32 %v1063, %v686
  %v1106 = vmul.f32 %v1012, %v635
  %v1107 = vmul.f32 %v1014, %v637
  %v1108 = vmul.f32 %v1065, %v688
  %v1109 = vmul.f32 %v1067, %v690
  %v1110 = vmul.f32 %v1018, %v641
  %v1111 = vmul.f32 %v1020, %v643
  %v1112 = vmul.f32 %v1071, %v694
  %v1113 = vmul.f32 %v1073, %v696
  %v1114 = vmul.f32 %v1022, %v645
  %v1115 = vmul.f32 %v1024, %v647
  %v1116 = vmul.f32 %v1075, %v698
  %v1117 = vmul.f32 %v1077, %v700
  %v1118 = vmul.f32 %v1102, %v1098
  %v1119 = vmul.f32 %v1103, %v1099
  %v1120 = vmul.f32 %v1104, %v1100
  %v1121 = vmul.f32 %v1105, %v1101
  %v1122 = vmul.f32 %v1106, %v1098
  %v1123 = vmul.f32 %v1107, %v1099
  %v1124 = vmul.f32 %v1108, %v1100
  %v1125 = vmul.f32 %v1109, %v1101
  %v1126 = vmul.f32 %v1110, %v1098
  %v1127 = vmul.f32 %v1111, %v1099
  %v1128 = vmul.f32 %v1112, %v1100
  %v1129 = vmul.f32 %v1113, %v1101
  %v1130 = vmul.f32 %v1114, %v1098
  %v1131 = vmul.f32 %v1115, %v1099
  %v1132 = vmul.f32 %v1116, %v1100
  %v1133 = vmul.f32 %v1117, %v1101
  %v1134 = vld [vmem:[%s10] sm:$0xf]
  %v1135 = vld [vmem:[%s10 + $0x4] sm:$0xf]
  %v1136 = vld [vmem:[%s10 + $0x8] sm:$0xf]
  %v1137 = vld [vmem:[%s10 + $0xc] sm:$0xf]
  %v1138 = vld [vmem:[%s10 + $0x10] sm:$0xf]
  %v1139 = vld [vmem:[%s10 + $0x14] sm:$0xf]
  %v1140 = vld [vmem:[%s10 + $0x18] sm:$0xf]
  %v1141 = vld [vmem:[%s10 + $0x1c] sm:$0xf]
  %v1142 = vld [vmem:[%s10 + $0x20] sm:$0xf]
  %v1143 = vld [vmem:[%s10 + $0x24] sm:$0xf]
  %v1144 = vld [vmem:[%s10 + $0x28] sm:$0xf]
  %v1145 = vld [vmem:[%s10 + $0x2c] sm:$0xf]
  %v1146 = vld [vmem:[%s10 + $0x30] sm:$0xf]
  %v1147 = vld [vmem:[%s10 + $0x34] sm:$0xf]
  %v1148 = vld [vmem:[%s10 + $0x38] sm:$0xf]
  %v1149 = vld [vmem:[%s10 + $0x3c] sm:$0xf]
  %v1150 = vld [vmem:[%s10 + $0x40] sm:$0xf]
  %v1151 = vld [vmem:[%s10 + $0x44] sm:$0xf]
  %v1152 = vld [vmem:[%s10 + $0x48] sm:$0xf]
  %v1153 = vld [vmem:[%s10 + $0x4c] sm:$0xf]
  %v1154 = vld [vmem:[%s10 + $0x50] sm:$0xf]
  %v1155 = vld [vmem:[%s10 + $0x54] sm:$0xf]
  %v1156 = vld [vmem:[%s10 + $0x58] sm:$0xf]
  %v1157 = vld [vmem:[%s10 + $0x5c] sm:$0xf]
  %v1158 = vld [vmem:[%s10 + $0x60] sm:$0xf]
  %v1159 = vld [vmem:[%s10 + $0x64] sm:$0xf]
  %v1160 = vld [vmem:[%s10 + $0x68] sm:$0xf]
  %v1161 = vld [vmem:[%s10 + $0x6c] sm:$0xf]
  %v1162 = vld [vmem:[%s10 + $0x70] sm:$0xf]
  %v1163 = vld [vmem:[%s10 + $0x74] sm:$0xf]
  %v1164 = vld [vmem:[%s10 + $0x78] sm:$0xf]
  %v1165 = vld [vmem:[%s10 + $0x7c] sm:$0xf]
  %v1166 = vld [vmem:[%s10 + $0x80] sm:$0xf]
  %v1167 = vld [vmem:[%s10 + $0x84] sm:$0xf]
  %v1168 = vld [vmem:[%s10 + $0x88] sm:$0xf]
  %v1169 = vld [vmem:[%s10 + $0x8c] sm:$0xf]
  %v1170 = vpack.c.bf16 %v485, %v533
  %v1171 = vpack.c.bf16 %v489, %v534
  %v1172 = vpack.c.bf16 %v493, %v535
  %v1173 = vpack.c.bf16 %v497, %v536
  %v1210 = vunpack.c.l.b16 %v1134
  %v1211 = vunpack.c.l.b16 %v1135
  %v1212 = vunpack.c.l.b16 %v1136
  %v1213 = vunpack.c.l.b16 %v1137
  %v1214 = vunpack.c.l.b16 %v1138
  %v1215 = vunpack.c.l.b16 %v1139
  %v1216 = vunpack.c.l.b16 %v1140
  %v1217 = vunpack.c.l.b16 %v1141
  %v1218 = vunpack.c.l.b16 %v1142
  %v1219 = vunpack.c.l.b16 %v1143
  %v1220 = vunpack.c.l.b16 %v1144
  %v1221 = vunpack.c.l.b16 %v1145
  %v1222 = vunpack.c.l.b16 %v1146
  %v1223 = vunpack.c.l.b16 %v1147
  %v1224 = vunpack.c.l.b16 %v1148
  %v1225 = vunpack.c.l.b16 %v1149
  %v1226 = vunpack.c.l.b16 %v1150
  %v1227 = vunpack.c.l.b16 %v1151
  %v1228 = vunpack.c.l.b16 %v1152
  %v1229 = vunpack.c.l.b16 %v1153
  %v1230 = vunpack.c.l.b16 %v1154
  %v1231 = vunpack.c.l.b16 %v1155
  %v1232 = vunpack.c.l.b16 %v1156
  %v1233 = vunpack.c.l.b16 %v1157
  %v1234 = vunpack.c.l.b16 %v1158
  %v1235 = vunpack.c.l.b16 %v1159
  %v1236 = vunpack.c.l.b16 %v1160
  %v1237 = vunpack.c.l.b16 %v1161
  %v1238 = vunpack.c.l.b16 %v1162
  %v1239 = vunpack.c.l.b16 %v1163
  %v1240 = vunpack.c.l.b16 %v1164
  %v1241 = vunpack.c.l.b16 %v1165
  %v1242 = vunpack.c.l.b16 %v1166
  %v1243 = vunpack.c.l.b16 %v1167
  %v1244 = vunpack.c.l.b16 %v1168
  %v1245 = vunpack.c.l.b16 %v1169
  %v1246 = vpack.c.b16 %v1211, %v1210
  %v1247 = vpack.c.b16 %v1213, %v1212
  %v1248 = vpack.c.b16 %v1215, %v1214
  %v1249 = vpack.c.b16 %v1217, %v1216
  %v1250 = vpack.c.b16 %v1219, %v1218
  %v1251 = vpack.c.b16 %v1221, %v1220
  %v1252 = vpack.c.b16 %v1223, %v1222
  %v1253 = vpack.c.b16 %v1225, %v1224
  %v1254 = vpack.c.b16 %v1227, %v1226
  %v1255 = vpack.c.b16 %v1229, %v1228
  %v1256 = vpack.c.b16 %v1231, %v1230
  %v1257 = vpack.c.b16 %v1233, %v1232
  %v1258 = vpack.c.b16 %v1235, %v1234
  %v1259 = vpack.c.b16 %v1237, %v1236
  %v1260 = vpack.c.b16 %v1239, %v1238
  %v1261 = vpack.c.b16 %v1241, %v1240
  %v1262 = vpack.c.b16 %v1243, %v1242
  %v1263 = vpack.c.b16 %v1245, %v1244
  %vm1264 = vcmask 72704
  %v1266 = vsel %vm1264, %v1246, 0
  %v1269 = vsel %vm1264, %v1247, 0
  %v1272 = vsel %vm1264, %v1248, 0
  %v1275 = vsel %vm1264, %v1249, 0
  %v1278 = vsel %vm1264, %v1250, 0
  %v1281 = vsel %vm1264, %v1251, 0
  %v1284 = vsel %vm1264, %v1252, 0
  %v1287 = vsel %vm1264, %v1253, 0
  %v1290 = vsel %vm1264, %v1254, 0
  %v1293 = vsel %vm1264, %v1255, 0
  %v1296 = vsel %vm1264, %v1256, 0
  %v1299 = vsel %vm1264, %v1257, 0
  %v1302 = vsel %vm1264, %v1258, 0
  %v1305 = vsel %vm1264, %v1259, 0
  %v1308 = vsel %vm1264, %v1260, 0
  %v1311 = vsel %vm1264, %v1261, 0
  %v1314 = vsel %vm1264, %v1262, 0
  %v1317 = vsel %vm1264, %v1263, 0
  %v1319 = vsel %vm517, 4294967295, 65535
  %v1320 = vsel %vm522, %v1319, 0
  %v1322 = vand.u32 %v1170, %v1320
  %v1325 = vand.u32 %v1171, %v1320
  %v1328 = vand.u32 %v1172, %v1320
  %v1331 = vand.u32 %v1173, %v1320
  %1333 = vmatprep.subr.bf16.mxu0 %v1325
  %1334 = vmatpush1.bf16.msra.mxu0 %v1322
  %1335 = vmatprep.subr.bf16.mxu0 0
  %1336 = vmatpush1.bf16.msra.mxu0 0
  %1337 = vmatprep.subr.bf16.mxu0 0
  %1338 = vmatpush1.bf16.msra.mxu0 0
  %1339 = vmatprep.subr.bf16.mxu0 0
  %1340 = vmatpush1.bf16.msra.mxu0 0
  %1341 = vmatprep.subr.bf16.mxu0 0
  %1342 = vmatpush1.bf16.msra.mxu0 0
  %1343 = vmatprep.subr.bf16.mxu0 0
  %1344 = vmatpush1.bf16.msra.mxu0 0
  %1345 = vmatprep.subr.bf16.mxu0 0
  %1346 = vmatpush1.bf16.msra.mxu0 0
  %1347 = vmatprep.subr.bf16.mxu0 0
  %1348 = vmatpush1.bf16.msra.mxu0 0
  %1349 = vmatprep.subr.bf16.mxu0 0
  %1350 = vmatpush1.bf16.msra.mxu0 0
  %1351 = vmatprep.subr.bf16.mxu0 0
  %1352 = vmatpush1.bf16.msra.mxu0 0
  %1353 = vmatprep.subr.bf16.mxu0 0
  %1354 = vmatpush1.bf16.msra.mxu0 0
  %1355 = vmatprep.subr.bf16.mxu0 0
  %1356 = vmatpush1.bf16.msra.mxu0 0
  %1357 = vmatprep.subr.bf16.mxu0 0
  %1358 = vmatpush1.bf16.msra.mxu0 0
  %1359 = vmatprep.subr.bf16.mxu0 0
  %1360 = vmatpush1.bf16.msra.mxu0 0
  %1361 = vmatprep.subr.bf16.mxu0 0
  %1362 = vmatpush1.bf16.msra.mxu0 0
  %1363 = vmatprep.subr.bf16.mxu0 0
  %1364 = vmatpush1.bf16.msra.mxu0 0
  %1365 = vmatprep.mubr.bf16.mxu0 0
  %1366 = vmatmul.mubr.bf16.gmra.mrb[0].mxu0 %v1266
  %v1367 = vpop.f32.mrb[0].mxu0
  %v1368 = vadd.f32 0.0, %v1367
  %v1369 = vpop.f32.mrb[0].mxu0
  %v1370 = vadd.f32 0.0, %v1369
  %v1371 = vpop.f32.mrb[0].mxu0
  %v1372 = vadd.f32 0.0, %v1371
  %v1373 = vpop.f32.mrb[0].mxu0
  %v1374 = vadd.f32 0.0, %v1373
  %1375 = vmatprep.mubr.bf16.mxu0 0
  %1376 = vmatmul.mubr.bf16.gmra.mrb[0].mxu0 %v1269
  %v1377 = vpop.f32.mrb[0].mxu0
  %v1378 = vadd.f32 0.0, %v1377
  %v1379 = vpop.f32.mrb[0].mxu0
  %v1380 = vadd.f32 0.0, %v1379
  %v1381 = vpop.f32.mrb[0].mxu0
  %v1382 = vadd.f32 0.0, %v1381
  %v1383 = vpop.f32.mrb[0].mxu0
  %v1384 = vadd.f32 0.0, %v1383
  %1385 = vmatprep.mubr.bf16.mxu0 0
  %1386 = vmatmul.mubr.bf16.gmra.mrb[0].mxu0 %v1272
  %v1387 = vpop.f32.mrb[0].mxu0
  %v1388 = vadd.f32 0.0, %v1387
  %v1389 = vpop.f32.mrb[0].mxu0
  %v1390 = vadd.f32 0.0, %v1389
  %v1391 = vpop.f32.mrb[0].mxu0
  %v1392 = vadd.f32 0.0, %v1391
  %v1393 = vpop.f32.mrb[0].mxu0
  %v1394 = vadd.f32 0.0, %v1393
  %1395 = vmatprep.mubr.bf16.mxu0 0
  %1396 = vmatmul.mubr.bf16.gmra.mrb[0].mxu0 %v1275
  %v1397 = vpop.f32.mrb[0].mxu0
  %v1398 = vadd.f32 0.0, %v1397
  %v1399 = vpop.f32.mrb[0].mxu0
  %v1400 = vadd.f32 0.0, %v1399
  %v1401 = vpop.f32.mrb[0].mxu0
  %v1402 = vadd.f32 0.0, %v1401
  %v1403 = vpop.f32.mrb[0].mxu0
  %v1404 = vadd.f32 0.0, %v1403
  %1405 = vmatprep.mubr.bf16.mxu0 0
  %1406 = vmatmul.mubr.bf16.gmra.mrb[0].mxu0 %v1278
  %v1407 = vpop.f32.mrb[0].mxu0
  %v1408 = vadd.f32 0.0, %v1407
  %v1409 = vpop.f32.mrb[0].mxu0
  %v1410 = vadd.f32 0.0, %v1409
  %v1411 = vpop.f32.mrb[0].mxu0
  %v1412 = vadd.f32 0.0, %v1411
  %v1413 = vpop.f32.mrb[0].mxu0
  %v1414 = vadd.f32 0.0, %v1413
  %1415 = vmatprep.mubr.bf16.mxu0 0
  %1416 = vmatmul.mubr.bf16.gmra.mrb[0].mxu0 %v1281
  %v1417 = vpop.f32.mrb[0].mxu0
  %v1418 = vadd.f32 0.0, %v1417
  %v1419 = vpop.f32.mrb[0].mxu0
  %v1420 = vadd.f32 0.0, %v1419
  %v1421 = vpop.f32.mrb[0].mxu0
  %v1422 = vadd.f32 0.0, %v1421
  %v1423 = vpop.f32.mrb[0].mxu0
  %v1424 = vadd.f32 0.0, %v1423
  %1425 = vmatprep.mubr.bf16.mxu0 0
  %1426 = vmatmul.mubr.bf16.gmra.mrb[0].mxu0 %v1284
  %v1427 = vpop.f32.mrb[0].mxu0
  %v1428 = vadd.f32 0.0, %v1427
  %v1429 = vpop.f32.mrb[0].mxu0
  %v1430 = vadd.f32 0.0, %v1429
  %v1431 = vpop.f32.mrb[0].mxu0
  %v1432 = vadd.f32 0.0, %v1431
  %v1433 = vpop.f32.mrb[0].mxu0
  %v1434 = vadd.f32 0.0, %v1433
  %1435 = vmatprep.mubr.bf16.mxu0 0
  %1436 = vmatmul.mubr.bf16.gmra.mrb[0].mxu0 %v1287
  %v1437 = vpop.f32.mrb[0].mxu0
  %v1438 = vadd.f32 0.0, %v1437
  %v1439 = vpop.f32.mrb[0].mxu0
  %v1440 = vadd.f32 0.0, %v1439
  %v1441 = vpop.f32.mrb[0].mxu0
  %v1442 = vadd.f32 0.0, %v1441
  %v1443 = vpop.f32.mrb[0].mxu0
  %v1444 = vadd.f32 0.0, %v1443
  %1445 = vmatprep.mubr.bf16.mxu0 0
  %1446 = vmatmul.mubr.bf16.gmra.mrb[0].mxu0 %v1290
  %v1447 = vpop.f32.mrb[0].mxu0
  %v1448 = vadd.f32 0.0, %v1447
  %v1449 = vpop.f32.mrb[0].mxu0
  %v1450 = vadd.f32 0.0, %v1449
  %v1451 = vpop.f32.mrb[0].mxu0
  %v1452 = vadd.f32 0.0, %v1451
  %v1453 = vpop.f32.mrb[0].mxu0
  %v1454 = vadd.f32 0.0, %v1453
  %1455 = vmatprep.mubr.bf16.mxu0 0
  %1456 = vmatmul.mubr.bf16.gmra.mrb[0].mxu0 %v1293
  %v1457 = vpop.f32.mrb[0].mxu0
  %v1458 = vadd.f32 0.0, %v1457
  %v1459 = vpop.f32.mrb[0].mxu0
  %v1460 = vadd.f32 0.0, %v1459
  %v1461 = vpop.f32.mrb[0].mxu0
  %v1462 = vadd.f32 0.0, %v1461
  %v1463 = vpop.f32.mrb[0].mxu0
  %v1464 = vadd.f32 0.0, %v1463
  %1465 = vmatprep.mubr.bf16.mxu0 0
  %1466 = vmatmul.mubr.bf16.gmra.mrb[0].mxu0 %v1296
  %v1467 = vpop.f32.mrb[0].mxu0
  %v1468 = vadd.f32 0.0, %v1467
  %v1469 = vpop.f32.mrb[0].mxu0
  %v1470 = vadd.f32 0.0, %v1469
  %v1471 = vpop.f32.mrb[0].mxu0
  %v1472 = vadd.f32 0.0, %v1471
  %v1473 = vpop.f32.mrb[0].mxu0
  %v1474 = vadd.f32 0.0, %v1473
  %1475 = vmatprep.mubr.bf16.mxu0 0
  %1476 = vmatmul.mubr.bf16.gmra.mrb[0].mxu0 %v1299
  %v1477 = vpop.f32.mrb[0].mxu0
  %v1478 = vadd.f32 0.0, %v1477
  %v1479 = vpop.f32.mrb[0].mxu0
  %v1480 = vadd.f32 0.0, %v1479
  %v1481 = vpop.f32.mrb[0].mxu0
  %v1482 = vadd.f32 0.0, %v1481
  %v1483 = vpop.f32.mrb[0].mxu0
  %v1484 = vadd.f32 0.0, %v1483
  %1485 = vmatprep.mubr.bf16.mxu0 0
  %1486 = vmatmul.mubr.bf16.gmra.mrb[0].mxu0 %v1302
  %v1487 = vpop.f32.mrb[0].mxu0
  %v1488 = vadd.f32 0.0, %v1487
  %v1489 = vpop.f32.mrb[0].mxu0
  %v1490 = vadd.f32 0.0, %v1489
  %v1491 = vpop.f32.mrb[0].mxu0
  %v1492 = vadd.f32 0.0, %v1491
  %v1493 = vpop.f32.mrb[0].mxu0
  %v1494 = vadd.f32 0.0, %v1493
  %1495 = vmatprep.mubr.bf16.mxu0 0
  %1496 = vmatmul.mubr.bf16.gmra.mrb[0].mxu0 %v1305
  %v1497 = vpop.f32.mrb[0].mxu0
  %v1498 = vadd.f32 0.0, %v1497
  %v1499 = vpop.f32.mrb[0].mxu0
  %v1500 = vadd.f32 0.0, %v1499
  %v1501 = vpop.f32.mrb[0].mxu0
  %v1502 = vadd.f32 0.0, %v1501
  %v1503 = vpop.f32.mrb[0].mxu0
  %v1504 = vadd.f32 0.0, %v1503
  %1505 = vmatprep.mubr.bf16.mxu0 0
  %1506 = vmatmul.mubr.bf16.gmra.mrb[0].mxu0 %v1308
  %v1507 = vpop.f32.mrb[0].mxu0
  %v1508 = vadd.f32 0.0, %v1507
  %v1509 = vpop.f32.mrb[0].mxu0
  %v1510 = vadd.f32 0.0, %v1509
  %v1511 = vpop.f32.mrb[0].mxu0
  %v1512 = vadd.f32 0.0, %v1511
  %v1513 = vpop.f32.mrb[0].mxu0
  %v1514 = vadd.f32 0.0, %v1513
  %1515 = vmatprep.mubr.bf16.mxu0 0
  %1516 = vmatmul.mubr.bf16.gmra.mrb[0].mxu0 %v1311
  %v1517 = vpop.f32.mrb[0].mxu0
  %v1518 = vadd.f32 0.0, %v1517
  %v1519 = vpop.f32.mrb[0].mxu0
  %v1520 = vadd.f32 0.0, %v1519
  %v1521 = vpop.f32.mrb[0].mxu0
  %v1522 = vadd.f32 0.0, %v1521
  %v1523 = vpop.f32.mrb[0].mxu0
  %v1524 = vadd.f32 0.0, %v1523
  %1525 = vmatprep.mubr.bf16.mxu0 0
  %1526 = vmatmul.mubr.bf16.gmra.mrb[0].mxu0 %v1314
  %v1527 = vpop.f32.mrb[0].mxu0
  %v1528 = vadd.f32 0.0, %v1527
  %v1529 = vpop.f32.mrb[0].mxu0
  %v1530 = vadd.f32 0.0, %v1529
  %v1531 = vpop.f32.mrb[0].mxu0
  %v1532 = vadd.f32 0.0, %v1531
  %v1533 = vpop.f32.mrb[0].mxu0
  %v1534 = vadd.f32 0.0, %v1533
  %1535 = vmatprep.mubr.bf16.mxu0 0
  %1536 = vmatmul.mubr.bf16.gmra.mrb[0].mxu0 %v1317
  %v1537 = vpop.f32.mrb[0].mxu0
  %v1538 = vadd.f32 0.0, %v1537
  %v1539 = vpop.f32.mrb[0].mxu0
  %v1540 = vadd.f32 0.0, %v1539
  %v1541 = vpop.f32.mrb[0].mxu0
  %v1542 = vadd.f32 0.0, %v1541
  %v1543 = vpop.f32.mrb[0].mxu0
  %v1544 = vadd.f32 0.0, %v1543
  %1545 = vdwg.mxu0
  %1546 = vmatprep.subr.bf16.mxu0 %v1331
  %1547 = vmatpush1.bf16.msra.mxu0 %v1328
  %1548 = vmatprep.subr.bf16.mxu0 0
  %1549 = vmatpush1.bf16.msra.mxu0 0
  %1550 = vmatprep.subr.bf16.mxu0 0
  %1551 = vmatpush1.bf16.msra.mxu0 0
  %1552 = vmatprep.subr.bf16.mxu0 0
  %1553 = vmatpush1.bf16.msra.mxu0 0
  %1554 = vmatprep.subr.bf16.mxu0 0
  %1555 = vmatpush1.bf16.msra.mxu0 0
  %1556 = vmatprep.subr.bf16.mxu0 0
  %1557 = vmatpush1.bf16.msra.mxu0 0
  %1558 = vmatprep.subr.bf16.mxu0 0
  %1559 = vmatpush1.bf16.msra.mxu0 0
  %1560 = vmatprep.subr.bf16.mxu0 0
  %1561 = vmatpush1.bf16.msra.mxu0 0
  %1562 = vmatprep.subr.bf16.mxu0 0
  %1563 = vmatpush1.bf16.msra.mxu0 0
  %1564 = vmatprep.subr.bf16.mxu0 0
  %1565 = vmatpush1.bf16.msra.mxu0 0
  %1566 = vmatprep.subr.bf16.mxu0 0
  %1567 = vmatpush1.bf16.msra.mxu0 0
  %1568 = vmatprep.subr.bf16.mxu0 0
  %1569 = vmatpush1.bf16.msra.mxu0 0
  %1570 = vmatprep.subr.bf16.mxu0 0
  %1571 = vmatpush1.bf16.msra.mxu0 0
  %1572 = vmatprep.subr.bf16.mxu0 0
  %1573 = vmatpush1.bf16.msra.mxu0 0
  %1574 = vmatprep.subr.bf16.mxu0 0
  %1575 = vmatpush1.bf16.msra.mxu0 0
  %1576 = vmatprep.subr.bf16.mxu0 0
  %1577 = vmatpush1.bf16.msra.mxu0 0
  %1578 = vmatprep.mubr.bf16.mxu0 0
  %1579 = vmatmul.mubr.bf16.gmra.mrb[0].mxu0 %v1266
  %v1580 = vpop.f32.mrb[0].mxu0
  %v1581 = vadd.f32 0.0, %v1580
  %v1582 = vpop.f32.mrb[0].mxu0
  %v1583 = vadd.f32 0.0, %v1582
  %v1584 = vpop.f32.mrb[0].mxu0
  %v1585 = vadd.f32 0.0, %v1584
  %v1586 = vpop.f32.mrb[0].mxu0
  %v1587 = vadd.f32 0.0, %v1586
  %1588 = vmatprep.mubr.bf16.mxu0 0
  %1589 = vmatmul.mubr.bf16.gmra.mrb[0].mxu0 %v1269
  %v1590 = vpop.f32.mrb[0].mxu0
  %v1591 = vadd.f32 0.0, %v1590
  %v1592 = vpop.f32.mrb[0].mxu0
  %v1593 = vadd.f32 0.0, %v1592
  %v1594 = vpop.f32.mrb[0].mxu0
  %v1595 = vadd.f32 0.0, %v1594
  %v1596 = vpop.f32.mrb[0].mxu0
  %v1597 = vadd.f32 0.0, %v1596
  %1598 = vmatprep.mubr.bf16.mxu0 0
  %1599 = vmatmul.mubr.bf16.gmra.mrb[0].mxu0 %v1272
  %v1600 = vpop.f32.mrb[0].mxu0
  %v1601 = vadd.f32 0.0, %v1600
  %v1602 = vpop.f32.mrb[0].mxu0
  %v1603 = vadd.f32 0.0, %v1602
  %v1604 = vpop.f32.mrb[0].mxu0
  %v1605 = vadd.f32 0.0, %v1604
  %v1606 = vpop.f32.mrb[0].mxu0
  %v1607 = vadd.f32 0.0, %v1606
  %1608 = vmatprep.mubr.bf16.mxu0 0
  %1609 = vmatmul.mubr.bf16.gmra.mrb[0].mxu0 %v1275
  %v1610 = vpop.f32.mrb[0].mxu0
  %v1611 = vadd.f32 0.0, %v1610
  %v1612 = vpop.f32.mrb[0].mxu0
  %v1613 = vadd.f32 0.0, %v1612
  %v1614 = vpop.f32.mrb[0].mxu0
  %v1615 = vadd.f32 0.0, %v1614
  %v1616 = vpop.f32.mrb[0].mxu0
  %v1617 = vadd.f32 0.0, %v1616
  %1618 = vmatprep.mubr.bf16.mxu0 0
  %1619 = vmatmul.mubr.bf16.gmra.mrb[0].mxu0 %v1278
  %v1620 = vpop.f32.mrb[0].mxu0
  %v1621 = vadd.f32 0.0, %v1620
  %v1622 = vpop.f32.mrb[0].mxu0
  %v1623 = vadd.f32 0.0, %v1622
  %v1624 = vpop.f32.mrb[0].mxu0
  %v1625 = vadd.f32 0.0, %v1624
  %v1626 = vpop.f32.mrb[0].mxu0
  %v1627 = vadd.f32 0.0, %v1626
  %1628 = vmatprep.mubr.bf16.mxu0 0
  %1629 = vmatmul.mubr.bf16.gmra.mrb[0].mxu0 %v1281
  %v1630 = vpop.f32.mrb[0].mxu0
  %v1631 = vadd.f32 0.0, %v1630
  %v1632 = vpop.f32.mrb[0].mxu0
  %v1633 = vadd.f32 0.0, %v1632
  %v1634 = vpop.f32.mrb[0].mxu0
  %v1635 = vadd.f32 0.0, %v1634
  %v1636 = vpop.f32.mrb[0].mxu0
  %v1637 = vadd.f32 0.0, %v1636
  %1638 = vmatprep.mubr.bf16.mxu0 0
  %1639 = vmatmul.mubr.bf16.gmra.mrb[0].mxu0 %v1284
  %v1640 = vpop.f32.mrb[0].mxu0
  %v1641 = vadd.f32 0.0, %v1640
  %v1642 = vpop.f32.mrb[0].mxu0
  %v1643 = vadd.f32 0.0, %v1642
  %v1644 = vpop.f32.mrb[0].mxu0
  %v1645 = vadd.f32 0.0, %v1644
  %v1646 = vpop.f32.mrb[0].mxu0
  %v1647 = vadd.f32 0.0, %v1646
  %1648 = vmatprep.mubr.bf16.mxu0 0
  %1649 = vmatmul.mubr.bf16.gmra.mrb[0].mxu0 %v1287
  %v1650 = vpop.f32.mrb[0].mxu0
  %v1651 = vadd.f32 0.0, %v1650
  %v1652 = vpop.f32.mrb[0].mxu0
  %v1653 = vadd.f32 0.0, %v1652
  %v1654 = vpop.f32.mrb[0].mxu0
  %v1655 = vadd.f32 0.0, %v1654
  %v1656 = vpop.f32.mrb[0].mxu0
  %v1657 = vadd.f32 0.0, %v1656
  %1658 = vmatprep.mubr.bf16.mxu0 0
  %1659 = vmatmul.mubr.bf16.gmra.mrb[0].mxu0 %v1290
  %v1660 = vpop.f32.mrb[0].mxu0
  %v1661 = vadd.f32 0.0, %v1660
  %v1662 = vpop.f32.mrb[0].mxu0
  %v1663 = vadd.f32 0.0, %v1662
  %v1664 = vpop.f32.mrb[0].mxu0
  %v1665 = vadd.f32 0.0, %v1664
  %v1666 = vpop.f32.mrb[0].mxu0
  %v1667 = vadd.f32 0.0, %v1666
  %1668 = vmatprep.mubr.bf16.mxu0 0
  %1669 = vmatmul.mubr.bf16.gmra.mrb[0].mxu0 %v1293
  %v1670 = vpop.f32.mrb[0].mxu0
  %v1671 = vadd.f32 0.0, %v1670
  %v1672 = vpop.f32.mrb[0].mxu0
  %v1673 = vadd.f32 0.0, %v1672
  %v1674 = vpop.f32.mrb[0].mxu0
  %v1675 = vadd.f32 0.0, %v1674
  %v1676 = vpop.f32.mrb[0].mxu0
  %v1677 = vadd.f32 0.0, %v1676
  %1678 = vmatprep.mubr.bf16.mxu0 0
  %1679 = vmatmul.mubr.bf16.gmra.mrb[0].mxu0 %v1296
  %v1680 = vpop.f32.mrb[0].mxu0
  %v1681 = vadd.f32 0.0, %v1680
  %v1682 = vpop.f32.mrb[0].mxu0
  %v1683 = vadd.f32 0.0, %v1682
  %v1684 = vpop.f32.mrb[0].mxu0
  %v1685 = vadd.f32 0.0, %v1684
  %v1686 = vpop.f32.mrb[0].mxu0
  %v1687 = vadd.f32 0.0, %v1686
  %1688 = vmatprep.mubr.bf16.mxu0 0
  %1689 = vmatmul.mubr.bf16.gmra.mrb[0].mxu0 %v1299
  %v1690 = vpop.f32.mrb[0].mxu0
  %v1691 = vadd.f32 0.0, %v1690
  %v1692 = vpop.f32.mrb[0].mxu0
  %v1693 = vadd.f32 0.0, %v1692
  %v1694 = vpop.f32.mrb[0].mxu0
  %v1695 = vadd.f32 0.0, %v1694
  %v1696 = vpop.f32.mrb[0].mxu0
  %v1697 = vadd.f32 0.0, %v1696
  %1698 = vmatprep.mubr.bf16.mxu0 0
  %1699 = vmatmul.mubr.bf16.gmra.mrb[0].mxu0 %v1302
  %v1700 = vpop.f32.mrb[0].mxu0
  %v1701 = vadd.f32 0.0, %v1700
  %v1702 = vpop.f32.mrb[0].mxu0
  %v1703 = vadd.f32 0.0, %v1702
  %v1704 = vpop.f32.mrb[0].mxu0
  %v1705 = vadd.f32 0.0, %v1704
  %v1706 = vpop.f32.mrb[0].mxu0
  %v1707 = vadd.f32 0.0, %v1706
  %1708 = vmatprep.mubr.bf16.mxu0 0
  %1709 = vmatmul.mubr.bf16.gmra.mrb[0].mxu0 %v1305
  %v1710 = vpop.f32.mrb[0].mxu0
  %v1711 = vadd.f32 0.0, %v1710
  %v1712 = vpop.f32.mrb[0].mxu0
  %v1713 = vadd.f32 0.0, %v1712
  %v1714 = vpop.f32.mrb[0].mxu0
  %v1715 = vadd.f32 0.0, %v1714
  %v1716 = vpop.f32.mrb[0].mxu0
  %v1717 = vadd.f32 0.0, %v1716
  %1718 = vmatprep.mubr.bf16.mxu0 0
  %1719 = vmatmul.mubr.bf16.gmra.mrb[0].mxu0 %v1308
  %v1720 = vpop.f32.mrb[0].mxu0
  %v1721 = vadd.f32 0.0, %v1720
  %v1722 = vpop.f32.mrb[0].mxu0
  %v1723 = vadd.f32 0.0, %v1722
  %v1724 = vpop.f32.mrb[0].mxu0
  %v1725 = vadd.f32 0.0, %v1724
  %v1726 = vpop.f32.mrb[0].mxu0
  %v1727 = vadd.f32 0.0, %v1726
  %1728 = vmatprep.mubr.bf16.mxu0 0
  %1729 = vmatmul.mubr.bf16.gmra.mrb[0].mxu0 %v1311
  %v1730 = vpop.f32.mrb[0].mxu0
  %v1731 = vadd.f32 0.0, %v1730
  %v1732 = vpop.f32.mrb[0].mxu0
  %v1733 = vadd.f32 0.0, %v1732
  %v1734 = vpop.f32.mrb[0].mxu0
  %v1735 = vadd.f32 0.0, %v1734
  %v1736 = vpop.f32.mrb[0].mxu0
  %v1737 = vadd.f32 0.0, %v1736
  %1738 = vmatprep.mubr.bf16.mxu0 0
  %1739 = vmatmul.mubr.bf16.gmra.mrb[0].mxu0 %v1314
  %v1740 = vpop.f32.mrb[0].mxu0
  %v1741 = vadd.f32 0.0, %v1740
  %v1742 = vpop.f32.mrb[0].mxu0
  %v1743 = vadd.f32 0.0, %v1742
  %v1744 = vpop.f32.mrb[0].mxu0
  %v1745 = vadd.f32 0.0, %v1744
  %v1746 = vpop.f32.mrb[0].mxu0
  %v1747 = vadd.f32 0.0, %v1746
  %1748 = vmatprep.mubr.bf16.mxu0 0
  %1749 = vmatmul.mubr.bf16.gmra.mrb[0].mxu0 %v1317
  %v1750 = vpop.f32.mrb[0].mxu0
  %v1751 = vadd.f32 0.0, %v1750
  %v1752 = vpop.f32.mrb[0].mxu0
  %v1753 = vadd.f32 0.0, %v1752
  %v1754 = vpop.f32.mrb[0].mxu0
  %v1755 = vadd.f32 0.0, %v1754
  %v1756 = vpop.f32.mrb[0].mxu0
  %v1757 = vadd.f32 0.0, %v1756
  %1758 = vdwg.mxu0
  %v1759 = vld [vmem:[%s11] sm:$0xf]
  %v1760 = vld [vmem:[%s11 + $0x4] sm:$0xf]
  %v1761 = vld [vmem:[%s11 + $0x8] sm:$0xf]
  %v1762 = vld [vmem:[%s11 + $0xc] sm:$0xf]
  %v1763 = vld [vmem:[%s11 + $0x10] sm:$0xf]
  %v1764 = vld [vmem:[%s11 + $0x14] sm:$0xf]
  %v1765 = vld [vmem:[%s11 + $0x18] sm:$0xf]
  %v1766 = vld [vmem:[%s11 + $0x1c] sm:$0xf]
  %v1767 = vld [vmem:[%s11 + $0x20] sm:$0xf]
  %v1768 = vld [vmem:[%s11 + $0x24] sm:$0xf]
  %v1769 = vld [vmem:[%s11 + $0x28] sm:$0xf]
  %v1770 = vld [vmem:[%s11 + $0x2c] sm:$0xf]
  %v1771 = vld [vmem:[%s11 + $0x30] sm:$0xf]
  %v1772 = vld [vmem:[%s11 + $0x34] sm:$0xf]
  %v1773 = vld [vmem:[%s11 + $0x38] sm:$0xf]
  %v1774 = vld [vmem:[%s11 + $0x3c] sm:$0xf]
  %v1775 = vld [vmem:[%s11 + $0x40] sm:$0xf]
  %v1776 = vld [vmem:[%s11 + $0x44] sm:$0xf]
  %v1777 = vld [vmem:[%s11 + $0x48] sm:$0xf]
  %v1778 = vld [vmem:[%s11 + $0x4c] sm:$0xf]
  %v1779 = vld [vmem:[%s11 + $0x50] sm:$0xf]
  %v1780 = vld [vmem:[%s11 + $0x54] sm:$0xf]
  %v1781 = vld [vmem:[%s11 + $0x58] sm:$0xf]
  %v1782 = vld [vmem:[%s11 + $0x5c] sm:$0xf]
  %v1783 = vld [vmem:[%s11 + $0x60] sm:$0xf]
  %v1784 = vld [vmem:[%s11 + $0x64] sm:$0xf]
  %v1785 = vld [vmem:[%s11 + $0x68] sm:$0xf]
  %v1786 = vld [vmem:[%s11 + $0x6c] sm:$0xf]
  %v1787 = vld [vmem:[%s11 + $0x70] sm:$0xf]
  %v1788 = vld [vmem:[%s11 + $0x74] sm:$0xf]
  %v1789 = vld [vmem:[%s11 + $0x78] sm:$0xf]
  %v1790 = vld [vmem:[%s11 + $0x7c] sm:$0xf]
  %v1791 = vld [vmem:[%s11 + $0x80] sm:$0xf]
  %v1792 = vld [vmem:[%s11 + $0x84] sm:$0xf]
  %v1793 = vld [vmem:[%s11 + $0x88] sm:$0xf]
  %v1794 = vld [vmem:[%s11 + $0x8c] sm:$0xf]
  %v1795 = vpack.c.bf16 %v1122, %v1118
  %v1796 = vpack.c.bf16 %v1123, %v1119
  %v1797 = vpack.c.bf16 %v1124, %v1120
  %v1798 = vpack.c.bf16 %v1125, %v1121
  %v1799 = vpack.c.bf16 %v1130, %v1126
  %v1800 = vpack.c.bf16 %v1131, %v1127
  %v1801 = vpack.c.bf16 %v1132, %v1128
  %v1802 = vpack.c.bf16 %v1133, %v1129
  %v1839 = vunpack.c.l.b16 %v1759
  %v1840 = vunpack.c.l.b16 %v1760
  %v1841 = vunpack.c.l.b16 %v1761
  %v1842 = vunpack.c.l.b16 %v1762
  %v1843 = vunpack.c.l.b16 %v1763
  %v1844 = vunpack.c.l.b16 %v1764
  %v1845 = vunpack.c.l.b16 %v1765
  %v1846 = vunpack.c.l.b16 %v1766
  %v1847 = vunpack.c.l.b16 %v1767
  %v1848 = vunpack.c.l.b16 %v1768
  %v1849 = vunpack.c.l.b16 %v1769
  %v1850 = vunpack.c.l.b16 %v1770
  %v1851 = vunpack.c.l.b16 %v1771
  %v1852 = vunpack.c.l.b16 %v1772
  %v1853 = vunpack.c.l.b16 %v1773
  %v1854 = vunpack.c.l.b16 %v1774
  %v1855 = vunpack.c.l.b16 %v1775
  %v1856 = vunpack.c.l.b16 %v1776
  %v1857 = vunpack.c.l.b16 %v1777
  %v1858 = vunpack.c.l.b16 %v1778
  %v1859 = vunpack.c.l.b16 %v1779
  %v1860 = vunpack.c.l.b16 %v1780
  %v1861 = vunpack.c.l.b16 %v1781
  %v1862 = vunpack.c.l.b16 %v1782
  %v1863 = vunpack.c.l.b16 %v1783
  %v1864 = vunpack.c.l.b16 %v1784
  %v1865 = vunpack.c.l.b16 %v1785
  %v1866 = vunpack.c.l.b16 %v1786
  %v1867 = vunpack.c.l.b16 %v1787
  %v1868 = vunpack.c.l.b16 %v1788
  %v1869 = vunpack.c.l.b16 %v1789
  %v1870 = vunpack.c.l.b16 %v1790
  %v1871 = vunpack.c.l.b16 %v1791
  %v1872 = vunpack.c.l.b16 %v1792
  %v1873 = vunpack.c.l.b16 %v1793
  %v1874 = vunpack.c.l.b16 %v1794
  %v1875 = vpack.c.b16 %v1840, %v1839
  %v1876 = vpack.c.b16 %v1842, %v1841
  %v1877 = vpack.c.b16 %v1844, %v1843
  %v1878 = vpack.c.b16 %v1846, %v1845
  %v1879 = vpack.c.b16 %v1848, %v1847
  %v1880 = vpack.c.b16 %v1850, %v1849
  %v1881 = vpack.c.b16 %v1852, %v1851
  %v1882 = vpack.c.b16 %v1854, %v1853
  %v1883 = vpack.c.b16 %v1856, %v1855
  %v1884 = vpack.c.b16 %v1858, %v1857
  %v1885 = vpack.c.b16 %v1860, %v1859
  %v1886 = vpack.c.b16 %v1862, %v1861
  %v1887 = vpack.c.b16 %v1864, %v1863
  %v1888 = vpack.c.b16 %v1866, %v1865
  %v1889 = vpack.c.b16 %v1868, %v1867
  %v1890 = vpack.c.b16 %v1870, %v1869
  %v1891 = vpack.c.b16 %v1872, %v1871
  %v1892 = vpack.c.b16 %v1874, %v1873
  %v1894 = vsel %vm966, %v1875, 0
  %v1897 = vsel %vm966, %v1876, 0
  %v1900 = vsel %vm966, %v1877, 0
  %v1903 = vsel %vm966, %v1878, 0
  %v1906 = vsel %vm966, %v1879, 0
  %v1909 = vsel %vm966, %v1880, 0
  %v1912 = vsel %vm966, %v1881, 0
  %v1915 = vsel %vm966, %v1882, 0
  %v1918 = vsel %vm966, %v1883, 0
  %v1921 = vsel %vm966, %v1884, 0
  %v1924 = vsel %vm966, %v1885, 0
  %v1927 = vsel %vm966, %v1886, 0
  %v1930 = vsel %vm966, %v1887, 0
  %v1933 = vsel %vm966, %v1888, 0
  %v1936 = vsel %vm966, %v1889, 0
  %v1939 = vsel %vm966, %v1890, 0
  %v1942 = vsel %vm966, %v1891, 0
  %v1945 = vsel %vm966, %v1892, 0
  %1947 = vmatprep.subr.bf16.mxu0 %v1796
  %1948 = vmatpush1.bf16.msra.mxu0 %v1795
  %1949 = vmatprep.subr.bf16.mxu0 %v1800
  %1950 = vmatpush1.bf16.msra.mxu0 %v1799
  %1951 = vmatprep.subr.bf16.mxu0 0
  %1952 = vmatpush1.bf16.msra.mxu0 0
  %1953 = vmatprep.subr.bf16.mxu0 0
  %1954 = vmatpush1.bf16.msra.mxu0 0
  %1955 = vmatprep.subr.bf16.mxu0 0
  %1956 = vmatpush1.bf16.msra.mxu0 0
  %1957 = vmatprep.subr.bf16.mxu0 0
  %1958 = vmatpush1.bf16.msra.mxu0 0
  %1959 = vmatprep.subr.bf16.mxu0 0
  %1960 = vmatpush1.bf16.msra.mxu0 0
  %1961 = vmatprep.subr.bf16.mxu0 0
  %1962 = vmatpush1.bf16.msra.mxu0 0
  %1963 = vmatprep.subr.bf16.mxu0 0
  %1964 = vmatpush1.bf16.msra.mxu0 0
  %1965 = vmatprep.subr.bf16.mxu0 0
  %1966 = vmatpush1.bf16.msra.mxu0 0
  %1967 = vmatprep.subr.bf16.mxu0 0
  %1968 = vmatpush1.bf16.msra.mxu0 0
  %1969 = vmatprep.subr.bf16.mxu0 0
  %1970 = vmatpush1.bf16.msra.mxu0 0
  %1971 = vmatprep.subr.bf16.mxu0 0
  %1972 = vmatpush1.bf16.msra.mxu0 0
  %1973 = vmatprep.subr.bf16.mxu0 0
  %1974 = vmatpush1.bf16.msra.mxu0 0
  %1975 = vmatprep.subr.bf16.mxu0 0
  %1976 = vmatpush1.bf16.msra.mxu0 0
  %1977 = vmatprep.subr.bf16.mxu0 0
  %1978 = vmatpush1.bf16.msra.mxu0 0
  %1979 = vmatprep.mubr.bf16.mxu0 0
  %1980 = vmatmul.mubr.bf16.gmra.mrb[0].mxu0 %v1894
  %v1981 = vpop.f32.mrb[0].mxu0
  %v1982 = vadd.f32 0.0, %v1981
  %v1983 = vpop.f32.mrb[0].mxu0
  %v1984 = vadd.f32 0.0, %v1983
  %v1985 = vpop.f32.mrb[0].mxu0
  %v1986 = vadd.f32 0.0, %v1985
  %v1987 = vpop.f32.mrb[0].mxu0
  %v1988 = vadd.f32 0.0, %v1987
  %1989 = vmatprep.mubr.bf16.mxu0 0
  %1990 = vmatmul.mubr.bf16.gmra.mrb[0].mxu0 %v1897
  %v1991 = vpop.f32.mrb[0].mxu0
  %v1992 = vadd.f32 0.0, %v1991
  %v1993 = vpop.f32.mrb[0].mxu0
  %v1994 = vadd.f32 0.0, %v1993
  %v1995 = vpop.f32.mrb[0].mxu0
  %v1996 = vadd.f32 0.0, %v1995
  %v1997 = vpop.f32.mrb[0].mxu0
  %v1998 = vadd.f32 0.0, %v1997
  %1999 = vmatprep.mubr.bf16.mxu0 0
  %2000 = vmatmul.mubr.bf16.gmra.mrb[0].mxu0 %v1900
  %v2001 = vpop.f32.mrb[0].mxu0
  %v2002 = vadd.f32 0.0, %v2001
  %v2003 = vpop.f32.mrb[0].mxu0
  %v2004 = vadd.f32 0.0, %v2003
  %v2005 = vpop.f32.mrb[0].mxu0
  %v2006 = vadd.f32 0.0, %v2005
  %v2007 = vpop.f32.mrb[0].mxu0
  %v2008 = vadd.f32 0.0, %v2007
  %2009 = vmatprep.mubr.bf16.mxu0 0
  %2010 = vmatmul.mubr.bf16.gmra.mrb[0].mxu0 %v1903
  %v2011 = vpop.f32.mrb[0].mxu0
  %v2012 = vadd.f32 0.0, %v2011
  %v2013 = vpop.f32.mrb[0].mxu0
  %v2014 = vadd.f32 0.0, %v2013
  %v2015 = vpop.f32.mrb[0].mxu0
  %v2016 = vadd.f32 0.0, %v2015
  %v2017 = vpop.f32.mrb[0].mxu0
  %v2018 = vadd.f32 0.0, %v2017
  %2019 = vmatprep.mubr.bf16.mxu0 0
  %2020 = vmatmul.mubr.bf16.gmra.mrb[0].mxu0 %v1906
  %v2021 = vpop.f32.mrb[0].mxu0
  %v2022 = vadd.f32 0.0, %v2021
  %v2023 = vpop.f32.mrb[0].mxu0
  %v2024 = vadd.f32 0.0, %v2023
  %v2025 = vpop.f32.mrb[0].mxu0
  %v2026 = vadd.f32 0.0, %v2025
  %v2027 = vpop.f32.mrb[0].mxu0
  %v2028 = vadd.f32 0.0, %v2027
  %2029 = vmatprep.mubr.bf16.mxu0 0
  %2030 = vmatmul.mubr.bf16.gmra.mrb[0].mxu0 %v1909
  %v2031 = vpop.f32.mrb[0].mxu0
  %v2032 = vadd.f32 0.0, %v2031
  %v2033 = vpop.f32.mrb[0].mxu0
  %v2034 = vadd.f32 0.0, %v2033
  %v2035 = vpop.f32.mrb[0].mxu0
  %v2036 = vadd.f32 0.0, %v2035
  %v2037 = vpop.f32.mrb[0].mxu0
  %v2038 = vadd.f32 0.0, %v2037
  %2039 = vmatprep.mubr.bf16.mxu0 0
  %2040 = vmatmul.mubr.bf16.gmra.mrb[0].mxu0 %v1912
  %v2041 = vpop.f32.mrb[0].mxu0
  %v2042 = vadd.f32 0.0, %v2041
  %v2043 = vpop.f32.mrb[0].mxu0
  %v2044 = vadd.f32 0.0, %v2043
  %v2045 = vpop.f32.mrb[0].mxu0
  %v2046 = vadd.f32 0.0, %v2045
  %v2047 = vpop.f32.mrb[0].mxu0
  %v2048 = vadd.f32 0.0, %v2047
  %2049 = vmatprep.mubr.bf16.mxu0 0
  %2050 = vmatmul.mubr.bf16.gmra.mrb[0].mxu0 %v1915
  %v2051 = vpop.f32.mrb[0].mxu0
  %v2052 = vadd.f32 0.0, %v2051
  %v2053 = vpop.f32.mrb[0].mxu0
  %v2054 = vadd.f32 0.0, %v2053
  %v2055 = vpop.f32.mrb[0].mxu0
  %v2056 = vadd.f32 0.0, %v2055
  %v2057 = vpop.f32.mrb[0].mxu0
  %v2058 = vadd.f32 0.0, %v2057
  %2059 = vmatprep.mubr.bf16.mxu0 0
  %2060 = vmatmul.mubr.bf16.gmra.mrb[0].mxu0 %v1918
  %v2061 = vpop.f32.mrb[0].mxu0
  %v2062 = vadd.f32 0.0, %v2061
  %v2063 = vpop.f32.mrb[0].mxu0
  %v2064 = vadd.f32 0.0, %v2063
  %v2065 = vpop.f32.mrb[0].mxu0
  %v2066 = vadd.f32 0.0, %v2065
  %v2067 = vpop.f32.mrb[0].mxu0
  %v2068 = vadd.f32 0.0, %v2067
  %2069 = vmatprep.mubr.bf16.mxu0 0
  %2070 = vmatmul.mubr.bf16.gmra.mrb[0].mxu0 %v1921
  %v2071 = vpop.f32.mrb[0].mxu0
  %v2072 = vadd.f32 0.0, %v2071
  %v2073 = vpop.f32.mrb[0].mxu0
  %v2074 = vadd.f32 0.0, %v2073
  %v2075 = vpop.f32.mrb[0].mxu0
  %v2076 = vadd.f32 0.0, %v2075
  %v2077 = vpop.f32.mrb[0].mxu0
  %v2078 = vadd.f32 0.0, %v2077
  %2079 = vmatprep.mubr.bf16.mxu0 0
  %2080 = vmatmul.mubr.bf16.gmra.mrb[0].mxu0 %v1924
  %v2081 = vpop.f32.mrb[0].mxu0
  %v2082 = vadd.f32 0.0, %v2081
  %v2083 = vpop.f32.mrb[0].mxu0
  %v2084 = vadd.f32 0.0, %v2083
  %v2085 = vpop.f32.mrb[0].mxu0
  %v2086 = vadd.f32 0.0, %v2085
  %v2087 = vpop.f32.mrb[0].mxu0
  %v2088 = vadd.f32 0.0, %v2087
  %2089 = vmatprep.mubr.bf16.mxu0 0
  %2090 = vmatmul.mubr.bf16.gmra.mrb[0].mxu0 %v1927
  %v2091 = vpop.f32.mrb[0].mxu0
  %v2092 = vadd.f32 0.0, %v2091
  %v2093 = vpop.f32.mrb[0].mxu0
  %v2094 = vadd.f32 0.0, %v2093
  %v2095 = vpop.f32.mrb[0].mxu0
  %v2096 = vadd.f32 0.0, %v2095
  %v2097 = vpop.f32.mrb[0].mxu0
  %v2098 = vadd.f32 0.0, %v2097
  %2099 = vmatprep.mubr.bf16.mxu0 0
  %2100 = vmatmul.mubr.bf16.gmra.mrb[0].mxu0 %v1930
  %v2101 = vpop.f32.mrb[0].mxu0
  %v2102 = vadd.f32 0.0, %v2101
  %v2103 = vpop.f32.mrb[0].mxu0
  %v2104 = vadd.f32 0.0, %v2103
  %v2105 = vpop.f32.mrb[0].mxu0
  %v2106 = vadd.f32 0.0, %v2105
  %v2107 = vpop.f32.mrb[0].mxu0
  %v2108 = vadd.f32 0.0, %v2107
  %2109 = vmatprep.mubr.bf16.mxu0 0
  %2110 = vmatmul.mubr.bf16.gmra.mrb[0].mxu0 %v1933
  %v2111 = vpop.f32.mrb[0].mxu0
  %v2112 = vadd.f32 0.0, %v2111
  %v2113 = vpop.f32.mrb[0].mxu0
  %v2114 = vadd.f32 0.0, %v2113
  %v2115 = vpop.f32.mrb[0].mxu0
  %v2116 = vadd.f32 0.0, %v2115
  %v2117 = vpop.f32.mrb[0].mxu0
  %v2118 = vadd.f32 0.0, %v2117
  %2119 = vmatprep.mubr.bf16.mxu0 0
  %2120 = vmatmul.mubr.bf16.gmra.mrb[0].mxu0 %v1936
  %v2121 = vpop.f32.mrb[0].mxu0
  %v2122 = vadd.f32 0.0, %v2121
  %v2123 = vpop.f32.mrb[0].mxu0
  %v2124 = vadd.f32 0.0, %v2123
  %v2125 = vpop.f32.mrb[0].mxu0
  %v2126 = vadd.f32 0.0, %v2125
  %v2127 = vpop.f32.mrb[0].mxu0
  %v2128 = vadd.f32 0.0, %v2127
  %2129 = vmatprep.mubr.bf16.mxu0 0
  %2130 = vmatmul.mubr.bf16.gmra.mrb[0].mxu0 %v1939
  %v2131 = vpop.f32.mrb[0].mxu0
  %v2132 = vadd.f32 0.0, %v2131
  %v2133 = vpop.f32.mrb[0].mxu0
  %v2134 = vadd.f32 0.0, %v2133
  %v2135 = vpop.f32.mrb[0].mxu0
  %v2136 = vadd.f32 0.0, %v2135
  %v2137 = vpop.f32.mrb[0].mxu0
  %v2138 = vadd.f32 0.0, %v2137
  %2139 = vmatprep.mubr.bf16.mxu0 0
  %2140 = vmatmul.mubr.bf16.gmra.mrb[0].mxu0 %v1942
  %v2141 = vpop.f32.mrb[0].mxu0
  %v2142 = vadd.f32 0.0, %v2141
  %v2143 = vpop.f32.mrb[0].mxu0
  %v2144 = vadd.f32 0.0, %v2143
  %v2145 = vpop.f32.mrb[0].mxu0
  %v2146 = vadd.f32 0.0, %v2145
  %v2147 = vpop.f32.mrb[0].mxu0
  %v2148 = vadd.f32 0.0, %v2147
  %2149 = vmatprep.mubr.bf16.mxu0 0
  %2150 = vmatmul.mubr.bf16.gmra.mrb[0].mxu0 %v1945
  %v2151 = vpop.f32.mrb[0].mxu0
  %v2152 = vadd.f32 0.0, %v2151
  %v2153 = vpop.f32.mrb[0].mxu0
  %v2154 = vadd.f32 0.0, %v2153
  %v2155 = vpop.f32.mrb[0].mxu0
  %v2156 = vadd.f32 0.0, %v2155
  %v2157 = vpop.f32.mrb[0].mxu0
  %v2158 = vadd.f32 0.0, %v2157
  %2159 = vdwg.mxu0
  %2160 = vmatprep.subr.bf16.mxu0 %v1798
  %2161 = vmatpush1.bf16.msra.mxu0 %v1797
  %2162 = vmatprep.subr.bf16.mxu0 %v1802
  %2163 = vmatpush1.bf16.msra.mxu0 %v1801
  %2164 = vmatprep.subr.bf16.mxu0 0
  %2165 = vmatpush1.bf16.msra.mxu0 0
  %2166 = vmatprep.subr.bf16.mxu0 0
  %2167 = vmatpush1.bf16.msra.mxu0 0
  %2168 = vmatprep.subr.bf16.mxu0 0
  %2169 = vmatpush1.bf16.msra.mxu0 0
  %2170 = vmatprep.subr.bf16.mxu0 0
  %2171 = vmatpush1.bf16.msra.mxu0 0
  %2172 = vmatprep.subr.bf16.mxu0 0
  %2173 = vmatpush1.bf16.msra.mxu0 0
  %2174 = vmatprep.subr.bf16.mxu0 0
  %2175 = vmatpush1.bf16.msra.mxu0 0
  %2176 = vmatprep.subr.bf16.mxu0 0
  %2177 = vmatpush1.bf16.msra.mxu0 0
  %2178 = vmatprep.subr.bf16.mxu0 0
  %2179 = vmatpush1.bf16.msra.mxu0 0
  %2180 = vmatprep.subr.bf16.mxu0 0
  %2181 = vmatpush1.bf16.msra.mxu0 0
  %2182 = vmatprep.subr.bf16.mxu0 0
  %2183 = vmatpush1.bf16.msra.mxu0 0
  %2184 = vmatprep.subr.bf16.mxu0 0
  %2185 = vmatpush1.bf16.msra.mxu0 0
  %2186 = vmatprep.subr.bf16.mxu0 0
  %2187 = vmatpush1.bf16.msra.mxu0 0
  %2188 = vmatprep.subr.bf16.mxu0 0
  %2189 = vmatpush1.bf16.msra.mxu0 0
  %2190 = vmatprep.subr.bf16.mxu0 0
  %2191 = vmatpush1.bf16.msra.mxu0 0
  %2192 = vmatprep.mubr.bf16.mxu0 0
  %2193 = vmatmul.mubr.bf16.gmra.mrb[0].mxu0 %v1894
  %v2194 = vpop.f32.mrb[0].mxu0
  %v2195 = vadd.f32 0.0, %v2194
  %v2196 = vpop.f32.mrb[0].mxu0
  %v2197 = vadd.f32 0.0, %v2196
  %v2198 = vpop.f32.mrb[0].mxu0
  %v2199 = vadd.f32 0.0, %v2198
  %v2200 = vpop.f32.mrb[0].mxu0
  %v2201 = vadd.f32 0.0, %v2200
  %2202 = vmatprep.mubr.bf16.mxu0 0
  %2203 = vmatmul.mubr.bf16.gmra.mrb[0].mxu0 %v1897
  %v2204 = vpop.f32.mrb[0].mxu0
  %v2205 = vadd.f32 0.0, %v2204
  %v2206 = vpop.f32.mrb[0].mxu0
  %v2207 = vadd.f32 0.0, %v2206
  %v2208 = vpop.f32.mrb[0].mxu0
  %v2209 = vadd.f32 0.0, %v2208
  %v2210 = vpop.f32.mrb[0].mxu0
  %v2211 = vadd.f32 0.0, %v2210
  %2212 = vmatprep.mubr.bf16.mxu0 0
  %2213 = vmatmul.mubr.bf16.gmra.mrb[0].mxu0 %v1900
  %v2214 = vpop.f32.mrb[0].mxu0
  %v2215 = vadd.f32 0.0, %v2214
  %v2216 = vpop.f32.mrb[0].mxu0
  %v2217 = vadd.f32 0.0, %v2216
  %v2218 = vpop.f32.mrb[0].mxu0
  %v2219 = vadd.f32 0.0, %v2218
  %v2220 = vpop.f32.mrb[0].mxu0
  %v2221 = vadd.f32 0.0, %v2220
  %2222 = vmatprep.mubr.bf16.mxu0 0
  %2223 = vmatmul.mubr.bf16.gmra.mrb[0].mxu0 %v1903
  %v2224 = vpop.f32.mrb[0].mxu0
  %v2225 = vadd.f32 0.0, %v2224
  %v2226 = vpop.f32.mrb[0].mxu0
  %v2227 = vadd.f32 0.0, %v2226
  %v2228 = vpop.f32.mrb[0].mxu0
  %v2229 = vadd.f32 0.0, %v2228
  %v2230 = vpop.f32.mrb[0].mxu0
  %v2231 = vadd.f32 0.0, %v2230
  %2232 = vmatprep.mubr.bf16.mxu0 0
  %2233 = vmatmul.mubr.bf16.gmra.mrb[0].mxu0 %v1906
  %v2234 = vpop.f32.mrb[0].mxu0
  %v2235 = vadd.f32 0.0, %v2234
  %v2236 = vpop.f32.mrb[0].mxu0
  %v2237 = vadd.f32 0.0, %v2236
  %v2238 = vpop.f32.mrb[0].mxu0
  %v2239 = vadd.f32 0.0, %v2238
  %v2240 = vpop.f32.mrb[0].mxu0
  %v2241 = vadd.f32 0.0, %v2240
  %2242 = vmatprep.mubr.bf16.mxu0 0
  %2243 = vmatmul.mubr.bf16.gmra.mrb[0].mxu0 %v1909
  %v2244 = vpop.f32.mrb[0].mxu0
  %v2245 = vadd.f32 0.0, %v2244
  %v2246 = vpop.f32.mrb[0].mxu0
  %v2247 = vadd.f32 0.0, %v2246
  %v2248 = vpop.f32.mrb[0].mxu0
  %v2249 = vadd.f32 0.0, %v2248
  %v2250 = vpop.f32.mrb[0].mxu0
  %v2251 = vadd.f32 0.0, %v2250
  %2252 = vmatprep.mubr.bf16.mxu0 0
  %2253 = vmatmul.mubr.bf16.gmra.mrb[0].mxu0 %v1912
  %v2254 = vpop.f32.mrb[0].mxu0
  %v2255 = vadd.f32 0.0, %v2254
  %v2256 = vpop.f32.mrb[0].mxu0
  %v2257 = vadd.f32 0.0, %v2256
  %v2258 = vpop.f32.mrb[0].mxu0
  %v2259 = vadd.f32 0.0, %v2258
  %v2260 = vpop.f32.mrb[0].mxu0
  %v2261 = vadd.f32 0.0, %v2260
  %2262 = vmatprep.mubr.bf16.mxu0 0
  %2263 = vmatmul.mubr.bf16.gmra.mrb[0].mxu0 %v1915
  %v2264 = vpop.f32.mrb[0].mxu0
  %v2265 = vadd.f32 0.0, %v2264
  %v2266 = vpop.f32.mrb[0].mxu0
  %v2267 = vadd.f32 0.0, %v2266
  %v2268 = vpop.f32.mrb[0].mxu0
  %v2269 = vadd.f32 0.0, %v2268
  %v2270 = vpop.f32.mrb[0].mxu0
  %v2271 = vadd.f32 0.0, %v2270
  %2272 = vmatprep.mubr.bf16.mxu0 0
  %2273 = vmatmul.mubr.bf16.gmra.mrb[0].mxu0 %v1918
  %v2274 = vpop.f32.mrb[0].mxu0
  %v2275 = vadd.f32 0.0, %v2274
  %v2276 = vpop.f32.mrb[0].mxu0
  %v2277 = vadd.f32 0.0, %v2276
  %v2278 = vpop.f32.mrb[0].mxu0
  %v2279 = vadd.f32 0.0, %v2278
  %v2280 = vpop.f32.mrb[0].mxu0
  %v2281 = vadd.f32 0.0, %v2280
  %2282 = vmatprep.mubr.bf16.mxu0 0
  %2283 = vmatmul.mubr.bf16.gmra.mrb[0].mxu0 %v1921
  %v2284 = vpop.f32.mrb[0].mxu0
  %v2285 = vadd.f32 0.0, %v2284
  %v2286 = vpop.f32.mrb[0].mxu0
  %v2287 = vadd.f32 0.0, %v2286
  %v2288 = vpop.f32.mrb[0].mxu0
  %v2289 = vadd.f32 0.0, %v2288
  %v2290 = vpop.f32.mrb[0].mxu0
  %v2291 = vadd.f32 0.0, %v2290
  %2292 = vmatprep.mubr.bf16.mxu0 0
  %2293 = vmatmul.mubr.bf16.gmra.mrb[0].mxu0 %v1924
  %v2294 = vpop.f32.mrb[0].mxu0
  %v2295 = vadd.f32 0.0, %v2294
  %v2296 = vpop.f32.mrb[0].mxu0
  %v2297 = vadd.f32 0.0, %v2296
  %v2298 = vpop.f32.mrb[0].mxu0
  %v2299 = vadd.f32 0.0, %v2298
  %v2300 = vpop.f32.mrb[0].mxu0
  %v2301 = vadd.f32 0.0, %v2300
  %2302 = vmatprep.mubr.bf16.mxu0 0
  %2303 = vmatmul.mubr.bf16.gmra.mrb[0].mxu0 %v1927
  %v2304 = vpop.f32.mrb[0].mxu0
  %v2305 = vadd.f32 0.0, %v2304
  %v2306 = vpop.f32.mrb[0].mxu0
  %v2307 = vadd.f32 0.0, %v2306
  %v2308 = vpop.f32.mrb[0].mxu0
  %v2309 = vadd.f32 0.0, %v2308
  %v2310 = vpop.f32.mrb[0].mxu0
  %v2311 = vadd.f32 0.0, %v2310
  %2312 = vmatprep.mubr.bf16.mxu0 0
  %2313 = vmatmul.mubr.bf16.gmra.mrb[0].mxu0 %v1930
  %v2314 = vpop.f32.mrb[0].mxu0
  %v2315 = vadd.f32 0.0, %v2314
  %v2316 = vpop.f32.mrb[0].mxu0
  %v2317 = vadd.f32 0.0, %v2316
  %v2318 = vpop.f32.mrb[0].mxu0
  %v2319 = vadd.f32 0.0, %v2318
  %v2320 = vpop.f32.mrb[0].mxu0
  %v2321 = vadd.f32 0.0, %v2320
  %2322 = vmatprep.mubr.bf16.mxu0 0
  %2323 = vmatmul.mubr.bf16.gmra.mrb[0].mxu0 %v1933
  %v2324 = vpop.f32.mrb[0].mxu0
  %v2325 = vadd.f32 0.0, %v2324
  %v2326 = vpop.f32.mrb[0].mxu0
  %v2327 = vadd.f32 0.0, %v2326
  %v2328 = vpop.f32.mrb[0].mxu0
  %v2329 = vadd.f32 0.0, %v2328
  %v2330 = vpop.f32.mrb[0].mxu0
  %v2331 = vadd.f32 0.0, %v2330
  %2332 = vmatprep.mubr.bf16.mxu0 0
  %2333 = vmatmul.mubr.bf16.gmra.mrb[0].mxu0 %v1936
  %v2334 = vpop.f32.mrb[0].mxu0
  %v2335 = vadd.f32 0.0, %v2334
  %v2336 = vpop.f32.mrb[0].mxu0
  %v2337 = vadd.f32 0.0, %v2336
  %v2338 = vpop.f32.mrb[0].mxu0
  %v2339 = vadd.f32 0.0, %v2338
  %v2340 = vpop.f32.mrb[0].mxu0
  %v2341 = vadd.f32 0.0, %v2340
  %2342 = vmatprep.mubr.bf16.mxu0 0
  %2343 = vmatmul.mubr.bf16.gmra.mrb[0].mxu0 %v1939
  %v2344 = vpop.f32.mrb[0].mxu0
  %v2345 = vadd.f32 0.0, %v2344
  %v2346 = vpop.f32.mrb[0].mxu0
  %v2347 = vadd.f32 0.0, %v2346
  %v2348 = vpop.f32.mrb[0].mxu0
  %v2349 = vadd.f32 0.0, %v2348
  %v2350 = vpop.f32.mrb[0].mxu0
  %v2351 = vadd.f32 0.0, %v2350
  %2352 = vmatprep.mubr.bf16.mxu0 0
  %2353 = vmatmul.mubr.bf16.gmra.mrb[0].mxu0 %v1942
  %v2354 = vpop.f32.mrb[0].mxu0
  %v2355 = vadd.f32 0.0, %v2354
  %v2356 = vpop.f32.mrb[0].mxu0
  %v2357 = vadd.f32 0.0, %v2356
  %v2358 = vpop.f32.mrb[0].mxu0
  %v2359 = vadd.f32 0.0, %v2358
  %v2360 = vpop.f32.mrb[0].mxu0
  %v2361 = vadd.f32 0.0, %v2360
  %2362 = vmatprep.mubr.bf16.mxu0 0
  %2363 = vmatmul.mubr.bf16.gmra.mrb[0].mxu0 %v1945
  %v2364 = vpop.f32.mrb[0].mxu0
  %v2365 = vadd.f32 0.0, %v2364
  %v2366 = vpop.f32.mrb[0].mxu0
  %v2367 = vadd.f32 0.0, %v2366
  %v2368 = vpop.f32.mrb[0].mxu0
  %v2369 = vadd.f32 0.0, %v2368
  %v2370 = vpop.f32.mrb[0].mxu0
  %v2371 = vadd.f32 0.0, %v2370
  %2372 = vdwg.mxu0
  %v2373 = vmul.f32 %v1368, %v1982
  %v2374 = vmul.f32 %v1370, %v1984
  %v2375 = vmul.f32 %v1581, %v2195
  %v2376 = vmul.f32 %v1583, %v2197
  %v2377 = vmul.f32 %v1372, %v1986
  %v2378 = vmul.f32 %v1374, %v1988
  %v2379 = vmul.f32 %v1585, %v2199
  %v2380 = vmul.f32 %v1587, %v2201
  %v2381 = vmul.f32 %v1378, %v1992
  %v2382 = vmul.f32 %v1380, %v1994
  %v2383 = vmul.f32 %v1591, %v2205
  %v2384 = vmul.f32 %v1593, %v2207
  %v2385 = vmul.f32 %v1382, %v1996
  %v2386 = vmul.f32 %v1384, %v1998
  %v2387 = vmul.f32 %v1595, %v2209
  %v2388 = vmul.f32 %v1597, %v2211
  %v2389 = vmul.f32 %v1388, %v2002
  %v2390 = vmul.f32 %v1390, %v2004
  %v2391 = vmul.f32 %v1601, %v2215
  %v2392 = vmul.f32 %v1603, %v2217
  %v2393 = vmul.f32 %v1392, %v2006
  %v2394 = vmul.f32 %v1394, %v2008
  %v2395 = vmul.f32 %v1605, %v2219
  %v2396 = vmul.f32 %v1607, %v2221
  %v2397 = vmul.f32 %v1398, %v2012
  %v2398 = vmul.f32 %v1400, %v2014
  %v2399 = vmul.f32 %v1611, %v2225
  %v2400 = vmul.f32 %v1613, %v2227
  %v2401 = vmul.f32 %v1402, %v2016
  %v2402 = vmul.f32 %v1404, %v2018
  %v2403 = vmul.f32 %v1615, %v2229
  %v2404 = vmul.f32 %v1617, %v2231
  %v2405 = vmul.f32 %v1408, %v2022
  %v2406 = vmul.f32 %v1410, %v2024
  %v2407 = vmul.f32 %v1621, %v2235
  %v2408 = vmul.f32 %v1623, %v2237
  %v2409 = vmul.f32 %v1412, %v2026
  %v2410 = vmul.f32 %v1414, %v2028
  %v2411 = vmul.f32 %v1625, %v2239
  %v2412 = vmul.f32 %v1627, %v2241
  %v2413 = vmul.f32 %v1418, %v2032
  %v2414 = vmul.f32 %v1420, %v2034
  %v2415 = vmul.f32 %v1631, %v2245
  %v2416 = vmul.f32 %v1633, %v2247
  %v2417 = vmul.f32 %v1422, %v2036
  %v2418 = vmul.f32 %v1424, %v2038
  %v2419 = vmul.f32 %v1635, %v2249
  %v2420 = vmul.f32 %v1637, %v2251
  %v2421 = vmul.f32 %v1428, %v2042
  %v2422 = vmul.f32 %v1430, %v2044
  %v2423 = vmul.f32 %v1641, %v2255
  %v2424 = vmul.f32 %v1643, %v2257
  %v2425 = vmul.f32 %v1432, %v2046
  %v2426 = vmul.f32 %v1434, %v2048
  %v2427 = vmul.f32 %v1645, %v2259
  %v2428 = vmul.f32 %v1647, %v2261
  %v2429 = vmul.f32 %v1438, %v2052
  %v2430 = vmul.f32 %v1440, %v2054
  %v2431 = vmul.f32 %v1651, %v2265
  %v2432 = vmul.f32 %v1653, %v2267
  %v2433 = vmul.f32 %v1442, %v2056
  %v2434 = vmul.f32 %v1444, %v2058
  %v2435 = vmul.f32 %v1655, %v2269
  %v2436 = vmul.f32 %v1657, %v2271
  %v2437 = vmul.f32 %v1448, %v2062
  %v2438 = vmul.f32 %v1450, %v2064
  %v2439 = vmul.f32 %v1661, %v2275
  %v2440 = vmul.f32 %v1663, %v2277
  %v2441 = vmul.f32 %v1452, %v2066
  %v2442 = vmul.f32 %v1454, %v2068
  %v2443 = vmul.f32 %v1665, %v2279
  %v2444 = vmul.f32 %v1667, %v2281
  %v2445 = vmul.f32 %v1458, %v2072
  %v2446 = vmul.f32 %v1460, %v2074
  %v2447 = vmul.f32 %v1671, %v2285
  %v2448 = vmul.f32 %v1673, %v2287
  %v2449 = vmul.f32 %v1462, %v2076
  %v2450 = vmul.f32 %v1464, %v2078
  %v2451 = vmul.f32 %v1675, %v2289
  %v2452 = vmul.f32 %v1677, %v2291
  %v2453 = vmul.f32 %v1468, %v2082
  %v2454 = vmul.f32 %v1470, %v2084
  %v2455 = vmul.f32 %v1681, %v2295
  %v2456 = vmul.f32 %v1683, %v2297
  %v2457 = vmul.f32 %v1472, %v2086
  %v2458 = vmul.f32 %v1474, %v2088
  %v2459 = vmul.f32 %v1685, %v2299
  %v2460 = vmul.f32 %v1687, %v2301
  %v2461 = vmul.f32 %v1478, %v2092
  %v2462 = vmul.f32 %v1480, %v2094
  %v2463 = vmul.f32 %v1691, %v2305
  %v2464 = vmul.f32 %v1693, %v2307
  %v2465 = vmul.f32 %v1482, %v2096
  %v2466 = vmul.f32 %v1484, %v2098
  %v2467 = vmul.f32 %v1695, %v2309
  %v2468 = vmul.f32 %v1697, %v2311
  %v2469 = vmul.f32 %v1488, %v2102
  %v2470 = vmul.f32 %v1490, %v2104
  %v2471 = vmul.f32 %v1701, %v2315
  %v2472 = vmul.f32 %v1703, %v2317
  %v2473 = vmul.f32 %v1492, %v2106
  %v2474 = vmul.f32 %v1494, %v2108
  %v2475 = vmul.f32 %v1705, %v2319
  %v2476 = vmul.f32 %v1707, %v2321
  %v2477 = vmul.f32 %v1498, %v2112
  %v2478 = vmul.f32 %v1500, %v2114
  %v2479 = vmul.f32 %v1711, %v2325
  %v2480 = vmul.f32 %v1713, %v2327
  %v2481 = vmul.f32 %v1502, %v2116
  %v2482 = vmul.f32 %v1504, %v2118
  %v2483 = vmul.f32 %v1715, %v2329
  %v2484 = vmul.f32 %v1717, %v2331
  %v2485 = vmul.f32 %v1508, %v2122
  %v2486 = vmul.f32 %v1510, %v2124
  %v2487 = vmul.f32 %v1721, %v2335
  %v2488 = vmul.f32 %v1723, %v2337
  %v2489 = vmul.f32 %v1512, %v2126
  %v2490 = vmul.f32 %v1514, %v2128
  %v2491 = vmul.f32 %v1725, %v2339
  %v2492 = vmul.f32 %v1727, %v2341
  %v2493 = vmul.f32 %v1518, %v2132
  %v2494 = vmul.f32 %v1520, %v2134
  %v2495 = vmul.f32 %v1731, %v2345
  %v2496 = vmul.f32 %v1733, %v2347
  %v2497 = vmul.f32 %v1522, %v2136
  %v2498 = vmul.f32 %v1524, %v2138
  %v2499 = vmul.f32 %v1735, %v2349
  %v2500 = vmul.f32 %v1737, %v2351
  %v2501 = vmul.f32 %v1528, %v2142
  %v2502 = vmul.f32 %v1530, %v2144
  %v2503 = vmul.f32 %v1741, %v2355
  %v2504 = vmul.f32 %v1743, %v2357
  %v2505 = vmul.f32 %v1532, %v2146
  %v2506 = vmul.f32 %v1534, %v2148
  %v2507 = vmul.f32 %v1745, %v2359
  %v2508 = vmul.f32 %v1747, %v2361
  %v2509 = vmul.f32 %v1538, %v2152
  %v2510 = vmul.f32 %v1540, %v2154
  %v2511 = vmul.f32 %v1751, %v2365
  %v2512 = vmul.f32 %v1753, %v2367
  %v2513 = vmul.f32 %v1542, %v2156
  %v2514 = vmul.f32 %v1544, %v2158
  %v2515 = vmul.f32 %v1755, %v2369
  %v2516 = vmul.f32 %v1757, %v2371
  %v2517 = vld [vmem:[%s5] sm:$0xff]
  %v2518 = vld [vmem:[%s5 + $0x8] sm:$0xff]
  %v2519 = vld [vmem:[%s5 + $0x10] sm:$0xff]
  %v2520 = vld [vmem:[%s5 + $0x18] sm:$0xff]
  %v2521 = vld [vmem:[%s5 + $0x20] sm:$0xff]
  %v2522 = vld [vmem:[%s5 + $0x28] sm:$0xff]
  %v2523 = vld [vmem:[%s5 + $0x30] sm:$0xff]
  %v2524 = vld [vmem:[%s5 + $0x38] sm:$0xff]
  %v2525 = vld [vmem:[%s5 + $0x40] sm:$0xff]
  %v2526 = vld [vmem:[%s5 + $0x48] sm:$0xff]
  %v2527 = vld [vmem:[%s5 + $0x50] sm:$0xff]
  %v2528 = vld [vmem:[%s5 + $0x58] sm:$0xff]
  %v2529 = vld [vmem:[%s5 + $0x60] sm:$0xff]
  %v2530 = vld [vmem:[%s5 + $0x68] sm:$0xff]
  %v2531 = vld [vmem:[%s5 + $0x70] sm:$0xff]
  %v2532 = vld [vmem:[%s5 + $0x78] sm:$0xff]
  %v2533 = vld [vmem:[%s5 + $0x80] sm:$0xff]
  %v2534 = vld [vmem:[%s5 + $0x88] sm:$0xff]
  %v2535 = vld [vmem:[%s5 + $0x90] sm:$0xff]
  %v2536 = vld [vmem:[%s5 + $0x98] sm:$0xff]
  %v2537 = vld [vmem:[%s5 + $0xa0] sm:$0xff]
  %v2538 = vld [vmem:[%s5 + $0xa8] sm:$0xff]
  %v2539 = vld [vmem:[%s5 + $0xb0] sm:$0xff]
  %v2540 = vld [vmem:[%s5 + $0xb8] sm:$0xff]
  %v2541 = vld [vmem:[%s5 + $0xc0] sm:$0xff]
  %v2542 = vld [vmem:[%s5 + $0xc8] sm:$0xff]
  %v2543 = vld [vmem:[%s5 + $0xd0] sm:$0xff]
  %v2544 = vld [vmem:[%s5 + $0xd8] sm:$0xff]
  %v2545 = vld [vmem:[%s5 + $0xe0] sm:$0xff]
  %v2546 = vld [vmem:[%s5 + $0xe8] sm:$0xff]
  %v2547 = vld [vmem:[%s5 + $0xf0] sm:$0xff]
  %v2548 = vld [vmem:[%s5 + $0xf8] sm:$0xff]
  %v2549 = vld [vmem:[%s5 + $0x100] sm:$0xff]
  %v2550 = vld [vmem:[%s5 + $0x108] sm:$0xff]
  %v2551 = vld [vmem:[%s5 + $0x110] sm:$0xff]
  %v2552 = vld [vmem:[%s5 + $0x118] sm:$0xff]
  %v2553 = vld [vmem:[%s5 + $0x120] sm:$0xff]
  %v2554 = vld [vmem:[%s5 + $0x128] sm:$0xff]
  %v2555 = vld [vmem:[%s5 + $0x130] sm:$0xff]
  %v2556 = vld [vmem:[%s5 + $0x138] sm:$0xff]
  %v2557 = vld [vmem:[%s5 + $0x140] sm:$0xff]
  %v2558 = vld [vmem:[%s5 + $0x148] sm:$0xff]
  %v2559 = vld [vmem:[%s5 + $0x150] sm:$0xff]
  %v2560 = vld [vmem:[%s5 + $0x158] sm:$0xff]
  %v2561 = vld [vmem:[%s5 + $0x160] sm:$0xff]
  %v2562 = vld [vmem:[%s5 + $0x168] sm:$0xff]
  %v2563 = vld [vmem:[%s5 + $0x170] sm:$0xff]
  %v2564 = vld [vmem:[%s5 + $0x178] sm:$0xff]
  %v2565 = vld [vmem:[%s5 + $0x180] sm:$0xff]
  %v2566 = vld [vmem:[%s5 + $0x188] sm:$0xff]
  %v2567 = vld [vmem:[%s5 + $0x190] sm:$0xff]
  %v2568 = vld [vmem:[%s5 + $0x198] sm:$0xff]
  %v2569 = vld [vmem:[%s5 + $0x1a0] sm:$0xff]
  %v2570 = vld [vmem:[%s5 + $0x1a8] sm:$0xff]
  %v2571 = vld [vmem:[%s5 + $0x1b0] sm:$0xff]
  %v2572 = vld [vmem:[%s5 + $0x1b8] sm:$0xff]
  %v2573 = vld [vmem:[%s5 + $0x1c0] sm:$0xff]
  %v2574 = vld [vmem:[%s5 + $0x1c8] sm:$0xff]
  %v2575 = vld [vmem:[%s5 + $0x1d0] sm:$0xff]
  %v2576 = vld [vmem:[%s5 + $0x1d8] sm:$0xff]
  %v2577 = vld [vmem:[%s5 + $0x1e0] sm:$0xff]
  %v2578 = vld [vmem:[%s5 + $0x1e8] sm:$0xff]
  %v2579 = vld [vmem:[%s5 + $0x1f0] sm:$0xff]
  %v2580 = vld [vmem:[%s5 + $0x1f8] sm:$0xff]
  %2581 = vset.pattern.permute.xlu0 0
  %2582 = vperm.xlu0 %2581, %v2517
  %v2583 = vpop.permute.xlu0 %2582
  %2584 = vset.pattern.permute.xlu0 0
  %2585 = vperm.xlu0 %2584, %v2518
  %v2586 = vpop.permute.xlu0 %2585
  %2587 = vset.pattern.permute.xlu0 0
  %2588 = vperm.xlu0 %2587, %v2519
  %v2589 = vpop.permute.xlu0 %2588
  %2590 = vset.pattern.permute.xlu0 0
  %2591 = vperm.xlu0 %2590, %v2520
  %v2592 = vpop.permute.xlu0 %2591
  %2593 = vset.pattern.permute.xlu0 0
  %2594 = vperm.xlu0 %2593, %v2521
  %v2595 = vpop.permute.xlu0 %2594
  %2596 = vset.pattern.permute.xlu0 0
  %2597 = vperm.xlu0 %2596, %v2522
  %v2598 = vpop.permute.xlu0 %2597
  %2599 = vset.pattern.permute.xlu0 0
  %2600 = vperm.xlu0 %2599, %v2523
  %v2601 = vpop.permute.xlu0 %2600
  %2602 = vset.pattern.permute.xlu0 0
  %2603 = vperm.xlu0 %2602, %v2524
  %v2604 = vpop.permute.xlu0 %2603
  %2605 = vset.pattern.permute.xlu0 0
  %2606 = vperm.xlu0 %2605, %v2525
  %v2607 = vpop.permute.xlu0 %2606
  %2608 = vset.pattern.permute.xlu0 0
  %2609 = vperm.xlu0 %2608, %v2526
  %v2610 = vpop.permute.xlu0 %2609
  %2611 = vset.pattern.permute.xlu0 0
  %2612 = vperm.xlu0 %2611, %v2527
  %v2613 = vpop.permute.xlu0 %2612
  %2614 = vset.pattern.permute.xlu0 0
  %2615 = vperm.xlu0 %2614, %v2528
  %v2616 = vpop.permute.xlu0 %2615
  %2617 = vset.pattern.permute.xlu0 0
  %2618 = vperm.xlu0 %2617, %v2529
  %v2619 = vpop.permute.xlu0 %2618
  %2620 = vset.pattern.permute.xlu0 0
  %2621 = vperm.xlu0 %2620, %v2530
  %v2622 = vpop.permute.xlu0 %2621
  %2623 = vset.pattern.permute.xlu0 0
  %2624 = vperm.xlu0 %2623, %v2531
  %v2625 = vpop.permute.xlu0 %2624
  %2626 = vset.pattern.permute.xlu0 0
  %2627 = vperm.xlu0 %2626, %v2532
  %v2628 = vpop.permute.xlu0 %2627
  %2629 = vset.pattern.permute.xlu0 0
  %2630 = vperm.xlu0 %2629, %v2533
  %v2631 = vpop.permute.xlu0 %2630
  %2632 = vset.pattern.permute.xlu0 0
  %2633 = vperm.xlu0 %2632, %v2534
  %v2634 = vpop.permute.xlu0 %2633
  %2635 = vset.pattern.permute.xlu0 0
  %2636 = vperm.xlu0 %2635, %v2535
  %v2637 = vpop.permute.xlu0 %2636
  %2638 = vset.pattern.permute.xlu0 0
  %2639 = vperm.xlu0 %2638, %v2536
  %v2640 = vpop.permute.xlu0 %2639
  %2641 = vset.pattern.permute.xlu0 0
  %2642 = vperm.xlu0 %2641, %v2537
  %v2643 = vpop.permute.xlu0 %2642
  %2644 = vset.pattern.permute.xlu0 0
  %2645 = vperm.xlu0 %2644, %v2538
  %v2646 = vpop.permute.xlu0 %2645
  %2647 = vset.pattern.permute.xlu0 0
  %2648 = vperm.xlu0 %2647, %v2539
  %v2649 = vpop.permute.xlu0 %2648
  %2650 = vset.pattern.permute.xlu0 0
  %2651 = vperm.xlu0 %2650, %v2540
  %v2652 = vpop.permute.xlu0 %2651
  %2653 = vset.pattern.permute.xlu0 0
  %2654 = vperm.xlu0 %2653, %v2541
  %v2655 = vpop.permute.xlu0 %2654
  %2656 = vset.pattern.permute.xlu0 0
  %2657 = vperm.xlu0 %2656, %v2542
  %v2658 = vpop.permute.xlu0 %2657
  %2659 = vset.pattern.permute.xlu0 0
  %2660 = vperm.xlu0 %2659, %v2543
  %v2661 = vpop.permute.xlu0 %2660
  %2662 = vset.pattern.permute.xlu0 0
  %2663 = vperm.xlu0 %2662, %v2544
  %v2664 = vpop.permute.xlu0 %2663
  %2665 = vset.pattern.permute.xlu0 0
  %2666 = vperm.xlu0 %2665, %v2545
  %v2667 = vpop.permute.xlu0 %2666
  %2668 = vset.pattern.permute.xlu0 0
  %2669 = vperm.xlu0 %2668, %v2546
  %v2670 = vpop.permute.xlu0 %2669
  %2671 = vset.pattern.permute.xlu0 0
  %2672 = vperm.xlu0 %2671, %v2547
  %v2673 = vpop.permute.xlu0 %2672
  %2674 = vset.pattern.permute.xlu0 0
  %2675 = vperm.xlu0 %2674, %v2548
  %v2676 = vpop.permute.xlu0 %2675
  %2677 = vset.pattern.permute.xlu0 0
  %2678 = vperm.xlu0 %2677, %v2549
  %v2679 = vpop.permute.xlu0 %2678
  %2680 = vset.pattern.permute.xlu0 0
  %2681 = vperm.xlu0 %2680, %v2550
  %v2682 = vpop.permute.xlu0 %2681
  %2683 = vset.pattern.permute.xlu0 0
  %2684 = vperm.xlu0 %2683, %v2551
  %v2685 = vpop.permute.xlu0 %2684
  %2686 = vset.pattern.permute.xlu0 0
  %2687 = vperm.xlu0 %2686, %v2552
  %v2688 = vpop.permute.xlu0 %2687
  %2689 = vset.pattern.permute.xlu0 0
  %2690 = vperm.xlu0 %2689, %v2553
  %v2691 = vpop.permute.xlu0 %2690
  %2692 = vset.pattern.permute.xlu0 0
  %2693 = vperm.xlu0 %2692, %v2554
  %v2694 = vpop.permute.xlu0 %2693
  %2695 = vset.pattern.permute.xlu0 0
  %2696 = vperm.xlu0 %2695, %v2555
  %v2697 = vpop.permute.xlu0 %2696
  %2698 = vset.pattern.permute.xlu0 0
  %2699 = vperm.xlu0 %2698, %v2556
  %v2700 = vpop.permute.xlu0 %2699
  %2701 = vset.pattern.permute.xlu0 0
  %2702 = vperm.xlu0 %2701, %v2557
  %v2703 = vpop.permute.xlu0 %2702
  %2704 = vset.pattern.permute.xlu0 0
  %2705 = vperm.xlu0 %2704, %v2558
  %v2706 = vpop.permute.xlu0 %2705
  %2707 = vset.pattern.permute.xlu0 0
  %2708 = vperm.xlu0 %2707, %v2559
  %v2709 = vpop.permute.xlu0 %2708
  %2710 = vset.pattern.permute.xlu0 0
  %2711 = vperm.xlu0 %2710, %v2560
  %v2712 = vpop.permute.xlu0 %2711
  %2713 = vset.pattern.permute.xlu0 0
  %2714 = vperm.xlu0 %2713, %v2561
  %v2715 = vpop.permute.xlu0 %2714
  %2716 = vset.pattern.permute.xlu0 0
  %2717 = vperm.xlu0 %2716, %v2562
  %v2718 = vpop.permute.xlu0 %2717
  %2719 = vset.pattern.permute.xlu0 0
  %2720 = vperm.xlu0 %2719, %v2563
  %v2721 = vpop.permute.xlu0 %2720
  %2722 = vset.pattern.permute.xlu0 0
  %2723 = vperm.xlu0 %2722, %v2564
  %v2724 = vpop.permute.xlu0 %2723
  %2725 = vset.pattern.permute.xlu0 0
  %2726 = vperm.xlu0 %2725, %v2565
  %v2727 = vpop.permute.xlu0 %2726
  %2728 = vset.pattern.permute.xlu0 0
  %2729 = vperm.xlu0 %2728, %v2566
  %v2730 = vpop.permute.xlu0 %2729
  %2731 = vset.pattern.permute.xlu0 0
  %2732 = vperm.xlu0 %2731, %v2567
  %v2733 = vpop.permute.xlu0 %2732
  %2734 = vset.pattern.permute.xlu0 0
  %2735 = vperm.xlu0 %2734, %v2568
  %v2736 = vpop.permute.xlu0 %2735
  %2737 = vset.pattern.permute.xlu0 0
  %2738 = vperm.xlu0 %2737, %v2569
  %v2739 = vpop.permute.xlu0 %2738
  %2740 = vset.pattern.permute.xlu0 0
  %2741 = vperm.xlu0 %2740, %v2570
  %v2742 = vpop.permute.xlu0 %2741
  %2743 = vset.pattern.permute.xlu0 0
  %2744 = vperm.xlu0 %2743, %v2571
  %v2745 = vpop.permute.xlu0 %2744
  %2746 = vset.pattern.permute.xlu0 0
  %2747 = vperm.xlu0 %2746, %v2572
  %v2748 = vpop.permute.xlu0 %2747
  %2749 = vset.pattern.permute.xlu0 0
  %2750 = vperm.xlu0 %2749, %v2573
  %v2751 = vpop.permute.xlu0 %2750
  %2752 = vset.pattern.permute.xlu0 0
  %2753 = vperm.xlu0 %2752, %v2574
  %v2754 = vpop.permute.xlu0 %2753
  %2755 = vset.pattern.permute.xlu0 0
  %2756 = vperm.xlu0 %2755, %v2575
  %v2757 = vpop.permute.xlu0 %2756
  %2758 = vset.pattern.permute.xlu0 0
  %2759 = vperm.xlu0 %2758, %v2576
  %v2760 = vpop.permute.xlu0 %2759
  %2761 = vset.pattern.permute.xlu0 0
  %2762 = vperm.xlu0 %2761, %v2577
  %v2763 = vpop.permute.xlu0 %2762
  %2764 = vset.pattern.permute.xlu0 0
  %2765 = vperm.xlu0 %2764, %v2578
  %v2766 = vpop.permute.xlu0 %2765
  %2767 = vset.pattern.permute.xlu0 0
  %2768 = vperm.xlu0 %2767, %v2579
  %v2769 = vpop.permute.xlu0 %2768
  %2770 = vset.pattern.permute.xlu0 0
  %2771 = vperm.xlu0 %2770, %v2580
  %v2772 = vpop.permute.xlu0 %2771
  %vm2773 = vcmp.eq.s32.totalorder %v1081, %v2583
  %vm2774 = vcmp.eq.s32.totalorder %v1081, %v2586
  %vm2775 = vcmp.eq.s32.totalorder %v1081, %v2589
  %vm2776 = vcmp.eq.s32.totalorder %v1081, %v2592
  %vm2777 = vcmp.eq.s32.totalorder %v1081, %v2595
  %vm2778 = vcmp.eq.s32.totalorder %v1081, %v2598
  %vm2779 = vcmp.eq.s32.totalorder %v1081, %v2601
  %vm2780 = vcmp.eq.s32.totalorder %v1081, %v2604
  %vm2781 = vcmp.eq.s32.totalorder %v1081, %v2607
  %vm2782 = vcmp.eq.s32.totalorder %v1081, %v2610
  %vm2783 = vcmp.eq.s32.totalorder %v1081, %v2613
  %vm2784 = vcmp.eq.s32.totalorder %v1081, %v2616
  %vm2785 = vcmp.eq.s32.totalorder %v1081, %v2619
  %vm2786 = vcmp.eq.s32.totalorder %v1081, %v2622
  %vm2787 = vcmp.eq.s32.totalorder %v1081, %v2625
  %vm2788 = vcmp.eq.s32.totalorder %v1081, %v2628
  %vm2789 = vcmp.eq.s32.totalorder %v1081, %v2631
  %vm2790 = vcmp.eq.s32.totalorder %v1081, %v2634
  %vm2791 = vcmp.eq.s32.totalorder %v1081, %v2637
  %vm2792 = vcmp.eq.s32.totalorder %v1081, %v2640
  %vm2793 = vcmp.eq.s32.totalorder %v1081, %v2643
  %vm2794 = vcmp.eq.s32.totalorder %v1081, %v2646
  %vm2795 = vcmp.eq.s32.totalorder %v1081, %v2649
  %vm2796 = vcmp.eq.s32.totalorder %v1081, %v2652
  %vm2797 = vcmp.eq.s32.totalorder %v1081, %v2655
  %vm2798 = vcmp.eq.s32.totalorder %v1081, %v2658
  %vm2799 = vcmp.eq.s32.totalorder %v1081, %v2661
  %vm2800 = vcmp.eq.s32.totalorder %v1081, %v2664
  %vm2801 = vcmp.eq.s32.totalorder %v1081, %v2667
  %vm2802 = vcmp.eq.s32.totalorder %v1081, %v2670
  %vm2803 = vcmp.eq.s32.totalorder %v1081, %v2673
  %vm2804 = vcmp.eq.s32.totalorder %v1081, %v2676
  %vm2805 = vcmp.eq.s32.totalorder %v1081, %v2679
  %vm2806 = vcmp.eq.s32.totalorder %v1081, %v2682
  %vm2807 = vcmp.eq.s32.totalorder %v1081, %v2685
  %vm2808 = vcmp.eq.s32.totalorder %v1081, %v2688
  %vm2809 = vcmp.eq.s32.totalorder %v1081, %v2691
  %vm2810 = vcmp.eq.s32.totalorder %v1081, %v2694
  %vm2811 = vcmp.eq.s32.totalorder %v1081, %v2697
  %vm2812 = vcmp.eq.s32.totalorder %v1081, %v2700
  %vm2813 = vcmp.eq.s32.totalorder %v1081, %v2703
  %vm2814 = vcmp.eq.s32.totalorder %v1081, %v2706
  %vm2815 = vcmp.eq.s32.totalorder %v1081, %v2709
  %vm2816 = vcmp.eq.s32.totalorder %v1081, %v2712
  %vm2817 = vcmp.eq.s32.totalorder %v1081, %v2715
  %vm2818 = vcmp.eq.s32.totalorder %v1081, %v2718
  %vm2819 = vcmp.eq.s32.totalorder %v1081, %v2721
  %vm2820 = vcmp.eq.s32.totalorder %v1081, %v2724
  %vm2821 = vcmp.eq.s32.totalorder %v1081, %v2727
  %vm2822 = vcmp.eq.s32.totalorder %v1081, %v2730
  %vm2823 = vcmp.eq.s32.totalorder %v1081, %v2733
  %vm2824 = vcmp.eq.s32.totalorder %v1081, %v2736
  %vm2825 = vcmp.eq.s32.totalorder %v1081, %v2739
  %vm2826 = vcmp.eq.s32.totalorder %v1081, %v2742
  %vm2827 = vcmp.eq.s32.totalorder %v1081, %v2745
  %vm2828 = vcmp.eq.s32.totalorder %v1081, %v2748
  %vm2829 = vcmp.eq.s32.totalorder %v1081, %v2751
  %vm2830 = vcmp.eq.s32.totalorder %v1081, %v2754
  %vm2831 = vcmp.eq.s32.totalorder %v1081, %v2757
  %vm2832 = vcmp.eq.s32.totalorder %v1081, %v2760
  %vm2833 = vcmp.eq.s32.totalorder %v1081, %v2763
  %vm2834 = vcmp.eq.s32.totalorder %v1081, %v2766
  %vm2835 = vcmp.eq.s32.totalorder %v1081, %v2769
  %vm2836 = vcmp.eq.s32.totalorder %v1081, %v2772
  %v2837 = vsel %vm2773, 1, 0
  %v2838 = vsel %vm2774, 1, 0
  %v2839 = vsel %vm2775, 1, 0
  %v2840 = vsel %vm2776, 1, 0
  %v2841 = vsel %vm2777, 1, 0
  %v2842 = vsel %vm2778, 1, 0
  %v2843 = vsel %vm2779, 1, 0
  %v2844 = vsel %vm2780, 1, 0
  %v2845 = vsel %vm2781, 1, 0
  %v2846 = vsel %vm2782, 1, 0
  %v2847 = vsel %vm2783, 1, 0
  %v2848 = vsel %vm2784, 1, 0
  %v2849 = vsel %vm2785, 1, 0
  %v2850 = vsel %vm2786, 1, 0
  %v2851 = vsel %vm2787, 1, 0
  %v2852 = vsel %vm2788, 1, 0
  %v2853 = vsel %vm2789, 1, 0
  %v2854 = vsel %vm2790, 1, 0
  %v2855 = vsel %vm2791, 1, 0
  %v2856 = vsel %vm2792, 1, 0
  %v2857 = vsel %vm2793, 1, 0
  %v2858 = vsel %vm2794, 1, 0
  %v2859 = vsel %vm2795, 1, 0
  %v2860 = vsel %vm2796, 1, 0
  %v2861 = vsel %vm2797, 1, 0
  %v2862 = vsel %vm2798, 1, 0
  %v2863 = vsel %vm2799, 1, 0
  %v2864 = vsel %vm2800, 1, 0
  %v2865 = vsel %vm2801, 1, 0
  %v2866 = vsel %vm2802, 1, 0
  %v2867 = vsel %vm2803, 1, 0
  %v2868 = vsel %vm2804, 1, 0
  %v2869 = vsel %vm2805, 1, 0
  %v2870 = vsel %vm2806, 1, 0
  %v2871 = vsel %vm2807, 1, 0
  %v2872 = vsel %vm2808, 1, 0
  %v2873 = vsel %vm2809, 1, 0
  %v2874 = vsel %vm2810, 1, 0
  %v2875 = vsel %vm2811, 1, 0
  %v2876 = vsel %vm2812, 1, 0
  %v2877 = vsel %vm2813, 1, 0
  %v2878 = vsel %vm2814, 1, 0
  %v2879 = vsel %vm2815, 1, 0
  %v2880 = vsel %vm2816, 1, 0
  %v2881 = vsel %vm2817, 1, 0
  %v2882 = vsel %vm2818, 1, 0
  %v2883 = vsel %vm2819, 1, 0
  %v2884 = vsel %vm2820, 1, 0
  %v2885 = vsel %vm2821, 1, 0
  %v2886 = vsel %vm2822, 1, 0
  %v2887 = vsel %vm2823, 1, 0
  %v2888 = vsel %vm2824, 1, 0
  %v2889 = vsel %vm2825, 1, 0
  %v2890 = vsel %vm2826, 1, 0
  %v2891 = vsel %vm2827, 1, 0
  %v2892 = vsel %vm2828, 1, 0
  %v2893 = vsel %vm2829, 1, 0
  %v2894 = vsel %vm2830, 1, 0
  %v2895 = vsel %vm2831, 1, 0
  %v2896 = vsel %vm2832, 1, 0
  %v2897 = vsel %vm2833, 1, 0
  %v2898 = vsel %vm2834, 1, 0
  %v2899 = vsel %vm2835, 1, 0
  %v2900 = vsel %vm2836, 1, 0
  %v2901 = vcvt.s32.f32 %v2837
  %v2902 = vcvt.s32.f32 %v2838
  %v2903 = vcvt.s32.f32 %v2839
  %v2904 = vcvt.s32.f32 %v2840
  %v2905 = vcvt.s32.f32 %v2841
  %v2906 = vcvt.s32.f32 %v2842
  %v2907 = vcvt.s32.f32 %v2843
  %v2908 = vcvt.s32.f32 %v2844
  %v2909 = vcvt.s32.f32 %v2845
  %v2910 = vcvt.s32.f32 %v2846
  %v2911 = vcvt.s32.f32 %v2847
  %v2912 = vcvt.s32.f32 %v2848
  %v2913 = vcvt.s32.f32 %v2849
  %v2914 = vcvt.s32.f32 %v2850
  %v2915 = vcvt.s32.f32 %v2851
  %v2916 = vcvt.s32.f32 %v2852
  %v2917 = vcvt.s32.f32 %v2853
  %v2918 = vcvt.s32.f32 %v2854
  %v2919 = vcvt.s32.f32 %v2855
  %v2920 = vcvt.s32.f32 %v2856
  %v2921 = vcvt.s32.f32 %v2857
  %v2922 = vcvt.s32.f32 %v2858
  %v2923 = vcvt.s32.f32 %v2859
  %v2924 = vcvt.s32.f32 %v2860
  %v2925 = vcvt.s32.f32 %v2861
  %v2926 = vcvt.s32.f32 %v2862
  %v2927 = vcvt.s32.f32 %v2863
  %v2928 = vcvt.s32.f32 %v2864
  %v2929 = vcvt.s32.f32 %v2865
  %v2930 = vcvt.s32.f32 %v2866
  %v2931 = vcvt.s32.f32 %v2867
  %v2932 = vcvt.s32.f32 %v2868
  %v2933 = vcvt.s32.f32 %v2869
  %v2934 = vcvt.s32.f32 %v2870
  %v2935 = vcvt.s32.f32 %v2871
  %v2936 = vcvt.s32.f32 %v2872
  %v2937 = vcvt.s32.f32 %v2873
  %v2938 = vcvt.s32.f32 %v2874
  %v2939 = vcvt.s32.f32 %v2875
  %v2940 = vcvt.s32.f32 %v2876
  %v2941 = vcvt.s32.f32 %v2877
  %v2942 = vcvt.s32.f32 %v2878
  %v2943 = vcvt.s32.f32 %v2879
  %v2944 = vcvt.s32.f32 %v2880
  %v2945 = vcvt.s32.f32 %v2881
  %v2946 = vcvt.s32.f32 %v2882
  %v2947 = vcvt.s32.f32 %v2883
  %v2948 = vcvt.s32.f32 %v2884
  %v2949 = vcvt.s32.f32 %v2885
  %v2950 = vcvt.s32.f32 %v2886
  %v2951 = vcvt.s32.f32 %v2887
  %v2952 = vcvt.s32.f32 %v2888
  %v2953 = vcvt.s32.f32 %v2889
  %v2954 = vcvt.s32.f32 %v2890
  %v2955 = vcvt.s32.f32 %v2891
  %v2956 = vcvt.s32.f32 %v2892
  %v2957 = vcvt.s32.f32 %v2893
  %v2958 = vcvt.s32.f32 %v2894
  %v2959 = vcvt.s32.f32 %v2895
  %v2960 = vcvt.s32.f32 %v2896
  %v2961 = vcvt.s32.f32 %v2897
  %v2962 = vcvt.s32.f32 %v2898
  %v2963 = vcvt.s32.f32 %v2899
  %v2964 = vcvt.s32.f32 %v2900
  %v2965 = vpack.c.bf16 %v2902, %v2901
  %v2966 = vpack.c.bf16 %v2904, %v2903
  %v2967 = vpack.c.bf16 %v2906, %v2905
  %v2968 = vpack.c.bf16 %v2908, %v2907
  %v2969 = vpack.c.bf16 %v2910, %v2909
  %v2970 = vpack.c.bf16 %v2912, %v2911
  %v2971 = vpack.c.bf16 %v2914, %v2913
  %v2972 = vpack.c.bf16 %v2916, %v2915
  %v2973 = vpack.c.bf16 %v2918, %v2917
  %v2974 = vpack.c.bf16 %v2920, %v2919
  %v2975 = vpack.c.bf16 %v2922, %v2921
  %v2976 = vpack.c.bf16 %v2924, %v2923
  %v2977 = vpack.c.bf16 %v2926, %v2925
  %v2978 = vpack.c.bf16 %v2928, %v2927
  %v2979 = vpack.c.bf16 %v2930, %v2929
  %v2980 = vpack.c.bf16 %v2932, %v2931
  %v2981 = vpack.c.bf16 %v2934, %v2933
  %v2982 = vpack.c.bf16 %v2936, %v2935
  %v2983 = vpack.c.bf16 %v2938, %v2937
  %v2984 = vpack.c.bf16 %v2940, %v2939
  %v2985 = vpack.c.bf16 %v2942, %v2941
  %v2986 = vpack.c.bf16 %v2944, %v2943
  %v2987 = vpack.c.bf16 %v2946, %v2945
  %v2988 = vpack.c.bf16 %v2948, %v2947
  %v2989 = vpack.c.bf16 %v2950, %v2949
  %v2990 = vpack.c.bf16 %v2952, %v2951
  %v2991 = vpack.c.bf16 %v2954, %v2953
  %v2992 = vpack.c.bf16 %v2956, %v2955
  %v2993 = vpack.c.bf16 %v2958, %v2957
  %v2994 = vpack.c.bf16 %v2960, %v2959
  %v2995 = vpack.c.bf16 %v2962, %v2961
  %v2996 = vpack.c.bf16 %v2964, %v2963
  %v2997 = vld [vmem:[#allocation2] sm:$0xff]
  %v2998 = vld [vmem:[#allocation2 + $0x8] sm:$0xff]
  %v2999 = vld [vmem:[#allocation2 + $0x10] sm:$0xff]
  %v3000 = vld [vmem:[#allocation2 + $0x18] sm:$0xff]
  %v3001 = vld [vmem:[#allocation2 + $0x20] sm:$0xff]
  %v3002 = vld [vmem:[#allocation2 + $0x28] sm:$0xff]
  %v3003 = vld [vmem:[#allocation2 + $0x30] sm:$0xff]
  %v3004 = vld [vmem:[#allocation2 + $0x38] sm:$0xff]
  %v3005 = vld [vmem:[#allocation2 + $0x40] sm:$0xff]
  %v3006 = vld [vmem:[#allocation2 + $0x48] sm:$0xff]
  %v3007 = vld [vmem:[#allocation2 + $0x50] sm:$0xff]
  %v3008 = vld [vmem:[#allocation2 + $0x58] sm:$0xff]
  %v3009 = vld [vmem:[#allocation2 + $0x60] sm:$0xff]
  %v3010 = vld [vmem:[#allocation2 + $0x68] sm:$0xff]
  %v3011 = vld [vmem:[#allocation2 + $0x70] sm:$0xff]
  %v3012 = vld [vmem:[#allocation2 + $0x78] sm:$0xff]
  %v3013 = vld [vmem:[#allocation2 + $0x80] sm:$0xff]
  %v3014 = vld [vmem:[#allocation2 + $0x88] sm:$0xff]
  %v3015 = vld [vmem:[#allocation2 + $0x90] sm:$0xff]
  %v3016 = vld [vmem:[#allocation2 + $0x98] sm:$0xff]
  %v3017 = vld [vmem:[#allocation2 + $0xa0] sm:$0xff]
  %v3018 = vld [vmem:[#allocation2 + $0xa8] sm:$0xff]
  %v3019 = vld [vmem:[#allocation2 + $0xb0] sm:$0xff]
  %v3020 = vld [vmem:[#allocation2 + $0xb8] sm:$0xff]
  %v3021 = vld [vmem:[#allocation2 + $0xc0] sm:$0xff]
  %v3022 = vld [vmem:[#allocation2 + $0xc8] sm:$0xff]
  %v3023 = vld [vmem:[#allocation2 + $0xd0] sm:$0xff]
  %v3024 = vld [vmem:[#allocation2 + $0xd8] sm:$0xff]
  %v3025 = vld [vmem:[#allocation2 + $0xe0] sm:$0xff]
  %v3026 = vld [vmem:[#allocation2 + $0xe8] sm:$0xff]
  %v3027 = vld [vmem:[#allocation2 + $0xf0] sm:$0xff]
  %v3028 = vld [vmem:[#allocation2 + $0xf8] sm:$0xff]
  %v3029 = vld [vmem:[#allocation2 + $0x100] sm:$0xff]
  %v3030 = vld [vmem:[#allocation2 + $0x108] sm:$0xff]
  %v3031 = vld [vmem:[#allocation2 + $0x110] sm:$0xff]
  %v3032 = vld [vmem:[#allocation2 + $0x118] sm:$0xff]
  %v3033 = vpack.c.bf16 %v2377, %v2373
  %v3034 = vpack.c.bf16 %v2378, %v2374
  %v3035 = vpack.c.bf16 %v2379, %v2375
  %v3036 = vpack.c.bf16 %v2380, %v2376
  %v3037 = vpack.c.bf16 %v2385, %v2381
  %v3038 = vpack.c.bf16 %v2386, %v2382
  %v3039 = vpack.c.bf16 %v2387, %v2383
  %v3040 = vpack.c.bf16 %v2388, %v2384
  %v3041 = vpack.c.bf16 %v2393, %v2389
  %v3042 = vpack.c.bf16 %v2394, %v2390
  %v3043 = vpack.c.bf16 %v2395, %v2391
  %v3044 = vpack.c.bf16 %v2396, %v2392
  %v3045 = vpack.c.bf16 %v2401, %v2397
  %v3046 = vpack.c.bf16 %v2402, %v2398
  %v3047 = vpack.c.bf16 %v2403, %v2399
  %v3048 = vpack.c.bf16 %v2404, %v2400
  %v3049 = vpack.c.bf16 %v2409, %v2405
  %v3050 = vpack.c.bf16 %v2410, %v2406
  %v3051 = vpack.c.bf16 %v2411, %v2407
  %v3052 = vpack.c.bf16 %v2412, %v2408
  %v3053 = vpack.c.bf16 %v2417, %v2413
  %v3054 = vpack.c.bf16 %v2418, %v2414
  %v3055 = vpack.c.bf16 %v2419, %v2415
  %v3056 = vpack.c.bf16 %v2420, %v2416
  %v3057 = vpack.c.bf16 %v2425, %v2421
  %v3058 = vpack.c.bf16 %v2426, %v2422
  %v3059 = vpack.c.bf16 %v2427, %v2423
  %v3060 = vpack.c.bf16 %v2428, %v2424
  %v3061 = vpack.c.bf16 %v2433, %v2429
  %v3062 = vpack.c.bf16 %v2434, %v2430
  %v3063 = vpack.c.bf16 %v2435, %v2431
  %v3064 = vpack.c.bf16 %v2436, %v2432
  %v3065 = vpack.c.bf16 %v2441, %v2437
  %v3066 = vpack.c.bf16 %v2442, %v2438
  %v3067 = vpack.c.bf16 %v2443, %v2439
  %v3068 = vpack.c.bf16 %v2444, %v2440
  %v3069 = vpack.c.bf16 %v2449, %v2445
  %v3070 = vpack.c.bf16 %v2450, %v2446
  %v3071 = vpack.c.bf16 %v2451, %v2447
  %v3072 = vpack.c.bf16 %v2452, %v2448
  %v3073 = vpack.c.bf16 %v2457, %v2453
  %v3074 = vpack.c.bf16 %v2458, %v2454
  %v3075 = vpack.c.bf16 %v2459, %v2455
  %v3076 = vpack.c.bf16 %v2460, %v2456
  %v3077 = vpack.c.bf16 %v2465, %v2461
  %v3078 = vpack.c.bf16 %v2466, %v2462
  %v3079 = vpack.c.bf16 %v2467, %v2463
  %v3080 = vpack.c.bf16 %v2468, %v2464
  %v3081 = vpack.c.bf16 %v2473, %v2469
  %v3082 = vpack.c.bf16 %v2474, %v2470
  %v3083 = vpack.c.bf16 %v2475, %v2471
  %v3084 = vpack.c.bf16 %v2476, %v2472
  %v3085 = vpack.c.bf16 %v2481, %v2477
  %v3086 = vpack.c.bf16 %v2482, %v2478
  %v3087 = vpack.c.bf16 %v2483, %v2479
  %v3088 = vpack.c.bf16 %v2484, %v2480
  %v3089 = vpack.c.bf16 %v2489, %v2485
  %v3090 = vpack.c.bf16 %v2490, %v2486
  %v3091 = vpack.c.bf16 %v2491, %v2487
  %v3092 = vpack.c.bf16 %v2492, %v2488
  %v3093 = vpack.c.bf16 %v2497, %v2493
  %v3094 = vpack.c.bf16 %v2498, %v2494
  %v3095 = vpack.c.bf16 %v2499, %v2495
  %v3096 = vpack.c.bf16 %v2500, %v2496
  %v3097 = vpack.c.bf16 %v2505, %v2501
  %v3098 = vpack.c.bf16 %v2506, %v2502
  %v3099 = vpack.c.bf16 %v2507, %v2503
  %v3100 = vpack.c.bf16 %v2508, %v2504
  %v3101 = vpack.c.bf16 %v2513, %v2509
  %v3102 = vpack.c.bf16 %v2514, %v2510
  %v3103 = vpack.c.bf16 %v2515, %v2511
  %v3104 = vpack.c.bf16 %v2516, %v2512
  %3105 = vmatprep.subr.bf16.mxu0 0
  %3106 = vmatpush1.bf16.msra.mxu0 %v2965
  %3107 = vmatprep.subr.bf16.mxu0 0
  %3108 = vmatpush1.bf16.msra.mxu0 %v2966
  %3109 = vmatprep.subr.bf16.mxu0 0
  %3110 = vmatpush1.bf16.msra.mxu0 %v2967
  %3111 = vmatprep.subr.bf16.mxu0 0
  %3112 = vmatpush1.bf16.msra.mxu0 %v2968
  %3113 = vmatprep.subr.bf16.mxu0 0
  %3114 = vmatpush1.bf16.msra.mxu0 %v2969
  %3115 = vmatprep.subr.bf16.mxu0 0
  %3116 = vmatpush1.bf16.msra.mxu0 %v2970
  %3117 = vmatprep.subr.bf16.mxu0 0
  %3118 = vmatpush1.bf16.msra.mxu0 %v2971
  %3119 = vmatprep.subr.bf16.mxu0 0
  %3120 = vmatpush1.bf16.msra.mxu0 %v2972
  %3121 = vmatprep.subr.bf16.mxu0 0
  %3122 = vmatpush1.bf16.msra.mxu0 %v2973
  %3123 = vmatprep.subr.bf16.mxu0 0
  %3124 = vmatpush1.bf16.msra.mxu0 %v2974
  %3125 = vmatprep.subr.bf16.mxu0 0
  %3126 = vmatpush1.bf16.msra.mxu0 %v2975
  %3127 = vmatprep.subr.bf16.mxu0 0
  %3128 = vmatpush1.bf16.msra.mxu0 %v2976
  %3129 = vmatprep.subr.bf16.mxu0 0
  %3130 = vmatpush1.bf16.msra.mxu0 %v2977
  %3131 = vmatprep.subr.bf16.mxu0 0
  %3132 = vmatpush1.bf16.msra.mxu0 %v2978
  %3133 = vmatprep.subr.bf16.mxu0 0
  %3134 = vmatpush1.bf16.msra.mxu0 %v2979
  %3135 = vmatprep.subr.bf16.mxu0 0
  %3136 = vmatpush1.bf16.msra.mxu0 %v2980
  %3137 = vmatprep.mubr.bf16.mxu0 %v3034
  %3138 = vmatmul.mubr.bf16.gmra.mrb[0].mxu0 %v3033
  %v3139 = vpop.f32.mrb[0].mxu0
  %v3140 = vadd.f32 0.0, %v3139
  %v3141 = vpop.f32.mrb[0].mxu0
  %v3142 = vpop.f32.mrb[0].mxu0
  %v3143 = vadd.f32 0.0, %v3142
  %v3144 = vpop.f32.mrb[0].mxu0
  %3145 = vmatprep.mubr.bf16.mxu0 %v3038
  %3146 = vmatmul.mubr.bf16.gmra.mrb[0].mxu0 %v3037
  %v3147 = vpop.f32.mrb[0].mxu0
  %v3148 = vadd.f32 0.0, %v3147
  %v3149 = vpop.f32.mrb[0].mxu0
  %v3150 = vpop.f32.mrb[0].mxu0
  %v3151 = vadd.f32 0.0, %v3150
  %v3152 = vpop.f32.mrb[0].mxu0
  %3153 = vmatprep.mubr.bf16.mxu0 %v3042
  %3154 = vmatmul.mubr.bf16.gmra.mrb[0].mxu0 %v3041
  %v3155 = vpop.f32.mrb[0].mxu0
  %v3156 = vadd.f32 0.0, %v3155
  %v3157 = vpop.f32.mrb[0].mxu0
  %v3158 = vpop.f32.mrb[0].mxu0
  %v3159 = vadd.f32 0.0, %v3158
  %v3160 = vpop.f32.mrb[0].mxu0
  %3161 = vmatprep.mubr.bf16.mxu0 %v3046
  %3162 = vmatmul.mubr.bf16.gmra.mrb[0].mxu0 %v3045
  %v3163 = vpop.f32.mrb[0].mxu0
  %v3164 = vadd.f32 0.0, %v3163
  %v3165 = vpop.f32.mrb[0].mxu0
  %v3166 = vpop.f32.mrb[0].mxu0
  %v3167 = vadd.f32 0.0, %v3166
  %v3168 = vpop.f32.mrb[0].mxu0
  %3169 = vmatprep.mubr.bf16.mxu0 %v3050
  %3170 = vmatmul.mubr.bf16.gmra.mrb[0].mxu0 %v3049
  %v3171 = vpop.f32.mrb[0].mxu0
  %v3172 = vadd.f32 0.0, %v3171
  %v3173 = vpop.f32.mrb[0].mxu0
  %v3174 = vpop.f32.mrb[0].mxu0
  %v3175 = vadd.f32 0.0, %v3174
  %v3176 = vpop.f32.mrb[0].mxu0
  %3177 = vmatprep.mubr.bf16.mxu0 %v3054
  %3178 = vmatmul.mubr.bf16.gmra.mrb[0].mxu0 %v3053
  %v3179 = vpop.f32.mrb[0].mxu0
  %v3180 = vadd.f32 0.0, %v3179
  %v3181 = vpop.f32.mrb[0].mxu0
  %v3182 = vpop.f32.mrb[0].mxu0
  %v3183 = vadd.f32 0.0, %v3182
  %v3184 = vpop.f32.mrb[0].mxu0
  %3185 = vmatprep.mubr.bf16.mxu0 %v3058
  %3186 = vmatmul.mubr.bf16.gmra.mrb[0].mxu0 %v3057
  %v3187 = vpop.f32.mrb[0].mxu0
  %v3188 = vadd.f32 0.0, %v3187
  %v3189 = vpop.f32.mrb[0].mxu0
  %v3190 = vpop.f32.mrb[0].mxu0
  %v3191 = vadd.f32 0.0, %v3190
  %v3192 = vpop.f32.mrb[0].mxu0
  %3193 = vmatprep.mubr.bf16.mxu0 %v3062
  %3194 = vmatmul.mubr.bf16.gmra.mrb[0].mxu0 %v3061
  %v3195 = vpop.f32.mrb[0].mxu0
  %v3196 = vadd.f32 0.0, %v3195
  %v3197 = vpop.f32.mrb[0].mxu0
  %v3198 = vpop.f32.mrb[0].mxu0
  %v3199 = vadd.f32 0.0, %v3198
  %v3200 = vpop.f32.mrb[0].mxu0
  %3201 = vmatprep.mubr.bf16.mxu0 %v3066
  %3202 = vmatmul.mubr.bf16.gmra.mrb[0].mxu0 %v3065
  %v3203 = vpop.f32.mrb[0].mxu0
  %v3204 = vadd.f32 0.0, %v3203
  %v3205 = vpop.f32.mrb[0].mxu0
  %v3206 = vpop.f32.mrb[0].mxu0
  %v3207 = vadd.f32 0.0, %v3206
  %v3208 = vpop.f32.mrb[0].mxu0
  %3209 = vmatprep.mubr.bf16.mxu0 %v3070
  %3210 = vmatmul.mubr.bf16.gmra.mrb[0].mxu0 %v3069
  %v3211 = vpop.f32.mrb[0].mxu0
  %v3212 = vadd.f32 0.0, %v3211
  %v3213 = vpop.f32.mrb[0].mxu0
  %v3214 = vpop.f32.mrb[0].mxu0
  %v3215 = vadd.f32 0.0, %v3214
  %v3216 = vpop.f32.mrb[0].mxu0
  %3217 = vmatprep.mubr.bf16.mxu0 %v3074
  %3218 = vmatmul.mubr.bf16.gmra.mrb[0].mxu0 %v3073
  %v3219 = vpop.f32.mrb[0].mxu0
  %v3220 = vadd.f32 0.0, %v3219
  %v3221 = vpop.f32.mrb[0].mxu0
  %v3222 = vpop.f32.mrb[0].mxu0
  %v3223 = vadd.f32 0.0, %v3222
  %v3224 = vpop.f32.mrb[0].mxu0
  %3225 = vmatprep.mubr.bf16.mxu0 %v3078
  %3226 = vmatmul.mubr.bf16.gmra.mrb[0].mxu0 %v3077
  %v3227 = vpop.f32.mrb[0].mxu0
  %v3228 = vadd.f32 0.0, %v3227
  %v3229 = vpop.f32.mrb[0].mxu0
  %v3230 = vpop.f32.mrb[0].mxu0
  %v3231 = vadd.f32 0.0, %v3230
  %v3232 = vpop.f32.mrb[0].mxu0
  %3233 = vmatprep.mubr.bf16.mxu0 %v3082
  %3234 = vmatmul.mubr.bf16.gmra.mrb[0].mxu0 %v3081
  %v3235 = vpop.f32.mrb[0].mxu0
  %v3236 = vadd.f32 0.0, %v3235
  %v3237 = vpop.f32.mrb[0].mxu0
  %v3238 = vpop.f32.mrb[0].mxu0
  %v3239 = vadd.f32 0.0, %v3238
  %v3240 = vpop.f32.mrb[0].mxu0
  %3241 = vmatprep.mubr.bf16.mxu0 %v3086
  %3242 = vmatmul.mubr.bf16.gmra.mrb[0].mxu0 %v3085
  %v3243 = vpop.f32.mrb[0].mxu0
  %v3244 = vadd.f32 0.0, %v3243
  %v3245 = vpop.f32.mrb[0].mxu0
  %v3246 = vpop.f32.mrb[0].mxu0
  %v3247 = vadd.f32 0.0, %v3246
  %v3248 = vpop.f32.mrb[0].mxu0
  %3249 = vmatprep.mubr.bf16.mxu0 %v3090
  %3250 = vmatmul.mubr.bf16.gmra.mrb[0].mxu0 %v3089
  %v3251 = vpop.f32.mrb[0].mxu0
  %v3252 = vadd.f32 0.0, %v3251
  %v3253 = vpop.f32.mrb[0].mxu0
  %v3254 = vpop.f32.mrb[0].mxu0
  %v3255 = vadd.f32 0.0, %v3254
  %v3256 = vpop.f32.mrb[0].mxu0
  %3257 = vmatprep.mubr.bf16.mxu0 %v3094
  %3258 = vmatmul.mubr.bf16.gmra.mrb[0].mxu0 %v3093
  %v3259 = vpop.f32.mrb[0].mxu0
  %v3260 = vadd.f32 0.0, %v3259
  %v3261 = vpop.f32.mrb[0].mxu0
  %v3262 = vpop.f32.mrb[0].mxu0
  %v3263 = vadd.f32 0.0, %v3262
  %v3264 = vpop.f32.mrb[0].mxu0
  %3265 = vmatprep.mubr.bf16.mxu0 %v3098
  %3266 = vmatmul.mubr.bf16.gmra.mrb[0].mxu0 %v3097
  %v3267 = vpop.f32.mrb[0].mxu0
  %v3268 = vadd.f32 0.0, %v3267
  %v3269 = vpop.f32.mrb[0].mxu0
  %v3270 = vpop.f32.mrb[0].mxu0
  %v3271 = vadd.f32 0.0, %v3270
  %v3272 = vpop.f32.mrb[0].mxu0
  %3273 = vmatprep.mubr.bf16.mxu0 %v3102
  %3274 = vmatmul.mubr.bf16.gmra.mrb[0].mxu0 %v3101
  %v3275 = vpop.f32.mrb[0].mxu0
  %v3276 = vadd.f32 0.0, %v3275
  %v3277 = vpop.f32.mrb[0].mxu0
  %v3278 = vpop.f32.mrb[0].mxu0
  %v3279 = vadd.f32 0.0, %v3278
  %v3280 = vpop.f32.mrb[0].mxu0
  %3281 = vdwg.mxu0
  %3282 = vmatprep.subr.bf16.mxu0 0
  %3283 = vmatpush1.bf16.msra.mxu0 %v2981
  %3284 = vmatprep.subr.bf16.mxu0 0
  %3285 = vmatpush1.bf16.msra.mxu0 %v2982
  %3286 = vmatprep.subr.bf16.mxu0 0
  %3287 = vmatpush1.bf16.msra.mxu0 %v2983
  %3288 = vmatprep.subr.bf16.mxu0 0
  %3289 = vmatpush1.bf16.msra.mxu0 %v2984
  %3290 = vmatprep.subr.bf16.mxu0 0
  %3291 = vmatpush1.bf16.msra.mxu0 %v2985
  %3292 = vmatprep.subr.bf16.mxu0 0
  %3293 = vmatpush1.bf16.msra.mxu0 %v2986
  %3294 = vmatprep.subr.bf16.mxu0 0
  %3295 = vmatpush1.bf16.msra.mxu0 %v2987
  %3296 = vmatprep.subr.bf16.mxu0 0
  %3297 = vmatpush1.bf16.msra.mxu0 %v2988
  %3298 = vmatprep.subr.bf16.mxu0 0
  %3299 = vmatpush1.bf16.msra.mxu0 %v2989
  %3300 = vmatprep.subr.bf16.mxu0 0
  %3301 = vmatpush1.bf16.msra.mxu0 %v2990
  %3302 = vmatprep.subr.bf16.mxu0 0
  %3303 = vmatpush1.bf16.msra.mxu0 %v2991
  %3304 = vmatprep.subr.bf16.mxu0 0
  %3305 = vmatpush1.bf16.msra.mxu0 %v2992
  %3306 = vmatprep.subr.bf16.mxu0 0
  %3307 = vmatpush1.bf16.msra.mxu0 %v2993
  %3308 = vmatprep.subr.bf16.mxu0 0
  %3309 = vmatpush1.bf16.msra.mxu0 %v2994
  %3310 = vmatprep.subr.bf16.mxu0 0
  %3311 = vmatpush1.bf16.msra.mxu0 %v2995
  %3312 = vmatprep.subr.bf16.mxu0 0
  %3313 = vmatpush1.bf16.msra.mxu0 %v2996
  %3314 = vmatprep.mubr.bf16.mxu0 %v3036
  %3315 = vmatmul.mubr.bf16.gmra.mrb[0].mxu0 %v3035
  %v3316 = vpop.f32.mrb[0].mxu0
  %v3317 = vadd.f32 %v3140, %v3316
  %v3318 = vpop.f32.mrb[0].mxu0
  %v3319 = vpop.f32.mrb[0].mxu0
  %v3320 = vadd.f32 %v3143, %v3319
  %v3321 = vpop.f32.mrb[0].mxu0
  %3322 = vmatprep.mubr.bf16.mxu0 %v3040
  %3323 = vmatmul.mubr.bf16.gmra.mrb[0].mxu0 %v3039
  %v3324 = vpop.f32.mrb[0].mxu0
  %v3325 = vadd.f32 %v3148, %v3324
  %v3326 = vpop.f32.mrb[0].mxu0
  %v3327 = vpop.f32.mrb[0].mxu0
  %v3328 = vadd.f32 %v3151, %v3327
  %v3329 = vpop.f32.mrb[0].mxu0
  %3330 = vmatprep.mubr.bf16.mxu0 %v3044
  %3331 = vmatmul.mubr.bf16.gmra.mrb[0].mxu0 %v3043
  %v3332 = vpop.f32.mrb[0].mxu0
  %v3333 = vadd.f32 %v3156, %v3332
  %v3334 = vpop.f32.mrb[0].mxu0
  %v3335 = vpop.f32.mrb[0].mxu0
  %v3336 = vadd.f32 %v3159, %v3335
  %v3337 = vpop.f32.mrb[0].mxu0
  %3338 = vmatprep.mubr.bf16.mxu0 %v3048
  %3339 = vmatmul.mubr.bf16.gmra.mrb[0].mxu0 %v3047
  %v3340 = vpop.f32.mrb[0].mxu0
  %v3341 = vadd.f32 %v3164, %v3340
  %v3342 = vpop.f32.mrb[0].mxu0
  %v3343 = vpop.f32.mrb[0].mxu0
  %v3344 = vadd.f32 %v3167, %v3343
  %v3345 = vpop.f32.mrb[0].mxu0
  %3346 = vmatprep.mubr.bf16.mxu0 %v3052
  %3347 = vmatmul.mubr.bf16.gmra.mrb[0].mxu0 %v3051
  %v3348 = vpop.f32.mrb[0].mxu0
  %v3349 = vadd.f32 %v3172, %v3348
  %v3350 = vpop.f32.mrb[0].mxu0
  %v3351 = vpop.f32.mrb[0].mxu0
  %v3352 = vadd.f32 %v3175, %v3351
  %v3353 = vpop.f32.mrb[0].mxu0
  %3354 = vmatprep.mubr.bf16.mxu0 %v3056
  %3355 = vmatmul.mubr.bf16.gmra.mrb[0].mxu0 %v3055
  %v3356 = vpop.f32.mrb[0].mxu0
  %v3357 = vadd.f32 %v3180, %v3356
  %v3358 = vpop.f32.mrb[0].mxu0
  %v3359 = vpop.f32.mrb[0].mxu0
  %v3360 = vadd.f32 %v3183, %v3359
  %v3361 = vpop.f32.mrb[0].mxu0
  %3362 = vmatprep.mubr.bf16.mxu0 %v3060
  %3363 = vmatmul.mubr.bf16.gmra.mrb[0].mxu0 %v3059
  %v3364 = vpop.f32.mrb[0].mxu0
  %v3365 = vadd.f32 %v3188, %v3364
  %v3366 = vpop.f32.mrb[0].mxu0
  %v3367 = vpop.f32.mrb[0].mxu0
  %v3368 = vadd.f32 %v3191, %v3367
  %v3369 = vpop.f32.mrb[0].mxu0
  %3370 = vmatprep.mubr.bf16.mxu0 %v3064
  %3371 = vmatmul.mubr.bf16.gmra.mrb[0].mxu0 %v3063
  %v3372 = vpop.f32.mrb[0].mxu0
  %v3373 = vadd.f32 %v3196, %v3372
  %v3374 = vpop.f32.mrb[0].mxu0
  %v3375 = vpop.f32.mrb[0].mxu0
  %v3376 = vadd.f32 %v3199, %v3375
  %v3377 = vpop.f32.mrb[0].mxu0
  %3378 = vmatprep.mubr.bf16.mxu0 %v3068
  %3379 = vmatmul.mubr.bf16.gmra.mrb[0].mxu0 %v3067
  %v3380 = vpop.f32.mrb[0].mxu0
  %v3381 = vadd.f32 %v3204, %v3380
  %v3382 = vpop.f32.mrb[0].mxu0
  %v3383 = vpop.f32.mrb[0].mxu0
  %v3384 = vadd.f32 %v3207, %v3383
  %v3385 = vpop.f32.mrb[0].mxu0
  %3386 = vmatprep.mubr.bf16.mxu0 %v3072
  %3387 = vmatmul.mubr.bf16.gmra.mrb[0].mxu0 %v3071
  %v3388 = vpop.f32.mrb[0].mxu0
  %v3389 = vadd.f32 %v3212, %v3388
  %v3390 = vpop.f32.mrb[0].mxu0
  %v3391 = vpop.f32.mrb[0].mxu0
  %v3392 = vadd.f32 %v3215, %v3391
  %v3393 = vpop.f32.mrb[0].mxu0
  %3394 = vmatprep.mubr.bf16.mxu0 %v3076
  %3395 = vmatmul.mubr.bf16.gmra.mrb[0].mxu0 %v3075
  %v3396 = vpop.f32.mrb[0].mxu0
  %v3397 = vadd.f32 %v3220, %v3396
  %v3398 = vpop.f32.mrb[0].mxu0
  %v3399 = vpop.f32.mrb[0].mxu0
  %v3400 = vadd.f32 %v3223, %v3399
  %v3401 = vpop.f32.mrb[0].mxu0
  %3402 = vmatprep.mubr.bf16.mxu0 %v3080
  %3403 = vmatmul.mubr.bf16.gmra.mrb[0].mxu0 %v3079
  %v3404 = vpop.f32.mrb[0].mxu0
  %v3405 = vadd.f32 %v3228, %v3404
  %v3406 = vpop.f32.mrb[0].mxu0
  %v3407 = vpop.f32.mrb[0].mxu0
  %v3408 = vadd.f32 %v3231, %v3407
  %v3409 = vpop.f32.mrb[0].mxu0
  %3410 = vmatprep.mubr.bf16.mxu0 %v3084
  %3411 = vmatmul.mubr.bf16.gmra.mrb[0].mxu0 %v3083
  %v3412 = vpop.f32.mrb[0].mxu0
  %v3413 = vadd.f32 %v3236, %v3412
  %v3414 = vpop.f32.mrb[0].mxu0
  %v3415 = vpop.f32.mrb[0].mxu0
  %v3416 = vadd.f32 %v3239, %v3415
  %v3417 = vpop.f32.mrb[0].mxu0
  %3418 = vmatprep.mubr.bf16.mxu0 %v3088
  %3419 = vmatmul.mubr.bf16.gmra.mrb[0].mxu0 %v3087
  %v3420 = vpop.f32.mrb[0].mxu0
  %v3421 = vadd.f32 %v3244, %v3420
  %v3422 = vpop.f32.mrb[0].mxu0
  %v3423 = vpop.f32.mrb[0].mxu0
  %v3424 = vadd.f32 %v3247, %v3423
  %v3425 = vpop.f32.mrb[0].mxu0
  %3426 = vmatprep.mubr.bf16.mxu0 %v3092
  %3427 = vmatmul.mubr.bf16.gmra.mrb[0].mxu0 %v3091
  %v3428 = vpop.f32.mrb[0].mxu0
  %v3429 = vadd.f32 %v3252, %v3428
  %v3430 = vpop.f32.mrb[0].mxu0
  %v3431 = vpop.f32.mrb[0].mxu0
  %v3432 = vadd.f32 %v3255, %v3431
  %v3433 = vpop.f32.mrb[0].mxu0
  %3434 = vmatprep.mubr.bf16.mxu0 %v3096
  %3435 = vmatmul.mubr.bf16.gmra.mrb[0].mxu0 %v3095
  %v3436 = vpop.f32.mrb[0].mxu0
  %v3437 = vadd.f32 %v3260, %v3436
  %v3438 = vpop.f32.mrb[0].mxu0
  %v3439 = vpop.f32.mrb[0].mxu0
  %v3440 = vadd.f32 %v3263, %v3439
  %v3441 = vpop.f32.mrb[0].mxu0
  %3442 = vmatprep.mubr.bf16.mxu0 %v3100
  %3443 = vmatmul.mubr.bf16.gmra.mrb[0].mxu0 %v3099
  %v3444 = vpop.f32.mrb[0].mxu0
  %v3445 = vadd.f32 %v3268, %v3444
  %v3446 = vpop.f32.mrb[0].mxu0
  %v3447 = vpop.f32.mrb[0].mxu0
  %v3448 = vadd.f32 %v3271, %v3447
  %v3449 = vpop.f32.mrb[0].mxu0
  %3450 = vmatprep.mubr.bf16.mxu0 %v3104
  %3451 = vmatmul.mubr.bf16.gmra.mrb[0].mxu0 %v3103
  %v3452 = vpop.f32.mrb[0].mxu0
  %v3453 = vadd.f32 %v3276, %v3452
  %v3454 = vpop.f32.mrb[0].mxu0
  %v3455 = vpop.f32.mrb[0].mxu0
  %v3456 = vadd.f32 %v3279, %v3455
  %v3457 = vpop.f32.mrb[0].mxu0
  %3458 = vdwg.mxu0
  %v3459 = vadd.f32 %v2997, %v3317
  %v3460 = vadd.f32 %v2998, %v3320
  %v3461 = vadd.f32 %v2999, %v3325
  %v3462 = vadd.f32 %v3000, %v3328
  %v3463 = vadd.f32 %v3001, %v3333
  %v3464 = vadd.f32 %v3002, %v3336
  %v3465 = vadd.f32 %v3003, %v3341
  %v3466 = vadd.f32 %v3004, %v3344
  %v3467 = vadd.f32 %v3005, %v3349
  %v3468 = vadd.f32 %v3006, %v3352
  %v3469 = vadd.f32 %v3007, %v3357
  %v3470 = vadd.f32 %v3008, %v3360
  %v3471 = vadd.f32 %v3009, %v3365
  %v3472 = vadd.f32 %v3010, %v3368
  %v3473 = vadd.f32 %v3011, %v3373
  %v3474 = vadd.f32 %v3012, %v3376
  %v3475 = vadd.f32 %v3013, %v3381
  %v3476 = vadd.f32 %v3014, %v3384
  %v3477 = vadd.f32 %v3015, %v3389
  %v3478 = vadd.f32 %v3016, %v3392
  %v3479 = vadd.f32 %v3017, %v3397
  %v3480 = vadd.f32 %v3018, %v3400
  %v3481 = vadd.f32 %v3019, %v3405
  %v3482 = vadd.f32 %v3020, %v3408
  %v3483 = vadd.f32 %v3021, %v3413
  %v3484 = vadd.f32 %v3022, %v3416
  %v3485 = vadd.f32 %v3023, %v3421
  %v3486 = vadd.f32 %v3024, %v3424
  %v3487 = vadd.f32 %v3025, %v3429
  %v3488 = vadd.f32 %v3026, %v3432
  %v3489 = vadd.f32 %v3027, %v3437
  %v3490 = vadd.f32 %v3028, %v3440
  %v3491 = vadd.f32 %v3029, %v3445
  %v3492 = vadd.f32 %v3030, %v3448
  %v3493 = vadd.f32 %v3031, %v3453
  %v3494 = vadd.f32 %v3032, %v3456
  %3495 = vst.msk [vmem:[#allocation2] sm:$0xff] %vm589, %v3459
  %3496 = vst.msk [vmem:[#allocation2 + $0x8] sm:$0xff] %vm589, %v3460
  %3497 = vst.msk [vmem:[#allocation2 + $0x10] sm:$0xff] %vm589, %v3461
  %3498 = vst.msk [vmem:[#allocation2 + $0x18] sm:$0xff] %vm589, %v3462
  %3499 = vst.msk [vmem:[#allocation2 + $0x20] sm:$0xff] %vm589, %v3463
  %3500 = vst.msk [vmem:[#allocation2 + $0x28] sm:$0xff] %vm589, %v3464
  %3501 = vst.msk [vmem:[#allocation2 + $0x30] sm:$0xff] %vm589, %v3465
  %3502 = vst.msk [vmem:[#allocation2 + $0x38] sm:$0xff] %vm589, %v3466
  %3503 = vst.msk [vmem:[#allocation2 + $0x40] sm:$0xff] %vm589, %v3467
  %3504 = vst.msk [vmem:[#allocation2 + $0x48] sm:$0xff] %vm589, %v3468
  %3505 = vst.msk [vmem:[#allocation2 + $0x50] sm:$0xff] %vm589, %v3469
  %3506 = vst.msk [vmem:[#allocation2 + $0x58] sm:$0xff] %vm589, %v3470
  %3507 = vst.msk [vmem:[#allocation2 + $0x60] sm:$0xff] %vm589, %v3471
  %3508 = vst.msk [vmem:[#allocation2 + $0x68] sm:$0xff] %vm589, %v3472
  %3509 = vst.msk [vmem:[#allocation2 + $0x70] sm:$0xff] %vm589, %v3473
  %3510 = vst.msk [vmem:[#allocation2 + $0x78] sm:$0xff] %vm589, %v3474
  %3511 = vst.msk [vmem:[#allocation2 + $0x80] sm:$0xff] %vm589, %v3475
  %3512 = vst.msk [vmem:[#allocation2 + $0x88] sm:$0xff] %vm589, %v3476
  %3513 = vst.msk [vmem:[#allocation2 + $0x90] sm:$0xff] %vm589, %v3477
  %3514 = vst.msk [vmem:[#allocation2 + $0x98] sm:$0xff] %vm589, %v3478
  %3515 = vst.msk [vmem:[#allocation2 + $0xa0] sm:$0xff] %vm589, %v3479
  %3516 = vst.msk [vmem:[#allocation2 + $0xa8] sm:$0xff] %vm589, %v3480
  %3517 = vst.msk [vmem:[#allocation2 + $0xb0] sm:$0xff] %vm589, %v3481
  %3518 = vst.msk [vmem:[#allocation2 + $0xb8] sm:$0xff] %vm589, %v3482
  %3519 = vst.msk [vmem:[#allocation2 + $0xc0] sm:$0xff] %vm589, %v3483
  %3520 = vst.msk [vmem:[#allocation2 + $0xc8] sm:$0xff] %vm589, %v3484
  %3521 = vst.msk [vmem:[#allocation2 + $0xd0] sm:$0xff] %vm589, %v3485
  %3522 = vst.msk [vmem:[#allocation2 + $0xd8] sm:$0xff] %vm589, %v3486
  %3523 = vst.msk [vmem:[#allocation2 + $0xe0] sm:$0xff] %vm589, %v3487
  %3524 = vst.msk [vmem:[#allocation2 + $0xe8] sm:$0xff] %vm589, %v3488
  %3525 = vst.msk [vmem:[#allocation2 + $0xf0] sm:$0xff] %vm589, %v3489
  %3526 = vst.msk [vmem:[#allocation2 + $0xf8] sm:$0xff] %vm589, %v3490
  %3527 = vst.msk [vmem:[#allocation2 + $0x100] sm:$0xff] %vm589, %v3491
  %3528 = vst.msk [vmem:[#allocation2 + $0x108] sm:$0xff] %vm589, %v3492
  %3529 = vst.msk [vmem:[#allocation2 + $0x110] sm:$0xff] %vm589, %v3493
  %3530 = vst.msk [vmem:[#allocation2 + $0x118] sm:$0xff] %vm589, %v3494
  // Predicated region
  $region54: #{tpu_custom_call.1} parent=0 // pred_check
    %p3531 = pneg %p42
  $region55: #{tpu_custom_call.1} parent=0 // pred_check_branch
    %3533 = sbr.rel (%p3531) target = $region57
  $region56: #{tpu_custom_call.1} parent=0 // pred_region
    %v3534 = vld [vmem:[#allocation2] sm:$0xff]
    %v3535 = vld [vmem:[#allocation2 + $0x8] sm:$0xff]
    %v3536 = vld [vmem:[#allocation2 + $0x10] sm:$0xff]
    %v3537 = vld [vmem:[#allocation2 + $0x18] sm:$0xff]
    %v3538 = vld [vmem:[#allocation2 + $0x20] sm:$0xff]
    %v3539 = vld [vmem:[#allocation2 + $0x28] sm:$0xff]
    %v3540 = vld [vmem:[#allocation2 + $0x30] sm:$0xff]
    %v3541 = vld [vmem:[#allocation2 + $0x38] sm:$0xff]
    %v3542 = vld [vmem:[#allocation2 + $0x40] sm:$0xff]
    %v3543 = vld [vmem:[#allocation2 + $0x48] sm:$0xff]
    %v3544 = vld [vmem:[#allocation2 + $0x50] sm:$0xff]
    %v3545 = vld [vmem:[#allocation2 + $0x58] sm:$0xff]
    %v3546 = vld [vmem:[#allocation2 + $0x60] sm:$0xff]
    %v3547 = vld [vmem:[#allocation2 + $0x68] sm:$0xff]
    %v3548 = vld [vmem:[#allocation2 + $0x70] sm:$0xff]
    %v3549 = vld [vmem:[#allocation2 + $0x78] sm:$0xff]
    %v3550 = vld [vmem:[#allocation2 + $0x80] sm:$0xff]
    %v3551 = vld [vmem:[#allocation2 + $0x88] sm:$0xff]
    %v3552 = vld [vmem:[#allocation2 + $0x90] sm:$0xff]
    %v3553 = vld [vmem:[#allocation2 + $0x98] sm:$0xff]
    %v3554 = vld [vmem:[#allocation2 + $0xa0] sm:$0xff]
    %v3555 = vld [vmem:[#allocation2 + $0xa8] sm:$0xff]
    %v3556 = vld [vmem:[#allocation2 + $0xb0] sm:$0xff]
    %v3557 = vld [vmem:[#allocation2 + $0xb8] sm:$0xff]
    %v3558 = vld [vmem:[#allocation2 + $0xc0] sm:$0xff]
    %v3559 = vld [vmem:[#allocation2 + $0xc8] sm:$0xff]
    %v3560 = vld [vmem:[#allocation2 + $0xd0] sm:$0xff]
    %v3561 = vld [vmem:[#allocation2 + $0xd8] sm:$0xff]
    %v3562 = vld [vmem:[#allocation2 + $0xe0] sm:$0xff]
    %v3563 = vld [vmem:[#allocation2 + $0xe8] sm:$0xff]
    %v3564 = vld [vmem:[#allocation2 + $0xf0] sm:$0xff]
    %v3565 = vld [vmem:[#allocation2 + $0xf8] sm:$0xff]
    %v3566 = vld [vmem:[#allocation2 + $0x100] sm:$0xff]
    %v3567 = vld [vmem:[#allocation2 + $0x108] sm:$0xff]
    %v3568 = vld [vmem:[#allocation2 + $0x110] sm:$0xff]
    %v3569 = vld [vmem:[#allocation2 + $0x118] sm:$0xff]
    %v3570 = vmul.f32 %v3534, 0.1
    %v3571 = vmul.f32 %v3535, 0.1
    %v3572 = vmul.f32 %v3536, 0.1
    %v3573 = vmul.f32 %v3537, 0.1
    %v3574 = vmul.f32 %v3538, 0.1
    %v3575 = vmul.f32 %v3539, 0.1
    %v3576 = vmul.f32 %v3540, 0.1
    %v3577 = vmul.f32 %v3541, 0.1
    %v3578 = vmul.f32 %v3542, 0.1
    %v3579 = vmul.f32 %v3543, 0.1
    %v3580 = vmul.f32 %v3544, 0.1
    %v3581 = vmul.f32 %v3545, 0.1
    %v3582 = vmul.f32 %v3546, 0.1
    %v3583 = vmul.f32 %v3547, 0.1
    %v3584 = vmul.f32 %v3548, 0.1
    %v3585 = vmul.f32 %v3549, 0.1
    %v3586 = vmul.f32 %v3550, 0.1
    %v3587 = vmul.f32 %v3551, 0.1
    %v3588 = vmul.f32 %v3552, 0.1
    %v3589 = vmul.f32 %v3553, 0.1
    %v3590 = vmul.f32 %v3554, 0.1
    %v3591 = vmul.f32 %v3555, 0.1
    %v3592 = vmul.f32 %v3556, 0.1
    %v3593 = vmul.f32 %v3557, 0.1
    %v3594 = vmul.f32 %v3558, 0.1
    %v3595 = vmul.f32 %v3559, 0.1
    %v3596 = vmul.f32 %v3560, 0.1
    %v3597 = vmul.f32 %v3561, 0.1
    %v3598 = vmul.f32 %v3562, 0.1
    %v3599 = vmul.f32 %v3563, 0.1
    %v3600 = vmul.f32 %v3564, 0.1
    %v3601 = vmul.f32 %v3565, 0.1
    %v3602 = vmul.f32 %v3566, 0.1
    %v3603 = vmul.f32 %v3567, 0.1
    %v3604 = vmul.f32 %v3568, 0.1
    %v3605 = vmul.f32 %v3569, 0.1
    %v3606 = vld [vmem:[%s8] sm:$0xff]
    %v3607 = vld [vmem:[%s8 + $0x8] sm:$0xf]
    %v3608 = vld [vmem:[%s8 + $0xc] sm:$0xff]
    %v3609 = vld [vmem:[%s8 + $0x14] sm:$0xf]
    %v3610 = vld [vmem:[%s8 + $0x18] sm:$0xff]
    %v3611 = vld [vmem:[%s8 + $0x20] sm:$0xf]
    %v3612 = vld [vmem:[%s8 + $0x24] sm:$0xff]
    %v3613 = vld [vmem:[%s8 + $0x2c] sm:$0xf]
    %v3614 = vpack.c.bf16 %v3571, %v3570
    %v3615 = vpack.c.bf16 %v3573, %v3572
    %v3616 = vpack.c.bf16 %v3575, %v3574
    %v3617 = vpack.c.bf16 %v3577, %v3576
    %v3618 = vpack.c.bf16 %v3579, %v3578
    %v3619 = vpack.c.bf16 %v3581, %v3580
    %v3620 = vpack.c.bf16 %v3583, %v3582
    %v3621 = vpack.c.bf16 %v3585, %v3584
    %v3622 = vpack.c.bf16 %v3587, %v3586
    %v3623 = vpack.c.bf16 %v3589, %v3588
    %v3624 = vpack.c.bf16 %v3591, %v3590
    %v3625 = vpack.c.bf16 %v3593, %v3592
    %v3626 = vpack.c.bf16 %v3595, %v3594
    %v3627 = vpack.c.bf16 %v3597, %v3596
    %v3628 = vpack.c.bf16 %v3599, %v3598
    %v3629 = vpack.c.bf16 %v3601, %v3600
    %v3630 = vpack.c.bf16 %v3603, %v3602
    %v3631 = vpack.c.bf16 %v3605, %v3604
    %v3632 = vld [vmem:[%s9] sm:$0xf]
    %v3633 = vld [vmem:[%s9 + $0x4] sm:$0xf]
    %v3634 = vld [vmem:[%s9 + $0x8] sm:$0xf]
    %v3635 = vld [vmem:[%s9 + $0xc] sm:$0xf]
    %v3636 = vld [vmem:[%s0] sm:$0xff]
    %v3637 = vld [vmem:[%s0 + $0x8] sm:$0xff]
    %v3638 = vld [vmem:[%s0 + $0x10] sm:$0xff]
    %v3639 = vld [vmem:[%s0 + $0x18] sm:$0xff]
    %v3640 = vpack.c.bf16 %v3637, %v3636
    %v3641 = vpack.c.bf16 %v3639, %v3638
    %v3646 = vunpack.c.l.b16 %v3632
    %v3647 = vunpack.c.l.b16 %v3633
    %v3648 = vunpack.c.l.b16 %v3634
    %v3649 = vunpack.c.l.b16 %v3635
    %v3650 = vpack.c.b16 %v3647, %v3646
    %v3651 = vpack.c.b16 %v3649, %v3648
    %v3653 = vsel %vm966, %v3650, 0
    %v3656 = vsel %vm966, %v3651, 0
    %3658 = vmatprep.subr.bf16.mxu0 0
    %3659 = vmatpush1.bf16.msra.mxu0 %v3640
    %3660 = vmatprep.subr.bf16.mxu0 0
    %3661 = vmatpush1.bf16.msra.mxu0 %v3641
    %3662 = vmatprep.subr.bf16.mxu0 0
    %3663 = vmatpush1.bf16.msra.mxu0 0
    %3664 = vmatprep.subr.bf16.mxu0 0
    %3665 = vmatpush1.bf16.msra.mxu0 0
    %3666 = vmatprep.subr.bf16.mxu0 0
    %3667 = vmatpush1.bf16.msra.mxu0 0
    %3668 = vmatprep.subr.bf16.mxu0 0
    %3669 = vmatpush1.bf16.msra.mxu0 0
    %3670 = vmatprep.subr.bf16.mxu0 0
    %3671 = vmatpush1.bf16.msra.mxu0 0
    %3672 = vmatprep.subr.bf16.mxu0 0
    %3673 = vmatpush1.bf16.msra.mxu0 0
    %3674 = vmatprep.subr.bf16.mxu0 0
    %3675 = vmatpush1.bf16.msra.mxu0 0
    %3676 = vmatprep.subr.bf16.mxu0 0
    %3677 = vmatpush1.bf16.msra.mxu0 0
    %3678 = vmatprep.subr.bf16.mxu0 0
    %3679 = vmatpush1.bf16.msra.mxu0 0
    %3680 = vmatprep.subr.bf16.mxu0 0
    %3681 = vmatpush1.bf16.msra.mxu0 0
    %3682 = vmatprep.subr.bf16.mxu0 0
    %3683 = vmatpush1.bf16.msra.mxu0 0
    %3684 = vmatprep.subr.bf16.mxu0 0
    %3685 = vmatpush1.bf16.msra.mxu0 0
    %3686 = vmatprep.subr.bf16.mxu0 0
    %3687 = vmatpush1.bf16.msra.mxu0 0
    %3688 = vmatprep.subr.bf16.mxu0 0
    %3689 = vmatpush1.bf16.msra.mxu0 0
    %3690 = vmatprep.mubr.bf16.mxu0 0
    %3691 = vmatmul.mubr.bf16.gmra.mrb[0].mxu0 %v3653
    %v3692 = vpop.f32.mrb[0].mxu0
    %v3693 = vadd.f32 0.0, %v3692
    %v3694 = vpop.f32.mrb[0].mxu0
    %v3695 = vpop.f32.mrb[0].mxu0
    %v3696 = vadd.f32 0.0, %v3695
    %v3697 = vpop.f32.mrb[0].mxu0
    %3698 = vmatprep.mubr.bf16.mxu0 0
    %3699 = vmatmul.mubr.bf16.gmra.mrb[0].mxu0 %v3656
    %v3700 = vpop.f32.mrb[0].mxu0
    %v3701 = vadd.f32 0.0, %v3700
    %v3702 = vpop.f32.mrb[0].mxu0
    %v3703 = vpop.f32.mrb[0].mxu0
    %v3704 = vadd.f32 0.0, %v3703
    %v3705 = vpop.f32.mrb[0].mxu0
    %3706 = vdwg.mxu0
    %v3715 = vunpack.c.l.b16 %v3606
    %v3716 = vunpack.c.h.b16 %v3606
    %v3717 = vunpack.c.l.b16 %v3607
    %v3718 = vunpack.c.l.b16 %v3608
    %v3719 = vunpack.c.h.b16 %v3608
    %v3720 = vunpack.c.l.b16 %v3609
    %v3721 = vunpack.c.l.b16 %v3610
    %v3722 = vunpack.c.h.b16 %v3610
    %v3723 = vunpack.c.l.b16 %v3611
    %v3724 = vunpack.c.l.b16 %v3612
    %v3725 = vunpack.c.h.b16 %v3612
    %v3726 = vunpack.c.l.b16 %v3613
    %v3727 = vpack.c.b16 %v3718, %v3715
    %v3728 = vpack.c.b16 %v3719, %v3716
    %v3729 = vpack.c.b16 %v3720, %v3717
    %v3730 = vpack.c.b16 %v3724, %v3721
    %v3731 = vpack.c.b16 %v3725, %v3722
    %v3732 = vpack.c.b16 %v3726, %v3723
    %v3738 = vsel %vm966, %v3729, 0
    %v3741 = vsel %vm966, %v3732, 0
    %3743 = vmatprep.subr.bf16.mxu0 0
    %3744 = vmatpush1.bf16.msra.mxu0 %v3614
    %3745 = vmatprep.subr.bf16.mxu0 0
    %3746 = vmatpush1.bf16.msra.mxu0 %v3615
    %3747 = vmatprep.subr.bf16.mxu0 0
    %3748 = vmatpush1.bf16.msra.mxu0 %v3616
    %3749 = vmatprep.subr.bf16.mxu0 0
    %3750 = vmatpush1.bf16.msra.mxu0 %v3617
    %3751 = vmatprep.subr.bf16.mxu0 0
    %3752 = vmatpush1.bf16.msra.mxu0 %v3618
    %3753 = vmatprep.subr.bf16.mxu0 0
    %3754 = vmatpush1.bf16.msra.mxu0 %v3619
    %3755 = vmatprep.subr.bf16.mxu0 0
    %3756 = vmatpush1.bf16.msra.mxu0 %v3620
    %3757 = vmatprep.subr.bf16.mxu0 0
    %3758 = vmatpush1.bf16.msra.mxu0 %v3621
    %3759 = vmatprep.subr.bf16.mxu0 0
    %3760 = vmatpush1.bf16.msra.mxu0 %v3622
    %3761 = vmatprep.subr.bf16.mxu0 0
    %3762 = vmatpush1.bf16.msra.mxu0 %v3623
    %3763 = vmatprep.subr.bf16.mxu0 0
    %3764 = vmatpush1.bf16.msra.mxu0 %v3624
    %3765 = vmatprep.subr.bf16.mxu0 0
    %3766 = vmatpush1.bf16.msra.mxu0 %v3625
    %3767 = vmatprep.subr.bf16.mxu0 0
    %3768 = vmatpush1.bf16.msra.mxu0 %v3626
    %3769 = vmatprep.subr.bf16.mxu0 0
    %3770 = vmatpush1.bf16.msra.mxu0 %v3627
    %3771 = vmatprep.subr.bf16.mxu0 0
    %3772 = vmatpush1.bf16.msra.mxu0 %v3628
    %3773 = vmatprep.subr.bf16.mxu0 0
    %3774 = vmatpush1.bf16.msra.mxu0 %v3629
    %3775 = vmatprep.mubr.bf16.mxu0 %v3728
    %3776 = vmatmul.mubr.bf16.gmra.mrb[0].mxu0 %v3727
    %v3777 = vpop.f32.mrb[0].mxu0
    %v3778 = vadd.f32 %v3693, %v3777
    %v3779 = vpop.f32.mrb[0].mxu0
    %v3780 = vpop.f32.mrb[0].mxu0
    %v3781 = vadd.f32 %v3696, %v3780
    %v3782 = vpop.f32.mrb[0].mxu0
    %3783 = vmatprep.mubr.bf16.mxu0 %v3731
    %3784 = vmatmul.mubr.bf16.gmra.mrb[0].mxu0 %v3730
    %v3785 = vpop.f32.mrb[0].mxu0
    %v3786 = vadd.f32 %v3701, %v3785
    %v3787 = vpop.f32.mrb[0].mxu0
    %v3788 = vpop.f32.mrb[0].mxu0
    %v3789 = vadd.f32 %v3704, %v3788
    %v3790 = vpop.f32.mrb[0].mxu0
    %3791 = vdwg.mxu0
    %3792 = vmatprep.subr.bf16.mxu0 0
    %3793 = vmatpush1.bf16.msra.mxu0 %v3630
    %3794 = vmatprep.subr.bf16.mxu0 0
    %3795 = vmatpush1.bf16.msra.mxu0 %v3631
    %3796 = vmatprep.subr.bf16.mxu0 0
    %3797 = vmatpush1.bf16.msra.mxu0 0
    %3798 = vmatprep.subr.bf16.mxu0 0
    %3799 = vmatpush1.bf16.msra.mxu0 0
    %3800 = vmatprep.subr.bf16.mxu0 0
    %3801 = vmatpush1.bf16.msra.mxu0 0
    %3802 = vmatprep.subr.bf16.mxu0 0
    %3803 = vmatpush1.bf16.msra.mxu0 0
    %3804 = vmatprep.subr.bf16.mxu0 0
    %3805 = vmatpush1.bf16.msra.mxu0 0
    %3806 = vmatprep.subr.bf16.mxu0 0
    %3807 = vmatpush1.bf16.msra.mxu0 0
    %3808 = vmatprep.subr.bf16.mxu0 0
    %3809 = vmatpush1.bf16.msra.mxu0 0
    %3810 = vmatprep.subr.bf16.mxu0 0
    %3811 = vmatpush1.bf16.msra.mxu0 0
    %3812 = vmatprep.subr.bf16.mxu0 0
    %3813 = vmatpush1.bf16.msra.mxu0 0
    %3814 = vmatprep.subr.bf16.mxu0 0
    %3815 = vmatpush1.bf16.msra.mxu0 0
    %3816 = vmatprep.subr.bf16.mxu0 0
    %3817 = vmatpush1.bf16.msra.mxu0 0
    %3818 = vmatprep.subr.bf16.mxu0 0
    %3819 = vmatpush1.bf16.msra.mxu0 0
    %3820 = vmatprep.subr.bf16.mxu0 0
    %3821 = vmatpush1.bf16.msra.mxu0 0
    %3822 = vmatprep.subr.bf16.mxu0 0
    %3823 = vmatpush1.bf16.msra.mxu0 0
    %3824 = vmatprep.mubr.bf16.mxu0 0
    %3825 = vmatmul.mubr.bf16.gmra.mrb[0].mxu0 %v3738
    %v3826 = vpop.f32.mrb[0].mxu0
    %v3827 = vadd.f32 %v3778, %v3826
    %v3828 = vpop.f32.mrb[0].mxu0
    %v3829 = vpop.f32.mrb[0].mxu0
    %v3830 = vadd.f32 %v3781, %v3829
    %v3831 = vpop.f32.mrb[0].mxu0
    %3832 = vmatprep.mubr.bf16.mxu0 0
    %3833 = vmatmul.mubr.bf16.gmra.mrb[0].mxu0 %v3741
    %v3834 = vpop.f32.mrb[0].mxu0
    %v3835 = vadd.f32 %v3786, %v3834
    %v3836 = vpop.f32.mrb[0].mxu0
    %v3837 = vpop.f32.mrb[0].mxu0
    %v3838 = vadd.f32 %v3789, %v3837
    %v3839 = vpop.f32.mrb[0].mxu0
    %3840 = vdwg.mxu0
    %v3841 = vld [vmem:[%s1] sm:$0xff]
    %v3842 = vld [vmem:[%s1 + $0x8] sm:$0xff]
    %v3843 = vld [vmem:[%s1 + $0x10] sm:$0xff]
    %v3844 = vld [vmem:[%s1 + $0x18] sm:$0xff]
    %v3845 = vxor.u32 %v3827, 2147483648
    %v3846 = vxor.u32 %v3830, 2147483648
    %v3847 = vxor.u32 %v3835, 2147483648
    %v3848 = vxor.u32 %v3838, 2147483648
    %v3849 = vmul.f32 %v3845, 1.442695
    %v3850 = vpow.pop %v3849
    %v3851 = vmul.f32 %v3846, 1.442695
    %v3852 = vpow.pop %v3851
    %v3853 = vmul.f32 %v3847, 1.442695
    %v3854 = vpow.pop %v3853
    %v3855 = vmul.f32 %v3848, 1.442695
    %v3856 = vpow.pop %v3855
    %v3857 = vadd.f32 %v3850, 1.0
    %v3858 = vadd.f32 %v3852, 1.0
    %v3859 = vadd.f32 %v3854, 1.0
    %v3860 = vadd.f32 %v3856, 1.0
    %v3861 = vrcp.pop %v3857
    %v3862 = vmul.f32 1.0, %v3861
    %v3863 = vrcp.pop %v3858
    %v3864 = vmul.f32 1.0, %v3863
    %v3865 = vrcp.pop %v3859
    %v3866 = vmul.f32 1.0, %v3865
    %v3867 = vrcp.pop %v3860
    %v3868 = vmul.f32 1.0, %v3867
    %v3869 = vmul.f32 %v3827, %v3862
    %v3870 = vmul.f32 %v3830, %v3864
    %v3871 = vmul.f32 %v3835, %v3866
    %v3872 = vmul.f32 %v3838, %v3868
    %v3873 = vadd.f32 %v3841, %v3869
    %v3874 = vadd.f32 %v3842, %v3870
    %v3875 = vadd.f32 %v3843, %v3871
    %v3876 = vadd.f32 %v3844, %v3872
    %3877 = vst.msk [vmem:[%s12] sm:$0xff] %vm589, %v3873
    %3878 = vst.msk [vmem:[%s12 + $0x8] sm:$0xff] %vm589, %v3874
    %3879 = vst.msk [vmem:[%s12 + $0x10] sm:$0xff] %vm589, %v3875
    %3880 = vst.msk [vmem:[%s12 + $0x18] sm:$0xff] %vm589, %v3876
  $region57: #{tpu_custom_call.1} parent=0 // pred_fallthru
    _
  // Predicated region
  $region58: #{tpu_custom_call.1} parent=0 // pred_check
    _
  $region59: #{tpu_custom_call.1} parent=0 // pred_check_branch
    %3882 = sbr.rel (0) target = $region61
  $region60: #{tpu_custom_call.1} parent=0 // pred_region
    _
  $region61: #{tpu_custom_call.1} parent=0 // pred_fallthru
    _
  // Predicated region
  $region62: #{tpu_custom_call.1} parent=0 // pred_check
    _
  $region63: #{tpu_custom_call.1} parent=0 // pred_check_branch
    %3884 = sbr.rel (0) target = $region65
  $region64: #{tpu_custom_call.1} parent=0 // pred_region
    _
  $region65: #{tpu_custom_call.1} parent=0 // pred_fallthru
    _

</llo_original>
